<compile_context>
chip_gen: v7x
topology: tpu7x:2x2x1
jax: 0.10.0
libtpu: 0.0.40
codegen_flags: <defaults>
</compile_context>

<pallas_src>
import functools

import jax
import jax.numpy as jnp
from jax.experimental import pallas as pl
from jax.experimental.pallas import tpu as pltpu


# ------------------------------ GRU cell step --------------------------------
def _gru_step(gi, h, whh, bhh, H):
    """One GRU cell update (PyTorch gate order r, z, n)."""
    gh = jnp.dot(h, whh, preferred_element_type=jnp.float32) + bhh
    r = jax.nn.sigmoid(gi[:, 0 * H:1 * H] + gh[:, 0 * H:1 * H])
    z = jax.nn.sigmoid(gi[:, 1 * H:2 * H] + gh[:, 1 * H:2 * H])
    n = jnp.tanh(gi[:, 2 * H:3 * H] + r * gh[:, 2 * H:3 * H])
    return (1.0 - z) * n + z * h


# ------------------- fused bidirectional GRU layer (one call) ----------------
def _bigru_core(T, B, x_ref, wih_f, whh_f, bih_f, bhh_f,
                wih_b, whh_b, bih_b, bhh_b, y_ref, gif_s, gib_s):
    """x_ref: (T*B, D_in); y_ref: (T, B, 2H); gi*_s: (T*B, 3H) VMEM scratch.
    Returns (h_fwd_final, h_bwd_final), each (B, H) f32."""
    H = whh_f.shape[0]
    x2d = x_ref[...]

    # Hoisted, non-recurrent input projections for the WHOLE sequence (one
    # (T*B, D_in) x (D_in, 3H) matmul per direction), kept in VMEM scratch.
    gif_s[...] = jnp.dot(x2d, wih_f[...],
                         preferred_element_type=jnp.float32) + bih_f[...]
    gib_s[...] = jnp.dot(x2d, wih_b[...],
                         preferred_element_type=jnp.float32) + bib_value(bih_b)

    Whh_f, Bhh_f = whh_f[...], bhh_f[...]
    Whh_b, Bhh_b = whh_b[...], bhh_b[...]

    h_f = jnp.zeros((B, H), jnp.float32)
    h_b = jnp.zeros((B, H), jnp.float32)

    # Fully unrolled time loop (T is small & static). Only the tiny
    # h @ W_hh matmul sits on the serial recurrence path; fwd and bwd steps
    # are independent and can overlap on the MXU.
    for i in range(T):
        tf = i
        tb = T - 1 - i
        h_f = _gru_step(gif_s[tf * B:(tf + 1) * B, :], h_f, Whh_f, Bhh_f, H)
        h_b = _gru_step(gib_s[tb * B:(tb + 1) * B, :], h_b, Whh_b, Bhh_b, H)
        y_ref[tf, :, 0:H] = h_f.astype(y_ref.dtype)          # fwd -> cols [0,H)
        y_ref[tb, :, H:2 * H] = h_b.astype(y_ref.dtype)      # bwd -> cols [H,2H)
    return h_f, h_b


def bib_value(ref):   # tiny helper so the core reads all refs uniformly
    return ref[...]


def _bigru_layer_kernel(T, B, x_ref, wih_f, whh_f, bih_f, bhh_f,
                        wih_b, whh_b, bih_b, bhh_b, y_ref, gif_s, gib_s):
    _bigru_core(T, B, x_ref, wih_f, whh_f, bih_f, bhh_f,
                wih_b, whh_b, bih_b, bhh_b, y_ref, gif_s, gib_s)


def _bigru_last_layer_kernel(T, B, x_ref, wih_f, whh_f, bih_f, bhh_f,
                             wih_b, whh_b, bih_b, bhh_b, fcw_ref, fcb_ref,
                             y_ref, hid_ref, gif_s, gib_s):
    h_f, h_b = _bigru_core(T, B, x_ref, wih_f, whh_f, bih_f, bhh_f,
                           wih_b, whh_b, bih_b, bhh_b, y_ref, gif_s, gib_s)
    H = h_f.shape[-1]
    fcw = fcw_ref[...]                                       # (2H, H)
    # tanh(fc(cat(h_f, h_b))) == tanh(h_f @ fcw[:H] + h_b @ fcw[H:] + b)
    hid = jnp.tanh(
        jnp.dot(h_f, fcw[0:H, :], preferred_element_type=jnp.float32)
        + jnp.dot(h_b, fcw[H:2 * H, :], preferred_element_type=jnp.float32)
        + fcb_ref[...])
    hid_ref[...] = hid.astype(hid_ref.dtype)


def bigru_layer(x2, T, B, pf, pb):
    H = pf["w_hh_t"].shape[0]
    return pl.pallas_call(
        functools.partial(_bigru_layer_kernel, T, B),
        out_shape=jax.ShapeDtypeStruct((T, B, 2 * H), jnp.float32),
        scratch_shapes=[pltpu.VMEM((T * B, 3 * H), jnp.float32),
                        pltpu.VMEM((T * B, 3 * H), jnp.float32)],
    )(x2, pf["w_ih_t"], pf["w_hh_t"], pf["b_ih"], pf["b_hh"],
      pb["w_ih_t"], pb["w_hh_t"], pb["b_ih"], pb["b_hh"])


def bigru_last_layer(x2, T, B, pf, pb, fc_w_t, fc_b):
    H = pf["w_hh_t"].shape[0]
    return pl.pallas_call(
        functools.partial(_bigru_last_layer_kernel, T, B),
        out_shape=(jax.ShapeDtypeStruct((T, B, 2 * H), jnp.float32),
                   jax.ShapeDtypeStruct((B, H), jnp.float32)),
        scratch_shapes=[pltpu.VMEM((T * B, 3 * H), jnp.float32),
                        pltpu.VMEM((T * B, 3 * H), jnp.float32)],
    )(x2, pf["w_ih_t"], pf["w_hh_t"], pf["b_ih"], pf["b_hh"],
      pb["w_ih_t"], pb["w_hh_t"], pb["b_ih"], pb["b_hh"], fc_w_t, fc_b)


# ------------------------------- full forward --------------------------------
def encoder_gru_forward(params, src):
    # Embedding lookup; dropout acts in eval mode -> identity. Plain-JAX glue.
    x = jnp.take(params["embedding"], src, axis=0)           # (T, B, E)
    T, B, _ = x.shape
    n_layers = len(params["gru"])

    y = x
    hidden = None
    for li, lp in enumerate(params["gru"]):
        x2 = y.reshape(T * B, y.shape[-1])                   # leading-dim collapse (free)
        if li < n_layers - 1:
            y = bigru_layer(x2, T, B, lp["fwd"], lp["bwd"])
        else:
            y, hidden = bigru_last_layer(x2, T, B, lp["fwd"], lp["bwd"],
                                         params["fc_w_t"], params["fc_b"])
    return y, hidden


# ------------------------- pure-JAX reference (checking) ---------------------
def _reference_forward(params, src):
    x = jnp.take(params["embedding"], src, axis=0)
    T, B, _ = x.shape
    H = params["fc_b"].shape[-1]

    def run_dir(xs, p, reverse):
        order = range(T - 1, -1, -1) if reverse else range(T)
        h = jnp.zeros((B, H), jnp.float32)
        ys = [None] * T
        for t in order:
            gi = xs[t] @ p["w_ih_t"] + p["b_ih"]
            gh = h @ p["w_hh_t"] + p["b_hh"]
            r = jax.nn.sigmoid(gi[:, :H] + gh[:, :H])
            z = jax.nn.sigmoid(gi[:, H:2 * H] + gh[:, H:2 * H])
            n = jnp.tanh(gi[:, 2 * H:] + r * gh[:, 2 * H:])
            h = (1.0 - z) * n + z * h
            ys[t] = h
        return jnp.stack(ys, axis=0), h

    y = x
    hf = hb = None
    for lp in params["gru"]:
        yf, hf = run_dir(y, lp["fwd"], False)
        yb, hb = run_dir(y, lp["bwd"], True)
        y = jnp.concatenate([yf, yb], axis=-1)
    hidden = jnp.tanh(jnp.concatenate([hf, hb], axis=1) @ params["fc_w_t"]
                      + params["fc_b"])
    return y, hidden


# ------------------------------ parameter init --------------------------------
def init_params(key, input_dim, emb_dim, hidden_dim, num_layers):
    H = hidden_dim
    bound = 1.0 / float(H) ** 0.5
    fc_bound = 1.0 / float(2 * H) ** 0.5
    keys = iter(jax.random.split(key, 3 + num_layers * 2 * 4))

    def u(shape, b):
        return jax.random.uniform(next(keys), shape, jnp.float32, -b, b)

    params = {
        "embedding": jax.random.normal(next(keys), (input_dim, emb_dim), jnp.float32),
        "gru": [],
        "fc_w_t": u((2 * H, H), fc_bound),   # transposed vs. PyTorch (H, 2H)
        "fc_b": u((1, H), fc_bound),
    }
    for layer in range(num_layers):
        d_in = emb_dim if layer == 0 else 2 * H
        layer_p = {}
        for direction in ("fwd", "bwd"):
            layer_p[direction] = {
                "w_ih_t": u((d_in, 3 * H), bound),   # transposed vs. PyTorch (3H, d_in)
                "w_hh_t": u((H, 3 * H), bound),
                "b_ih": u((1, 3 * H), bound),
                "b_hh": u((1, 3 * H), bound),
            }
        params["gru"].append(layer_p)
    return params


if __name__ == "__main__":
    # Small shapes consistent with the module.
    INPUT_DIM = 50     # vocab size
    EMB_DIM = 16
    HIDDEN_DIM = 32
    NUM_LAYERS = 2
    # dropout -> eval-mode identity; bidirectional=True (the fc/tanh branch).
    T, B = 8, 2

    key = jax.random.PRNGKey(0)
    k_params, k_src = jax.random.split(key)
    params = init_params(k_params, INPUT_DIM, EMB_DIM, HIDDEN_DIM, NUM_LAYERS)
    src = jax.random.randint(k_src, (T, B), 0, INPUT_DIM, dtype=jnp.int32)

    outputs, hidden = jax.jit(encoder_gru_forward)(params, src)
    jax.block_until_ready((outputs, hidden))

    assert outputs.shape == (T, B, 2 * HIDDEN_DIM), outputs.shape
    assert hidden.shape == (B, HIDDEN_DIM), hidden.shape
    assert bool(jnp.all(jnp.isfinite(outputs))) and bool(jnp.all(jnp.isfinite(hidden)))

    # Loose-tolerance check against a pure-JAX reference (values are O(1)).
    ref_out, ref_hid = _reference_forward(params, src)
    assert float(jnp.max(jnp.abs(outputs - ref_out))) < 2e-2
    assert float(jnp.max(jnp.abs(hidden - ref_hid))) < 2e-2

    print("KERNEL_OK")
</pallas_src>

<mosaic_0001>
module attributes {stable_mosaic.version = 11 : i64} {
  func.func @_bigru_layer_kernel(%arg0: memref<16x16xf32, #tpu.memory_space<vmem>>, %arg1: memref<16x96xf32, #tpu.memory_space<vmem>>, %arg2: memref<32x96xf32, #tpu.memory_space<vmem>>, %arg3: memref<1x96xf32, #tpu.memory_space<vmem>>, %arg4: memref<1x96xf32, #tpu.memory_space<vmem>>, %arg5: memref<16x96xf32, #tpu.memory_space<vmem>>, %arg6: memref<32x96xf32, #tpu.memory_space<vmem>>, %arg7: memref<1x96xf32, #tpu.memory_space<vmem>>, %arg8: memref<1x96xf32, #tpu.memory_space<vmem>>, %arg9: memref<8x2x64xf32, #tpu.memory_space<vmem>>, %arg10: memref<16x96xf32, #tpu.memory_space<vmem>>, %arg11: memref<16x96xf32, #tpu.memory_space<vmem>>) attributes {dimension_semantics = [], scalar_prefetch = 0 : i64, scratch_operands = 2 : i64, tpu.core_type = #tpu.core_type<tc>} {
    %c0 = arith.constant 0 : index
    %c0_0 = arith.constant 0 : index
    %0 = vector.load %arg0[%c0, %c0_0] : memref<16x16xf32, #tpu.memory_space<vmem>>, vector<16x16xf32>
    %c0_1 = arith.constant 0 : index
    %c0_2 = arith.constant 0 : index
    %1 = vector.load %arg1[%c0_1, %c0_2] : memref<16x96xf32, #tpu.memory_space<vmem>>, vector<16x96xf32>
    %cst = arith.constant dense<0.000000e+00> : vector<16x96xf32>
    %2 = tpu.matmul %0, %1, %cst {dimension_numbers = #tpu.dot_dimension_numbers<[1], [0], [0], [1], [0, 0, 1, 1], [], []>} : vector<16x16xf32>, vector<16x96xf32>, vector<16x96xf32> -> vector<16x96xf32>
    %c0_3 = arith.constant 0 : index
    %c0_4 = arith.constant 0 : index
    %3 = vector.load %arg3[%c0_3, %c0_4] : memref<1x96xf32, #tpu.memory_space<vmem>>, vector<1x96xf32>
    %4 = vector.broadcast %3 : vector<1x96xf32> to vector<16x96xf32>
    %5 = arith.addf %2, %4 : vector<16x96xf32>
    %c0_5 = arith.constant 0 : index
    %c0_6 = arith.constant 0 : index
    %6 = vector.load %arg10[%c0_5, %c0_6] : memref<16x96xf32, #tpu.memory_space<vmem>>, vector<16x96xf32>
    tpu.vector_store %arg10[%c0_5, %c0_6], %5 {strides = array<i32>} : memref<16x96xf32, #tpu.memory_space<vmem>>, vector<16x96xf32>,
    %c0_7 = arith.constant 0 : index
    %c0_8 = arith.constant 0 : index
    %7 = vector.load %arg5[%c0_7, %c0_8] : memref<16x96xf32, #tpu.memory_space<vmem>>, vector<16x96xf32>
    %cst_9 = arith.constant dense<0.000000e+00> : vector<16x96xf32>
    %8 = tpu.matmul %0, %7, %cst_9 {dimension_numbers = #tpu.dot_dimension_numbers<[1], [0], [0], [1], [0, 0, 1, 1], [], []>} : vector<16x16xf32>, vector<16x96xf32>, vector<16x96xf32> -> vector<16x96xf32>
    %c0_10 = arith.constant 0 : index
    %c0_11 = arith.constant 0 : index
    %9 = vector.load %arg7[%c0_10, %c0_11] : memref<1x96xf32, #tpu.memory_space<vmem>>, vector<1x96xf32>
    %10 = vector.broadcast %9 : vector<1x96xf32> to vector<16x96xf32>
    %11 = arith.addf %8, %10 : vector<16x96xf32>
    %c0_12 = arith.constant 0 : index
    %c0_13 = arith.constant 0 : index
    %12 = vector.load %arg11[%c0_12, %c0_13] : memref<16x96xf32, #tpu.memory_space<vmem>>, vector<16x96xf32>
    tpu.vector_store %arg11[%c0_12, %c0_13], %11 {strides = array<i32>} : memref<16x96xf32, #tpu.memory_space<vmem>>, vector<16x96xf32>,
    %c0_14 = arith.constant 0 : index
    %c0_15 = arith.constant 0 : index
    %13 = vector.load %arg2[%c0_14, %c0_15] : memref<32x96xf32, #tpu.memory_space<vmem>>, vector<32x96xf32>
    %c0_16 = arith.constant 0 : index
    %c0_17 = arith.constant 0 : index
    %14 = vector.load %arg4[%c0_16, %c0_17] : memref<1x96xf32, #tpu.memory_space<vmem>>, vector<1x96xf32>
    %c0_18 = arith.constant 0 : index
    %c0_19 = arith.constant 0 : index
    %15 = vector.load %arg6[%c0_18, %c0_19] : memref<32x96xf32, #tpu.memory_space<vmem>>, vector<32x96xf32>
    %c0_20 = arith.constant 0 : index
    %c0_21 = arith.constant 0 : index
    %16 = vector.load %arg8[%c0_20, %c0_21] : memref<1x96xf32, #tpu.memory_space<vmem>>, vector<1x96xf32>
    %cst_22 = arith.constant 0.000000e+00 : f32
    %17 = vector.broadcast %cst_22 : f32 to vector<2x32xf32>
    %cst_23 = arith.constant 0.000000e+00 : f32
    %18 = vector.broadcast %cst_23 : f32 to vector<2x32xf32>
    %c0_24 = arith.constant 0 : index
    %c0_25 = arith.constant 0 : index
    %19 = vector.load %arg10[%c0_24, %c0_25] : memref<16x96xf32, #tpu.memory_space<vmem>>, vector<2x96xf32>
    %cst_26 = arith.constant dense<0.000000e+00> : vector<2x96xf32>
    %20 = tpu.matmul %17, %13, %cst_26 {dimension_numbers = #tpu.dot_dimension_numbers<[1], [0], [0], [1], [0, 0, 1, 1], [], []>} : vector<2x32xf32>, vector<32x96xf32>, vector<2x96xf32> -> vector<2x96xf32>
    %21 = vector.broadcast %14 : vector<1x96xf32> to vector<2x96xf32>
    %22 = arith.addf %20, %21 : vector<2x96xf32>
    %23 = vector.extract_strided_slice %19 {offsets = [0, 0], sizes = [2, 32], strides = [1, 1]} : vector<2x96xf32> to vector<2x32xf32>
    %24 = vector.extract_strided_slice %22 {offsets = [0, 0], sizes = [2, 32], strides = [1, 1]} : vector<2x96xf32> to vector<2x32xf32>
    %25 = arith.addf %23, %24 : vector<2x32xf32>
    %26 = arith.negf %25 : vector<2x32xf32>
    %27 = math.exp %26 : vector<2x32xf32>
    %cst_27 = arith.constant 1.000000e+00 : f32
    %28 = vector.broadcast %cst_27 : f32 to vector<2x32xf32>
    %29 = arith.addf %28, %27 : vector<2x32xf32>
    %30 = arith.divf %28, %29 : vector<2x32xf32>
    %31 = vector.extract_strided_slice %19 {offsets = [0, 32], sizes = [2, 32], strides = [1, 1]} : vector<2x96xf32> to vector<2x32xf32>
    %32 = vector.extract_strided_slice %22 {offsets = [0, 32], sizes = [2, 32], strides = [1, 1]} : vector<2x96xf32> to vector<2x32xf32>
    %33 = arith.addf %31, %32 : vector<2x32xf32>
    %34 = arith.negf %33 : vector<2x32xf32>
    %35 = math.exp %34 : vector<2x32xf32>
    %cst_28 = arith.constant 1.000000e+00 : f32
    %36 = vector.broadcast %cst_28 : f32 to vector<2x32xf32>
    %37 = arith.addf %36, %35 : vector<2x32xf32>
    %38 = arith.divf %36, %37 : vector<2x32xf32>
    %39 = vector.extract_strided_slice %19 {offsets = [0, 64], sizes = [2, 32], strides = [1, 1]} : vector<2x96xf32> to vector<2x32xf32>
    %40 = vector.extract_strided_slice %22 {offsets = [0, 64], sizes = [2, 32], strides = [1, 1]} : vector<2x96xf32> to vector<2x32xf32>
    %41 = arith.mulf %30, %40 : vector<2x32xf32>
    %42 = arith.addf %39, %41 : vector<2x32xf32>
    %43 = math.tanh %42 : vector<2x32xf32>
    %cst_29 = arith.constant 1.000000e+00 : f32
    %44 = vector.broadcast %cst_29 : f32 to vector<2x32xf32>
    %45 = arith.subf %44, %38 : vector<2x32xf32>
    %46 = arith.mulf %45, %43 : vector<2x32xf32>
    %47 = arith.mulf %38, %17 : vector<2x32xf32>
    %48 = arith.addf %46, %47 : vector<2x32xf32>
    %c14 = arith.constant 14 : index
    %c0_30 = arith.constant 0 : index
    %49 = vector.load %arg11[%c14, %c0_30] : memref<16x96xf32, #tpu.memory_space<vmem>>, vector<2x96xf32>
    %cst_31 = arith.constant dense<0.000000e+00> : vector<2x96xf32>
    %50 = tpu.matmul %18, %15, %cst_31 {dimension_numbers = #tpu.dot_dimension_numbers<[1], [0], [0], [1], [0, 0, 1, 1], [], []>} : vector<2x32xf32>, vector<32x96xf32>, vector<2x96xf32> -> vector<2x96xf32>
    %51 = vector.broadcast %16 : vector<1x96xf32> to vector<2x96xf32>
    %52 = arith.addf %50, %51 : vector<2x96xf32>
    %53 = vector.extract_strided_slice %49 {offsets = [0, 0], sizes = [2, 32], strides = [1, 1]} : vector<2x96xf32> to vector<2x32xf32>
    %54 = vector.extract_strided_slice %52 {offsets = [0, 0], sizes = [2, 32], strides = [1, 1]} : vector<2x96xf32> to vector<2x32xf32>
    %55 = arith.addf %53, %54 : vector<2x32xf32>
    %56 = arith.negf %55 : vector<2x32xf32>
    %57 = math.exp %56 : vector<2x32xf32>
    %cst_32 = arith.constant 1.000000e+00 : f32
    %58 = vector.broadcast %cst_32 : f32 to vector<2x32xf32>
    %59 = arith.addf %58, %57 : vector<2x32xf32>
    %60 = arith.divf %58, %59 : vector<2x32xf32>
    %61 = vector.extract_strided_slice %49 {offsets = [0, 32], sizes = [2, 32], strides = [1, 1]} : vector<2x96xf32> to vector<2x32xf32>
    %62 = vector.extract_strided_slice %52 {offsets = [0, 32], sizes = [2, 32], strides = [1, 1]} : vector<2x96xf32> to vector<2x32xf32>
    %63 = arith.addf %61, %62 : vector<2x32xf32>
    %64 = arith.negf %63 : vector<2x32xf32>
    %65 = math.exp %64 : vector<2x32xf32>
    %cst_33 = arith.constant 1.000000e+00 : f32
    %66 = vector.broadcast %cst_33 : f32 to vector<2x32xf32>
    %67 = arith.addf %66, %65 : vector<2x32xf32>
    %68 = arith.divf %66, %67 : vector<2x32xf32>
    %69 = vector.extract_strided_slice %49 {offsets = [0, 64], sizes = [2, 32], strides = [1, 1]} : vector<2x96xf32> to vector<2x32xf32>
    %70 = vector.extract_strided_slice %52 {offsets = [0, 64], sizes = [2, 32], strides = [1, 1]} : vector<2x96xf32> to vector<2x32xf32>
    %71 = arith.mulf %60, %70 : vector<2x32xf32>
    %72 = arith.addf %69, %71 : vector<2x32xf32>
    %73 = math.tanh %72 : vector<2x32xf32>
    %cst_34 = arith.constant 1.000000e+00 : f32
    %74 = vector.broadcast %cst_34 : f32 to vector<2x32xf32>
    %75 = arith.subf %74, %68 : vector<2x32xf32>
    %76 = arith.mulf %75, %73 : vector<2x32xf32>
    %77 = arith.mulf %68, %18 : vector<2x32xf32>
    %78 = arith.addf %76, %77 : vector<2x32xf32>
    %c0_35 = arith.constant 0 : index
    %c0_36 = arith.constant 0 : index
    %c0_37 = arith.constant 0 : index
    %79 = vector.load %arg9[%c0_35, %c0_36, %c0_37] : memref<8x2x64xf32, #tpu.memory_space<vmem>>, vector<1x2x32xf32>
    %80 = vector.shape_cast %79 : vector<1x2x32xf32> to vector<2x32xf32>
    %81 = vector.shape_cast %48 : vector<2x32xf32> to vector<1x2x32xf32>
    tpu.vector_store %arg9[%c0_35, %c0_36, %c0_37], %81 {strides = array<i32>} : memref<8x2x64xf32, #tpu.memory_space<vmem>>, vector<1x2x32xf32>,
    %c7 = arith.constant 7 : index
    %c0_38 = arith.constant 0 : index
    %c32 = arith.constant 32 : index
    %82 = vector.load %arg9[%c7, %c0_38, %c32] : memref<8x2x64xf32, #tpu.memory_space<vmem>>, vector<1x2x32xf32>
    %83 = vector.shape_cast %82 : vector<1x2x32xf32> to vector<2x32xf32>
    %84 = vector.shape_cast %78 : vector<2x32xf32> to vector<1x2x32xf32>
    tpu.vector_store %arg9[%c7, %c0_38, %c32], %84 {strides = array<i32>} : memref<8x2x64xf32, #tpu.memory_space<vmem>>, vector<1x2x32xf32>,
    %c2 = arith.constant 2 : index
    %c0_39 = arith.constant 0 : index
    %85 = vector.load %arg10[%c2, %c0_39] : memref<16x96xf32, #tpu.memory_space<vmem>>, vector<2x96xf32>
    %cst_40 = arith.constant dense<0.000000e+00> : vector<2x96xf32>
    %86 = tpu.matmul %48, %13, %cst_40 {dimension_numbers = #tpu.dot_dimension_numbers<[1], [0], [0], [1], [0, 0, 1, 1], [], []>} : vector<2x32xf32>, vector<32x96xf32>, vector<2x96xf32> -> vector<2x96xf32>
    %87 = vector.broadcast %14 : vector<1x96xf32> to vector<2x96xf32>
    %88 = arith.addf %86, %87 : vector<2x96xf32>
    %89 = vector.extract_strided_slice %85 {offsets = [0, 0], sizes = [2, 32], strides = [1, 1]} : vector<2x96xf32> to vector<2x32xf32>
    %90 = vector.extract_strided_slice %88 {offsets = [0, 0], sizes = [2, 32], strides = [1, 1]} : vector<2x96xf32> to vector<2x32xf32>
    %91 = arith.addf %89, %90 : vector<2x32xf32>
    %92 = arith.negf %91 : vector<2x32xf32>
    %93 = math.exp %92 : vector<2x32xf32>
    %cst_41 = arith.constant 1.000000e+00 : f32
    %94 = vector.broadcast %cst_41 : f32 to vector<2x32xf32>
    %95 = arith.addf %94, %93 : vector<2x32xf32>
    %96 = arith.divf %94, %95 : vector<2x32xf32>
    %97 = vector.extract_strided_slice %85 {offsets = [0, 32], sizes = [2, 32], strides = [1, 1]} : vector<2x96xf32> to vector<2x32xf32>
    %98 = vector.extract_strided_slice %88 {offsets = [0, 32], sizes = [2, 32], strides = [1, 1]} : vector<2x96xf32> to vector<2x32xf32>
    %99 = arith.addf %97, %98 : vector<2x32xf32>
    %100 = arith.negf %99 : vector<2x32xf32>
    %101 = math.exp %100 : vector<2x32xf32>
    %cst_42 = arith.constant 1.000000e+00 : f32
    %102 = vector.broadcast %cst_42 : f32 to vector<2x32xf32>
    %103 = arith.addf %102, %101 : vector<2x32xf32>
    %104 = arith.divf %102, %103 : vector<2x32xf32>
    %105 = vector.extract_strided_slice %85 {offsets = [0, 64], sizes = [2, 32], strides = [1, 1]} : vector<2x96xf32> to vector<2x32xf32>
    %106 = vector.extract_strided_slice %88 {offsets = [0, 64], sizes = [2, 32], strides = [1, 1]} : vector<2x96xf32> to vector<2x32xf32>
    %107 = arith.mulf %96, %106 : vector<2x32xf32>
    %108 = arith.addf %105, %107 : vector<2x32xf32>
    %109 = math.tanh %108 : vector<2x32xf32>
    %cst_43 = arith.constant 1.000000e+00 : f32
    %110 = vector.broadcast %cst_43 : f32 to vector<2x32xf32>
    %111 = arith.subf %110, %104 : vector<2x32xf32>
    %112 = arith.mulf %111, %109 : vector<2x32xf32>
    %113 = arith.mulf %104, %48 : vector<2x32xf32>
    %114 = arith.addf %112, %113 : vector<2x32xf32>
    %c12 = arith.constant 12 : index
    %c0_44 = arith.constant 0 : index
    %115 = vector.load %arg11[%c12, %c0_44] : memref<16x96xf32, #tpu.memory_space<vmem>>, vector<2x96xf32>
    %cst_45 = arith.constant dense<0.000000e+00> : vector<2x96xf32>
    %116 = tpu.matmul %78, %15, %cst_45 {dimension_numbers = #tpu.dot_dimension_numbers<[1], [0], [0], [1], [0, 0, 1, 1], [], []>} : vector<2x32xf32>, vector<32x96xf32>, vector<2x96xf32> -> vector<2x96xf32>
    %117 = vector.broadcast %16 : vector<1x96xf32> to vector<2x96xf32>
    %118 = arith.addf %116, %117 : vector<2x96xf32>
    %119 = vector.extract_strided_slice %115 {offsets = [0, 0], sizes = [2, 32], strides = [1, 1]} : vector<2x96xf32> to vector<2x32xf32>
    %120 = vector.extract_strided_slice %118 {offsets = [0, 0], sizes = [2, 32], strides = [1, 1]} : vector<2x96xf32> to vector<2x32xf32>
    %121 = arith.addf %119, %120 : vector<2x32xf32>
    %122 = arith.negf %121 : vector<2x32xf32>
    %123 = math.exp %122 : vector<2x32xf32>
    %cst_46 = arith.constant 1.000000e+00 : f32
    %124 = vector.broadcast %cst_46 : f32 to vector<2x32xf32>
    %125 = arith.addf %124, %123 : vector<2x32xf32>
    %126 = arith.divf %124, %125 : vector<2x32xf32>
    %127 = vector.extract_strided_slice %115 {offsets = [0, 32], sizes = [2, 32], strides = [1, 1]} : vector<2x96xf32> to vector<2x32xf32>
    %128 = vector.extract_strided_slice %118 {offsets = [0, 32], sizes = [2, 32], strides = [1, 1]} : vector<2x96xf32> to vector<2x32xf32>
    %129 = arith.addf %127, %128 : vector<2x32xf32>
    %130 = arith.negf %129 : vector<2x32xf32>
    %131 = math.exp %130 : vector<2x32xf32>
    %cst_47 = arith.constant 1.000000e+00 : f32
    %132 = vector.broadcast %cst_47 : f32 to vector<2x32xf32>
    %133 = arith.addf %132, %131 : vector<2x32xf32>
    %134 = arith.divf %132, %133 : vector<2x32xf32>
    %135 = vector.extract_strided_slice %115 {offsets = [0, 64], sizes = [2, 32], strides = [1, 1]} : vector<2x96xf32> to vector<2x32xf32>
    %136 = vector.extract_strided_slice %118 {offsets = [0, 64], sizes = [2, 32], strides = [1, 1]} : vector<2x96xf32> to vector<2x32xf32>
    %137 = arith.mulf %126, %136 : vector<2x32xf32>
    %138 = arith.addf %135, %137 : vector<2x32xf32>
    %139 = math.tanh %138 : vector<2x32xf32>
    %cst_48 = arith.constant 1.000000e+00 : f32
    %140 = vector.broadcast %cst_48 : f32 to vector<2x32xf32>
    %141 = arith.subf %140, %134 : vector<2x32xf32>
    %142 = arith.mulf %141, %139 : vector<2x32xf32>
    %143 = arith.mulf %134, %78 : vector<2x32xf32>
    %144 = arith.addf %142, %143 : vector<2x32xf32>
    %c1 = arith.constant 1 : index
    %c0_49 = arith.constant 0 : index
    %c0_50 = arith.constant 0 : index
    %145 = vector.load %arg9[%c1, %c0_49, %c0_50] : memref<8x2x64xf32, #tpu.memory_space<vmem>>, vector<1x2x32xf32>
    %146 = vector.shape_cast %145 : vector<1x2x32xf32> to vector<2x32xf32>
    %147 = vector.shape_cast %114 : vector<2x32xf32> to vector<1x2x32xf32>
    tpu.vector_store %arg9[%c1, %c0_49, %c0_50], %147 {strides = array<i32>} : memref<8x2x64xf32, #tpu.memory_space<vmem>>, vector<1x2x32xf32>,
    %c6 = arith.constant 6 : index
    %c0_51 = arith.constant 0 : index
    %c32_52 = arith.constant 32 : index
    %148 = vector.load %arg9[%c6, %c0_51, %c32_52] : memref<8x2x64xf32, #tpu.memory_space<vmem>>, vector<1x2x32xf32>
    %149 = vector.shape_cast %148 : vector<1x2x32xf32> to vector<2x32xf32>
    %150 = vector.shape_cast %144 : vector<2x32xf32> to vector<1x2x32xf32>
    tpu.vector_store %arg9[%c6, %c0_51, %c32_52], %150 {strides = array<i32>} : memref<8x2x64xf32, #tpu.memory_space<vmem>>, vector<1x2x32xf32>,
    %c4 = arith.constant 4 : index
    %c0_53 = arith.constant 0 : index
    %151 = vector.load %arg10[%c4, %c0_53] : memref<16x96xf32, #tpu.memory_space<vmem>>, vector<2x96xf32>
    %cst_54 = arith.constant dense<0.000000e+00> : vector<2x96xf32>
    %152 = tpu.matmul %114, %13, %cst_54 {dimension_numbers = #tpu.dot_dimension_numbers<[1], [0], [0], [1], [0, 0, 1, 1], [], []>} : vector<2x32xf32>, vector<32x96xf32>, vector<2x96xf32> -> vector<2x96xf32>
    %153 = vector.broadcast %14 : vector<1x96xf32> to vector<2x96xf32>
    %154 = arith.addf %152, %153 : vector<2x96xf32>
    %155 = vector.extract_strided_slice %151 {offsets = [0, 0], sizes = [2, 32], strides = [1, 1]} : vector<2x96xf32> to vector<2x32xf32>
    %156 = vector.extract_strided_slice %154 {offsets = [0, 0], sizes = [2, 32], strides = [1, 1]} : vector<2x96xf32> to vector<2x32xf32>
    %157 = arith.addf %155, %156 : vector<2x32xf32>
    %158 = arith.negf %157 : vector<2x32xf32>
    %159 = math.exp %158 : vector<2x32xf32>
    %cst_55 = arith.constant 1.000000e+00 : f32
    %160 = vector.broadcast %cst_55 : f32 to vector<2x32xf32>
    %161 = arith.addf %160, %159 : vector<2x32xf32>
    %162 = arith.divf %160, %161 : vector<2x32xf32>
    %163 = vector.extract_strided_slice %151 {offsets = [0, 32], sizes = [2, 32], strides = [1, 1]} : vector<2x96xf32> to vector<2x32xf32>
    %164 = vector.extract_strided_slice %154 {offsets = [0, 32], sizes = [2, 32], strides = [1, 1]} : vector<2x96xf32> to vector<2x32xf32>
    %165 = arith.addf %163, %164 : vector<2x32xf32>
    %166 = arith.negf %165 : vector<2x32xf32>
    %167 = math.exp %166 : vector<2x32xf32>
    %cst_56 = arith.constant 1.000000e+00 : f32
    %168 = vector.broadcast %cst_56 : f32 to vector<2x32xf32>
    %169 = arith.addf %168, %167 : vector<2x32xf32>
    %170 = arith.divf %168, %169 : vector<2x32xf32>
    %171 = vector.extract_strided_slice %151 {offsets = [0, 64], sizes = [2, 32], strides = [1, 1]} : vector<2x96xf32> to vector<2x32xf32>
    %172 = vector.extract_strided_slice %154 {offsets = [0, 64], sizes = [2, 32], strides = [1, 1]} : vector<2x96xf32> to vector<2x32xf32>
    %173 = arith.mulf %162, %172 : vector<2x32xf32>
    %174 = arith.addf %171, %173 : vector<2x32xf32>
    %175 = math.tanh %174 : vector<2x32xf32>
    %cst_57 = arith.constant 1.000000e+00 : f32
    %176 = vector.broadcast %cst_57 : f32 to vector<2x32xf32>
    %177 = arith.subf %176, %170 : vector<2x32xf32>
    %178 = arith.mulf %177, %175 : vector<2x32xf32>
    %179 = arith.mulf %170, %114 : vector<2x32xf32>
    %180 = arith.addf %178, %179 : vector<2x32xf32>
    %c10 = arith.constant 10 : index
    %c0_58 = arith.constant 0 : index
    %181 = vector.load %arg11[%c10, %c0_58] : memref<16x96xf32, #tpu.memory_space<vmem>>, vector<2x96xf32>
    %cst_59 = arith.constant dense<0.000000e+00> : vector<2x96xf32>
    %182 = tpu.matmul %144, %15, %cst_59 {dimension_numbers = #tpu.dot_dimension_numbers<[1], [0], [0], [1], [0, 0, 1, 1], [], []>} : vector<2x32xf32>, vector<32x96xf32>, vector<2x96xf32> -> vector<2x96xf32>
    %183 = vector.broadcast %16 : vector<1x96xf32> to vector<2x96xf32>
    %184 = arith.addf %182, %183 : vector<2x96xf32>
    %185 = vector.extract_strided_slice %181 {offsets = [0, 0], sizes = [2, 32], strides = [1, 1]} : vector<2x96xf32> to vector<2x32xf32>
    %186 = vector.extract_strided_slice %184 {offsets = [0, 0], sizes = [2, 32], strides = [1, 1]} : vector<2x96xf32> to vector<2x32xf32>
    %187 = arith.addf %185, %186 : vector<2x32xf32>
    %188 = arith.negf %187 : vector<2x32xf32>
    %189 = math.exp %188 : vector<2x32xf32>
    %cst_60 = arith.constant 1.000000e+00 : f32
    %190 = vector.broadcast %cst_60 : f32 to vector<2x32xf32>
    %191 = arith.addf %190, %189 : vector<2x32xf32>
    %192 = arith.divf %190, %191 : vector<2x32xf32>
    %193 = vector.extract_strided_slice %181 {offsets = [0, 32], sizes = [2, 32], strides = [1, 1]} : vector<2x96xf32> to vector<2x32xf32>
    %194 = vector.extract_strided_slice %184 {offsets = [0, 32], sizes = [2, 32], strides = [1, 1]} : vector<2x96xf32> to vector<2x32xf32>
    %195 = arith.addf %193, %194 : vector<2x32xf32>
    %196 = arith.negf %195 : vector<2x32xf32>
    %197 = math.exp %196 : vector<2x32xf32>
    %cst_61 = arith.constant 1.000000e+00 : f32
    %198 = vector.broadcast %cst_61 : f32 to vector<2x32xf32>
    %199 = arith.addf %198, %197 : vector<2x32xf32>
    %200 = arith.divf %198, %199 : vector<2x32xf32>
    %201 = vector.extract_strided_slice %181 {offsets = [0, 64], sizes = [2, 32], strides = [1, 1]} : vector<2x96xf32> to vector<2x32xf32>
    %202 = vector.extract_strided_slice %184 {offsets = [0, 64], sizes = [2, 32], strides = [1, 1]} : vector<2x96xf32> to vector<2x32xf32>
    %203 = arith.mulf %192, %202 : vector<2x32xf32>
    %204 = arith.addf %201, %203 : vector<2x32xf32>
    %205 = math.tanh %204 : vector<2x32xf32>
    %cst_62 = arith.constant 1.000000e+00 : f32
    %206 = vector.broadcast %cst_62 : f32 to vector<2x32xf32>
    %207 = arith.subf %206, %200 : vector<2x32xf32>
    %208 = arith.mulf %207, %205 : vector<2x32xf32>
    %209 = arith.mulf %200, %144 : vector<2x32xf32>
    %210 = arith.addf %208, %209 : vector<2x32xf32>
    %c2_63 = arith.constant 2 : index
    %c0_64 = arith.constant 0 : index
    %c0_65 = arith.constant 0 : index
    %211 = vector.load %arg9[%c2_63, %c0_64, %c0_65] : memref<8x2x64xf32, #tpu.memory_space<vmem>>, vector<1x2x32xf32>
    %212 = vector.shape_cast %211 : vector<1x2x32xf32> to vector<2x32xf32>
    %213 = vector.shape_cast %180 : vector<2x32xf32> to vector<1x2x32xf32>
    tpu.vector_store %arg9[%c2_63, %c0_64, %c0_65], %213 {strides = array<i32>} : memref<8x2x64xf32, #tpu.memory_space<vmem>>, vector<1x2x32xf32>,
    %c5 = arith.constant 5 : index
    %c0_66 = arith.constant 0 : index
    %c32_67 = arith.constant 32 : index
    %214 = vector.load %arg9[%c5, %c0_66, %c32_67] : memref<8x2x64xf32, #tpu.memory_space<vmem>>, vector<1x2x32xf32>
    %215 = vector.shape_cast %214 : vector<1x2x32xf32> to vector<2x32xf32>
    %216 = vector.shape_cast %210 : vector<2x32xf32> to vector<1x2x32xf32>
    tpu.vector_store %arg9[%c5, %c0_66, %c32_67], %216 {strides = array<i32>} : memref<8x2x64xf32, #tpu.memory_space<vmem>>, vector<1x2x32xf32>,
    %c6_68 = arith.constant 6 : index
    %c0_69 = arith.constant 0 : index
    %217 = vector.load %arg10[%c6_68, %c0_69] : memref<16x96xf32, #tpu.memory_space<vmem>>, vector<2x96xf32>
    %cst_70 = arith.constant dense<0.000000e+00> : vector<2x96xf32>
    %218 = tpu.matmul %180, %13, %cst_70 {dimension_numbers = #tpu.dot_dimension_numbers<[1], [0], [0], [1], [0, 0, 1, 1], [], []>} : vector<2x32xf32>, vector<32x96xf32>, vector<2x96xf32> -> vector<2x96xf32>
    %219 = vector.broadcast %14 : vector<1x96xf32> to vector<2x96xf32>
    %220 = arith.addf %218, %219 : vector<2x96xf32>
    %221 = vector.extract_strided_slice %217 {offsets = [0, 0], sizes = [2, 32], strides = [1, 1]} : vector<2x96xf32> to vector<2x32xf32>
    %222 = vector.extract_strided_slice %220 {offsets = [0, 0], sizes = [2, 32], strides = [1, 1]} : vector<2x96xf32> to vector<2x32xf32>
    %223 = arith.addf %221, %222 : vector<2x32xf32>
    %224 = arith.negf %223 : vector<2x32xf32>
    %225 = math.exp %224 : vector<2x32xf32>
    %cst_71 = arith.constant 1.000000e+00 : f32
    %226 = vector.broadcast %cst_71 : f32 to vector<2x32xf32>
    %227 = arith.addf %226, %225 : vector<2x32xf32>
    %228 = arith.divf %226, %227 : vector<2x32xf32>
    %229 = vector.extract_strided_slice %217 {offsets = [0, 32], sizes = [2, 32], strides = [1, 1]} : vector<2x96xf32> to vector<2x32xf32>
    %230 = vector.extract_strided_slice %220 {offsets = [0, 32], sizes = [2, 32], strides = [1, 1]} : vector<2x96xf32> to vector<2x32xf32>
    %231 = arith.addf %229, %230 : vector<2x32xf32>
    %232 = arith.negf %231 : vector<2x32xf32>
    %233 = math.exp %232 : vector<2x32xf32>
    %cst_72 = arith.constant 1.000000e+00 : f32
    %234 = vector.broadcast %cst_72 : f32 to vector<2x32xf32>
    %235 = arith.addf %234, %233 : vector<2x32xf32>
    %236 = arith.divf %234, %235 : vector<2x32xf32>
    %237 = vector.extract_strided_slice %217 {offsets = [0, 64], sizes = [2, 32], strides = [1, 1]} : vector<2x96xf32> to vector<2x32xf32>
    %238 = vector.extract_strided_slice %220 {offsets = [0, 64], sizes = [2, 32], strides = [1, 1]} : vector<2x96xf32> to vector<2x32xf32>
    %239 = arith.mulf %228, %238 : vector<2x32xf32>
    %240 = arith.addf %237, %239 : vector<2x32xf32>
    %241 = math.tanh %240 : vector<2x32xf32>
    %cst_73 = arith.constant 1.000000e+00 : f32
    %242 = vector.broadcast %cst_73 : f32 to vector<2x32xf32>
    %243 = arith.subf %242, %236 : vector<2x32xf32>
    %244 = arith.mulf %243, %241 : vector<2x32xf32>
    %245 = arith.mulf %236, %180 : vector<2x32xf32>
    %246 = arith.addf %244, %245 : vector<2x32xf32>
    %c8 = arith.constant 8 : index
    %c0_74 = arith.constant 0 : index
    %247 = vector.load %arg11[%c8, %c0_74] : memref<16x96xf32, #tpu.memory_space<vmem>>, vector<2x96xf32>
    %cst_75 = arith.constant dense<0.000000e+00> : vector<2x96xf32>
    %248 = tpu.matmul %210, %15, %cst_75 {dimension_numbers = #tpu.dot_dimension_numbers<[1], [0], [0], [1], [0, 0, 1, 1], [], []>} : vector<2x32xf32>, vector<32x96xf32>, vector<2x96xf32> -> vector<2x96xf32>
    %249 = vector.broadcast %16 : vector<1x96xf32> to vector<2x96xf32>
    %250 = arith.addf %248, %249 : vector<2x96xf32>
    %251 = vector.extract_strided_slice %247 {offsets = [0, 0], sizes = [2, 32], strides = [1, 1]} : vector<2x96xf32> to vector<2x32xf32>
    %252 = vector.extract_strided_slice %250 {offsets = [0, 0], sizes = [2, 32], strides = [1, 1]} : vector<2x96xf32> to vector<2x32xf32>
    %253 = arith.addf %251, %252 : vector<2x32xf32>
    %254 = arith.negf %253 : vector<2x32xf32>
    %255 = math.exp %254 : vector<2x32xf32>
    %cst_76 = arith.constant 1.000000e+00 : f32
    %256 = vector.broadcast %cst_76 : f32 to vector<2x32xf32>
    %257 = arith.addf %256, %255 : vector<2x32xf32>
    %258 = arith.divf %256, %257 : vector<2x32xf32>
    %259 = vector.extract_strided_slice %247 {offsets = [0, 32], sizes = [2, 32], strides = [1, 1]} : vector<2x96xf32> to vector<2x32xf32>
    %260 = vector.extract_strided_slice %250 {offsets = [0, 32], sizes = [2, 32], strides = [1, 1]} : vector<2x96xf32> to vector<2x32xf32>
    %261 = arith.addf %259, %260 : vector<2x32xf32>
    %262 = arith.negf %261 : vector<2x32xf32>
    %263 = math.exp %262 : vector<2x32xf32>
    %cst_77 = arith.constant 1.000000e+00 : f32
    %264 = vector.broadcast %cst_77 : f32 to vector<2x32xf32>
    %265 = arith.addf %264, %263 : vector<2x32xf32>
    %266 = arith.divf %264, %265 : vector<2x32xf32>
    %267 = vector.extract_strided_slice %247 {offsets = [0, 64], sizes = [2, 32], strides = [1, 1]} : vector<2x96xf32> to vector<2x32xf32>
    %268 = vector.extract_strided_slice %250 {offsets = [0, 64], sizes = [2, 32], strides = [1, 1]} : vector<2x96xf32> to vector<2x32xf32>
    %269 = arith.mulf %258, %268 : vector<2x32xf32>
    %270 = arith.addf %267, %269 : vector<2x32xf32>
    %271 = math.tanh %270 : vector<2x32xf32>
    %cst_78 = arith.constant 1.000000e+00 : f32
    %272 = vector.broadcast %cst_78 : f32 to vector<2x32xf32>
    %273 = arith.subf %272, %266 : vector<2x32xf32>
    %274 = arith.mulf %273, %271 : vector<2x32xf32>
    %275 = arith.mulf %266, %210 : vector<2x32xf32>
    %276 = arith.addf %274, %275 : vector<2x32xf32>
    %c3 = arith.constant 3 : index
    %c0_79 = arith.constant 0 : index
    %c0_80 = arith.constant 0 : index
    %277 = vector.load %arg9[%c3, %c0_79, %c0_80] : memref<8x2x64xf32, #tpu.memory_space<vmem>>, vector<1x2x32xf32>
    %278 = vector.shape_cast %277 : vector<1x2x32xf32> to vector<2x32xf32>
    %279 = vector.shape_cast %246 : vector<2x32xf32> to vector<1x2x32xf32>
    tpu.vector_store %arg9[%c3, %c0_79, %c0_80], %279 {strides = array<i32>} : memref<8x2x64xf32, #tpu.memory_space<vmem>>, vector<1x2x32xf32>,
    %c4_81 = arith.constant 4 : index
    %c0_82 = arith.constant 0 : index
    %c32_83 = arith.constant 32 : index
    %280 = vector.load %arg9[%c4_81, %c0_82, %c32_83] : memref<8x2x64xf32, #tpu.memory_space<vmem>>, vector<1x2x32xf32>
    %281 = vector.shape_cast %280 : vector<1x2x32xf32> to vector<2x32xf32>
    %282 = vector.shape_cast %276 : vector<2x32xf32> to vector<1x2x32xf32>
    tpu.vector_store %arg9[%c4_81, %c0_82, %c32_83], %282 {strides = array<i32>} : memref<8x2x64xf32, #tpu.memory_space<vmem>>, vector<1x2x32xf32>,
    %c8_84 = arith.constant 8 : index
    %c0_85 = arith.constant 0 : index
    %283 = vector.load %arg10[%c8_84, %c0_85] : memref<16x96xf32, #tpu.memory_space<vmem>>, vector<2x96xf32>
    %cst_86 = arith.constant dense<0.000000e+00> : vector<2x96xf32>
    %284 = tpu.matmul %246, %13, %cst_86 {dimension_numbers = #tpu.dot_dimension_numbers<[1], [0], [0], [1], [0, 0, 1, 1], [], []>} : vector<2x32xf32>, vector<32x96xf32>, vector<2x96xf32> -> vector<2x96xf32>
    %285 = vector.broadcast %14 : vector<1x96xf32> to vector<2x96xf32>
    %286 = arith.addf %284, %285 : vector<2x96xf32>
    %287 = vector.extract_strided_slice %283 {offsets = [0, 0], sizes = [2, 32], strides = [1, 1]} : vector<2x96xf32> to vector<2x32xf32>
    %288 = vector.extract_strided_slice %286 {offsets = [0, 0], sizes = [2, 32], strides = [1, 1]} : vector<2x96xf32> to vector<2x32xf32>
    %289 = arith.addf %287, %288 : vector<2x32xf32>
    %290 = arith.negf %289 : vector<2x32xf32>
    %291 = math.exp %290 : vector<2x32xf32>
    %cst_87 = arith.constant 1.000000e+00 : f32
    %292 = vector.broadcast %cst_87 : f32 to vector<2x32xf32>
    %293 = arith.addf %292, %291 : vector<2x32xf32>
    %294 = arith.divf %292, %293 : vector<2x32xf32>
    %295 = vector.extract_strided_slice %283 {offsets = [0, 32], sizes = [2, 32], strides = [1, 1]} : vector<2x96xf32> to vector<2x32xf32>
    %296 = vector.extract_strided_slice %286 {offsets = [0, 32], sizes = [2, 32], strides = [1, 1]} : vector<2x96xf32> to vector<2x32xf32>
    %297 = arith.addf %295, %296 : vector<2x32xf32>
    %298 = arith.negf %297 : vector<2x32xf32>
    %299 = math.exp %298 : vector<2x32xf32>
    %cst_88 = arith.constant 1.000000e+00 : f32
    %300 = vector.broadcast %cst_88 : f32 to vector<2x32xf32>
    %301 = arith.addf %300, %299 : vector<2x32xf32>
    %302 = arith.divf %300, %301 : vector<2x32xf32>
    %303 = vector.extract_strided_slice %283 {offsets = [0, 64], sizes = [2, 32], strides = [1, 1]} : vector<2x96xf32> to vector<2x32xf32>
    %304 = vector.extract_strided_slice %286 {offsets = [0, 64], sizes = [2, 32], strides = [1, 1]} : vector<2x96xf32> to vector<2x32xf32>
    %305 = arith.mulf %294, %304 : vector<2x32xf32>
    %306 = arith.addf %303, %305 : vector<2x32xf32>
    %307 = math.tanh %306 : vector<2x32xf32>
    %cst_89 = arith.constant 1.000000e+00 : f32
    %308 = vector.broadcast %cst_89 : f32 to vector<2x32xf32>
    %309 = arith.subf %308, %302 : vector<2x32xf32>
    %310 = arith.mulf %309, %307 : vector<2x32xf32>
    %311 = arith.mulf %302, %246 : vector<2x32xf32>
    %312 = arith.addf %310, %311 : vector<2x32xf32>
    %c6_90 = arith.constant 6 : index
    %c0_91 = arith.constant 0 : index
    %313 = vector.load %arg11[%c6_90, %c0_91] : memref<16x96xf32, #tpu.memory_space<vmem>>, vector<2x96xf32>
    %cst_92 = arith.constant dense<0.000000e+00> : vector<2x96xf32>
    %314 = tpu.matmul %276, %15, %cst_92 {dimension_numbers = #tpu.dot_dimension_numbers<[1], [0], [0], [1], [0, 0, 1, 1], [], []>} : vector<2x32xf32>, vector<32x96xf32>, vector<2x96xf32> -> vector<2x96xf32>
    %315 = vector.broadcast %16 : vector<1x96xf32> to vector<2x96xf32>
    %316 = arith.addf %314, %315 : vector<2x96xf32>
    %317 = vector.extract_strided_slice %313 {offsets = [0, 0], sizes = [2, 32], strides = [1, 1]} : vector<2x96xf32> to vector<2x32xf32>
    %318 = vector.extract_strided_slice %316 {offsets = [0, 0], sizes = [2, 32], strides = [1, 1]} : vector<2x96xf32> to vector<2x32xf32>
    %319 = arith.addf %317, %318 : vector<2x32xf32>
    %320 = arith.negf %319 : vector<2x32xf32>
    %321 = math.exp %320 : vector<2x32xf32>
    %cst_93 = arith.constant 1.000000e+00 : f32
    %322 = vector.broadcast %cst_93 : f32 to vector<2x32xf32>
    %323 = arith.addf %322, %321 : vector<2x32xf32>
    %324 = arith.divf %322, %323 : vector<2x32xf32>
    %325 = vector.extract_strided_slice %313 {offsets = [0, 32], sizes = [2, 32], strides = [1, 1]} : vector<2x96xf32> to vector<2x32xf32>
    %326 = vector.extract_strided_slice %316 {offsets = [0, 32], sizes = [2, 32], strides = [1, 1]} : vector<2x96xf32> to vector<2x32xf32>
    %327 = arith.addf %325, %326 : vector<2x32xf32>
    %328 = arith.negf %327 : vector<2x32xf32>
    %329 = math.exp %328 : vector<2x32xf32>
    %cst_94 = arith.constant 1.000000e+00 : f32
    %330 = vector.broadcast %cst_94 : f32 to vector<2x32xf32>
    %331 = arith.addf %330, %329 : vector<2x32xf32>
    %332 = arith.divf %330, %331 : vector<2x32xf32>
    %333 = vector.extract_strided_slice %313 {offsets = [0, 64], sizes = [2, 32], strides = [1, 1]} : vector<2x96xf32> to vector<2x32xf32>
    %334 = vector.extract_strided_slice %316 {offsets = [0, 64], sizes = [2, 32], strides = [1, 1]} : vector<2x96xf32> to vector<2x32xf32>
    %335 = arith.mulf %324, %334 : vector<2x32xf32>
    %336 = arith.addf %333, %335 : vector<2x32xf32>
    %337 = math.tanh %336 : vector<2x32xf32>
    %cst_95 = arith.constant 1.000000e+00 : f32
    %338 = vector.broadcast %cst_95 : f32 to vector<2x32xf32>
    %339 = arith.subf %338, %332 : vector<2x32xf32>
    %340 = arith.mulf %339, %337 : vector<2x32xf32>
    %341 = arith.mulf %332, %276 : vector<2x32xf32>
    %342 = arith.addf %340, %341 : vector<2x32xf32>
    %c4_96 = arith.constant 4 : index
    %c0_97 = arith.constant 0 : index
    %c0_98 = arith.constant 0 : index
    %343 = vector.load %arg9[%c4_96, %c0_97, %c0_98] : memref<8x2x64xf32, #tpu.memory_space<vmem>>, vector<1x2x32xf32>
    %344 = vector.shape_cast %343 : vector<1x2x32xf32> to vector<2x32xf32>
    %345 = vector.shape_cast %312 : vector<2x32xf32> to vector<1x2x32xf32>
    tpu.vector_store %arg9[%c4_96, %c0_97, %c0_98], %345 {strides = array<i32>} : memref<8x2x64xf32, #tpu.memory_space<vmem>>, vector<1x2x32xf32>,
    %c3_99 = arith.constant 3 : index
    %c0_100 = arith.constant 0 : index
    %c32_101 = arith.constant 32 : index
    %346 = vector.load %arg9[%c3_99, %c0_100, %c32_101] : memref<8x2x64xf32, #tpu.memory_space<vmem>>, vector<1x2x32xf32>
    %347 = vector.shape_cast %346 : vector<1x2x32xf32> to vector<2x32xf32>
    %348 = vector.shape_cast %342 : vector<2x32xf32> to vector<1x2x32xf32>
    tpu.vector_store %arg9[%c3_99, %c0_100, %c32_101], %348 {strides = array<i32>} : memref<8x2x64xf32, #tpu.memory_space<vmem>>, vector<1x2x32xf32>,
    %c10_102 = arith.constant 10 : index
    %c0_103 = arith.constant 0 : index
    %349 = vector.load %arg10[%c10_102, %c0_103] : memref<16x96xf32, #tpu.memory_space<vmem>>, vector<2x96xf32>
    %cst_104 = arith.constant dense<0.000000e+00> : vector<2x96xf32>
    %350 = tpu.matmul %312, %13, %cst_104 {dimension_numbers = #tpu.dot_dimension_numbers<[1], [0], [0], [1], [0, 0, 1, 1], [], []>} : vector<2x32xf32>, vector<32x96xf32>, vector<2x96xf32> -> vector<2x96xf32>
    %351 = vector.broadcast %14 : vector<1x96xf32> to vector<2x96xf32>
    %352 = arith.addf %350, %351 : vector<2x96xf32>
    %353 = vector.extract_strided_slice %349 {offsets = [0, 0], sizes = [2, 32], strides = [1, 1]} : vector<2x96xf32> to vector<2x32xf32>
    %354 = vector.extract_strided_slice %352 {offsets = [0, 0], sizes = [2, 32], strides = [1, 1]} : vector<2x96xf32> to vector<2x32xf32>
    %355 = arith.addf %353, %354 : vector<2x32xf32>
    %356 = arith.negf %355 : vector<2x32xf32>
    %357 = math.exp %356 : vector<2x32xf32>
    %cst_105 = arith.constant 1.000000e+00 : f32
    %358 = vector.broadcast %cst_105 : f32 to vector<2x32xf32>
    %359 = arith.addf %358, %357 : vector<2x32xf32>
    %360 = arith.divf %358, %359 : vector<2x32xf32>
    %361 = vector.extract_strided_slice %349 {offsets = [0, 32], sizes = [2, 32], strides = [1, 1]} : vector<2x96xf32> to vector<2x32xf32>
    %362 = vector.extract_strided_slice %352 {offsets = [0, 32], sizes = [2, 32], strides = [1, 1]} : vector<2x96xf32> to vector<2x32xf32>
    %363 = arith.addf %361, %362 : vector<2x32xf32>
    %364 = arith.negf %363 : vector<2x32xf32>
    %365 = math.exp %364 : vector<2x32xf32>
    %cst_106 = arith.constant 1.000000e+00 : f32
    %366 = vector.broadcast %cst_106 : f32 to vector<2x32xf32>
    %367 = arith.addf %366, %365 : vector<2x32xf32>
    %368 = arith.divf %366, %367 : vector<2x32xf32>
    %369 = vector.extract_strided_slice %349 {offsets = [0, 64], sizes = [2, 32], strides = [1, 1]} : vector<2x96xf32> to vector<2x32xf32>
    %370 = vector.extract_strided_slice %352 {offsets = [0, 64], sizes = [2, 32], strides = [1, 1]} : vector<2x96xf32> to vector<2x32xf32>
    %371 = arith.mulf %360, %370 : vector<2x32xf32>
    %372 = arith.addf %369, %371 : vector<2x32xf32>
    %373 = math.tanh %372 : vector<2x32xf32>
    %cst_107 = arith.constant 1.000000e+00 : f32
    %374 = vector.broadcast %cst_107 : f32 to vector<2x32xf32>
    %375 = arith.subf %374, %368 : vector<2x32xf32>
    %376 = arith.mulf %375, %373 : vector<2x32xf32>
    %377 = arith.mulf %368, %312 : vector<2x32xf32>
    %378 = arith.addf %376, %377 : vector<2x32xf32>
    %c4_108 = arith.constant 4 : index
    %c0_109 = arith.constant 0 : index
    %379 = vector.load %arg11[%c4_108, %c0_109] : memref<16x96xf32, #tpu.memory_space<vmem>>, vector<2x96xf32>
    %cst_110 = arith.constant dense<0.000000e+00> : vector<2x96xf32>
    %380 = tpu.matmul %342, %15, %cst_110 {dimension_numbers = #tpu.dot_dimension_numbers<[1], [0], [0], [1], [0, 0, 1, 1], [], []>} : vector<2x32xf32>, vector<32x96xf32>, vector<2x96xf32> -> vector<2x96xf32>
    %381 = vector.broadcast %16 : vector<1x96xf32> to vector<2x96xf32>
    %382 = arith.addf %380, %381 : vector<2x96xf32>
    %383 = vector.extract_strided_slice %379 {offsets = [0, 0], sizes = [2, 32], strides = [1, 1]} : vector<2x96xf32> to vector<2x32xf32>
    %384 = vector.extract_strided_slice %382 {offsets = [0, 0], sizes = [2, 32], strides = [1, 1]} : vector<2x96xf32> to vector<2x32xf32>
    %385 = arith.addf %383, %384 : vector<2x32xf32>
    %386 = arith.negf %385 : vector<2x32xf32>
    %387 = math.exp %386 : vector<2x32xf32>
    %cst_111 = arith.constant 1.000000e+00 : f32
    %388 = vector.broadcast %cst_111 : f32 to vector<2x32xf32>
    %389 = arith.addf %388, %387 : vector<2x32xf32>
    %390 = arith.divf %388, %389 : vector<2x32xf32>
    %391 = vector.extract_strided_slice %379 {offsets = [0, 32], sizes = [2, 32], strides = [1, 1]} : vector<2x96xf32> to vector<2x32xf32>
    %392 = vector.extract_strided_slice %382 {offsets = [0, 32], sizes = [2, 32], strides = [1, 1]} : vector<2x96xf32> to vector<2x32xf32>
    %393 = arith.addf %391, %392 : vector<2x32xf32>
    %394 = arith.negf %393 : vector<2x32xf32>
    %395 = math.exp %394 : vector<2x32xf32>
    %cst_112 = arith.constant 1.000000e+00 : f32
    %396 = vector.broadcast %cst_112 : f32 to vector<2x32xf32>
    %397 = arith.addf %396, %395 : vector<2x32xf32>
    %398 = arith.divf %396, %397 : vector<2x32xf32>
    %399 = vector.extract_strided_slice %379 {offsets = [0, 64], sizes = [2, 32], strides = [1, 1]} : vector<2x96xf32> to vector<2x32xf32>
    %400 = vector.extract_strided_slice %382 {offsets = [0, 64], sizes = [2, 32], strides = [1, 1]} : vector<2x96xf32> to vector<2x32xf32>
    %401 = arith.mulf %390, %400 : vector<2x32xf32>
    %402 = arith.addf %399, %401 : vector<2x32xf32>
    %403 = math.tanh %402 : vector<2x32xf32>
    %cst_113 = arith.constant 1.000000e+00 : f32
    %404 = vector.broadcast %cst_113 : f32 to vector<2x32xf32>
    %405 = arith.subf %404, %398 : vector<2x32xf32>
    %406 = arith.mulf %405, %403 : vector<2x32xf32>
    %407 = arith.mulf %398, %342 : vector<2x32xf32>
    %408 = arith.addf %406, %407 : vector<2x32xf32>
    %c5_114 = arith.constant 5 : index
    %c0_115 = arith.constant 0 : index
    %c0_116 = arith.constant 0 : index
    %409 = vector.load %arg9[%c5_114, %c0_115, %c0_116] : memref<8x2x64xf32, #tpu.memory_space<vmem>>, vector<1x2x32xf32>
    %410 = vector.shape_cast %409 : vector<1x2x32xf32> to vector<2x32xf32>
    %411 = vector.shape_cast %378 : vector<2x32xf32> to vector<1x2x32xf32>
    tpu.vector_store %arg9[%c5_114, %c0_115, %c0_116], %411 {strides = array<i32>} : memref<8x2x64xf32, #tpu.memory_space<vmem>>, vector<1x2x32xf32>,
    %c2_117 = arith.constant 2 : index
    %c0_118 = arith.constant 0 : index
    %c32_119 = arith.constant 32 : index
    %412 = vector.load %arg9[%c2_117, %c0_118, %c32_119] : memref<8x2x64xf32, #tpu.memory_space<vmem>>, vector<1x2x32xf32>
    %413 = vector.shape_cast %412 : vector<1x2x32xf32> to vector<2x32xf32>
    %414 = vector.shape_cast %408 : vector<2x32xf32> to vector<1x2x32xf32>
    tpu.vector_store %arg9[%c2_117, %c0_118, %c32_119], %414 {strides = array<i32>} : memref<8x2x64xf32, #tpu.memory_space<vmem>>, vector<1x2x32xf32>,
    %c12_120 = arith.constant 12 : index
    %c0_121 = arith.constant 0 : index
    %415 = vector.load %arg10[%c12_120, %c0_121] : memref<16x96xf32, #tpu.memory_space<vmem>>, vector<2x96xf32>
    %cst_122 = arith.constant dense<0.000000e+00> : vector<2x96xf32>
    %416 = tpu.matmul %378, %13, %cst_122 {dimension_numbers = #tpu.dot_dimension_numbers<[1], [0], [0], [1], [0, 0, 1, 1], [], []>} : vector<2x32xf32>, vector<32x96xf32>, vector<2x96xf32> -> vector<2x96xf32>
    %417 = vector.broadcast %14 : vector<1x96xf32> to vector<2x96xf32>
    %418 = arith.addf %416, %417 : vector<2x96xf32>
    %419 = vector.extract_strided_slice %415 {offsets = [0, 0], sizes = [2, 32], strides = [1, 1]} : vector<2x96xf32> to vector<2x32xf32>
    %420 = vector.extract_strided_slice %418 {offsets = [0, 0], sizes = [2, 32], strides = [1, 1]} : vector<2x96xf32> to vector<2x32xf32>
    %421 = arith.addf %419, %420 : vector<2x32xf32>
    %422 = arith.negf %421 : vector<2x32xf32>
    %423 = math.exp %422 : vector<2x32xf32>
    %cst_123 = arith.constant 1.000000e+00 : f32
    %424 = vector.broadcast %cst_123 : f32 to vector<2x32xf32>
    %425 = arith.addf %424, %423 : vector<2x32xf32>
    %426 = arith.divf %424, %425 : vector<2x32xf32>
    %427 = vector.extract_strided_slice %415 {offsets = [0, 32], sizes = [2, 32], strides = [1, 1]} : vector<2x96xf32> to vector<2x32xf32>
    %428 = vector.extract_strided_slice %418 {offsets = [0, 32], sizes = [2, 32], strides = [1, 1]} : vector<2x96xf32> to vector<2x32xf32>
    %429 = arith.addf %427, %428 : vector<2x32xf32>
    %430 = arith.negf %429 : vector<2x32xf32>
    %431 = math.exp %430 : vector<2x32xf32>
    %cst_124 = arith.constant 1.000000e+00 : f32
    %432 = vector.broadcast %cst_124 : f32 to vector<2x32xf32>
    %433 = arith.addf %432, %431 : vector<2x32xf32>
    %434 = arith.divf %432, %433 : vector<2x32xf32>
    %435 = vector.extract_strided_slice %415 {offsets = [0, 64], sizes = [2, 32], strides = [1, 1]} : vector<2x96xf32> to vector<2x32xf32>
    %436 = vector.extract_strided_slice %418 {offsets = [0, 64], sizes = [2, 32], strides = [1, 1]} : vector<2x96xf32> to vector<2x32xf32>
    %437 = arith.mulf %426, %436 : vector<2x32xf32>
    %438 = arith.addf %435, %437 : vector<2x32xf32>
    %439 = math.tanh %438 : vector<2x32xf32>
    %cst_125 = arith.constant 1.000000e+00 : f32
    %440 = vector.broadcast %cst_125 : f32 to vector<2x32xf32>
    %441 = arith.subf %440, %434 : vector<2x32xf32>
    %442 = arith.mulf %441, %439 : vector<2x32xf32>
    %443 = arith.mulf %434, %378 : vector<2x32xf32>
    %444 = arith.addf %442, %443 : vector<2x32xf32>
    %c2_126 = arith.constant 2 : index
    %c0_127 = arith.constant 0 : index
    %445 = vector.load %arg11[%c2_126, %c0_127] : memref<16x96xf32, #tpu.memory_space<vmem>>, vector<2x96xf32>
    %cst_128 = arith.constant dense<0.000000e+00> : vector<2x96xf32>
    %446 = tpu.matmul %408, %15, %cst_128 {dimension_numbers = #tpu.dot_dimension_numbers<[1], [0], [0], [1], [0, 0, 1, 1], [], []>} : vector<2x32xf32>, vector<32x96xf32>, vector<2x96xf32> -> vector<2x96xf32>
    %447 = vector.broadcast %16 : vector<1x96xf32> to vector<2x96xf32>
    %448 = arith.addf %446, %447 : vector<2x96xf32>
    %449 = vector.extract_strided_slice %445 {offsets = [0, 0], sizes = [2, 32], strides = [1, 1]} : vector<2x96xf32> to vector<2x32xf32>
    %450 = vector.extract_strided_slice %448 {offsets = [0, 0], sizes = [2, 32], strides = [1, 1]} : vector<2x96xf32> to vector<2x32xf32>
    %451 = arith.addf %449, %450 : vector<2x32xf32>
    %452 = arith.negf %451 : vector<2x32xf32>
    %453 = math.exp %452 : vector<2x32xf32>
    %cst_129 = arith.constant 1.000000e+00 : f32
    %454 = vector.broadcast %cst_129 : f32 to vector<2x32xf32>
    %455 = arith.addf %454, %453 : vector<2x32xf32>
    %456 = arith.divf %454, %455 : vector<2x32xf32>
    %457 = vector.extract_strided_slice %445 {offsets = [0, 32], sizes = [2, 32], strides = [1, 1]} : vector<2x96xf32> to vector<2x32xf32>
    %458 = vector.extract_strided_slice %448 {offsets = [0, 32], sizes = [2, 32], strides = [1, 1]} : vector<2x96xf32> to vector<2x32xf32>
    %459 = arith.addf %457, %458 : vector<2x32xf32>
    %460 = arith.negf %459 : vector<2x32xf32>
    %461 = math.exp %460 : vector<2x32xf32>
    %cst_130 = arith.constant 1.000000e+00 : f32
    %462 = vector.broadcast %cst_130 : f32 to vector<2x32xf32>
    %463 = arith.addf %462, %461 : vector<2x32xf32>
    %464 = arith.divf %462, %463 : vector<2x32xf32>
    %465 = vector.extract_strided_slice %445 {offsets = [0, 64], sizes = [2, 32], strides = [1, 1]} : vector<2x96xf32> to vector<2x32xf32>
    %466 = vector.extract_strided_slice %448 {offsets = [0, 64], sizes = [2, 32], strides = [1, 1]} : vector<2x96xf32> to vector<2x32xf32>
    %467 = arith.mulf %456, %466 : vector<2x32xf32>
    %468 = arith.addf %465, %467 : vector<2x32xf32>
    %469 = math.tanh %468 : vector<2x32xf32>
    %cst_131 = arith.constant 1.000000e+00 : f32
    %470 = vector.broadcast %cst_131 : f32 to vector<2x32xf32>
    %471 = arith.subf %470, %464 : vector<2x32xf32>
    %472 = arith.mulf %471, %469 : vector<2x32xf32>
    %473 = arith.mulf %464, %408 : vector<2x32xf32>
    %474 = arith.addf %472, %473 : vector<2x32xf32>
    %c6_132 = arith.constant 6 : index
    %c0_133 = arith.constant 0 : index
    %c0_134 = arith.constant 0 : index
    %475 = vector.load %arg9[%c6_132, %c0_133, %c0_134] : memref<8x2x64xf32, #tpu.memory_space<vmem>>, vector<1x2x32xf32>
    %476 = vector.shape_cast %475 : vector<1x2x32xf32> to vector<2x32xf32>
    %477 = vector.shape_cast %444 : vector<2x32xf32> to vector<1x2x32xf32>
    tpu.vector_store %arg9[%c6_132, %c0_133, %c0_134], %477 {strides = array<i32>} : memref<8x2x64xf32, #tpu.memory_space<vmem>>, vector<1x2x32xf32>,
    %c1_135 = arith.constant 1 : index
    %c0_136 = arith.constant 0 : index
    %c32_137 = arith.constant 32 : index
    %478 = vector.load %arg9[%c1_135, %c0_136, %c32_137] : memref<8x2x64xf32, #tpu.memory_space<vmem>>, vector<1x2x32xf32>
    %479 = vector.shape_cast %478 : vector<1x2x32xf32> to vector<2x32xf32>
    %480 = vector.shape_cast %474 : vector<2x32xf32> to vector<1x2x32xf32>
    tpu.vector_store %arg9[%c1_135, %c0_136, %c32_137], %480 {strides = array<i32>} : memref<8x2x64xf32, #tpu.memory_space<vmem>>, vector<1x2x32xf32>,
    %c14_138 = arith.constant 14 : index
    %c0_139 = arith.constant 0 : index
    %481 = vector.load %arg10[%c14_138, %c0_139] : memref<16x96xf32, #tpu.memory_space<vmem>>, vector<2x96xf32>
    %cst_140 = arith.constant dense<0.000000e+00> : vector<2x96xf32>
    %482 = tpu.matmul %444, %13, %cst_140 {dimension_numbers = #tpu.dot_dimension_numbers<[1], [0], [0], [1], [0, 0, 1, 1], [], []>} : vector<2x32xf32>, vector<32x96xf32>, vector<2x96xf32> -> vector<2x96xf32>
    %483 = vector.broadcast %14 : vector<1x96xf32> to vector<2x96xf32>
    %484 = arith.addf %482, %483 : vector<2x96xf32>
    %485 = vector.extract_strided_slice %481 {offsets = [0, 0], sizes = [2, 32], strides = [1, 1]} : vector<2x96xf32> to vector<2x32xf32>
    %486 = vector.extract_strided_slice %484 {offsets = [0, 0], sizes = [2, 32], strides = [1, 1]} : vector<2x96xf32> to vector<2x32xf32>
    %487 = arith.addf %485, %486 : vector<2x32xf32>
    %488 = arith.negf %487 : vector<2x32xf32>
    %489 = math.exp %488 : vector<2x32xf32>
    %cst_141 = arith.constant 1.000000e+00 : f32
    %490 = vector.broadcast %cst_141 : f32 to vector<2x32xf32>
    %491 = arith.addf %490, %489 : vector<2x32xf32>
    %492 = arith.divf %490, %491 : vector<2x32xf32>
    %493 = vector.extract_strided_slice %481 {offsets = [0, 32], sizes = [2, 32], strides = [1, 1]} : vector<2x96xf32> to vector<2x32xf32>
    %494 = vector.extract_strided_slice %484 {offsets = [0, 32], sizes = [2, 32], strides = [1, 1]} : vector<2x96xf32> to vector<2x32xf32>
    %495 = arith.addf %493, %494 : vector<2x32xf32>
    %496 = arith.negf %495 : vector<2x32xf32>
    %497 = math.exp %496 : vector<2x32xf32>
    %cst_142 = arith.constant 1.000000e+00 : f32
    %498 = vector.broadcast %cst_142 : f32 to vector<2x32xf32>
    %499 = arith.addf %498, %497 : vector<2x32xf32>
    %500 = arith.divf %498, %499 : vector<2x32xf32>
    %501 = vector.extract_strided_slice %481 {offsets = [0, 64], sizes = [2, 32], strides = [1, 1]} : vector<2x96xf32> to vector<2x32xf32>
    %502 = vector.extract_strided_slice %484 {offsets = [0, 64], sizes = [2, 32], strides = [1, 1]} : vector<2x96xf32> to vector<2x32xf32>
    %503 = arith.mulf %492, %502 : vector<2x32xf32>
    %504 = arith.addf %501, %503 : vector<2x32xf32>
    %505 = math.tanh %504 : vector<2x32xf32>
    %cst_143 = arith.constant 1.000000e+00 : f32
    %506 = vector.broadcast %cst_143 : f32 to vector<2x32xf32>
    %507 = arith.subf %506, %500 : vector<2x32xf32>
    %508 = arith.mulf %507, %505 : vector<2x32xf32>
    %509 = arith.mulf %500, %444 : vector<2x32xf32>
    %510 = arith.addf %508, %509 : vector<2x32xf32>
    %c0_144 = arith.constant 0 : index
    %c0_145 = arith.constant 0 : index
    %511 = vector.load %arg11[%c0_144, %c0_145] : memref<16x96xf32, #tpu.memory_space<vmem>>, vector<2x96xf32>
    %cst_146 = arith.constant dense<0.000000e+00> : vector<2x96xf32>
    %512 = tpu.matmul %474, %15, %cst_146 {dimension_numbers = #tpu.dot_dimension_numbers<[1], [0], [0], [1], [0, 0, 1, 1], [], []>} : vector<2x32xf32>, vector<32x96xf32>, vector<2x96xf32> -> vector<2x96xf32>
    %513 = vector.broadcast %16 : vector<1x96xf32> to vector<2x96xf32>
    %514 = arith.addf %512, %513 : vector<2x96xf32>
    %515 = vector.extract_strided_slice %511 {offsets = [0, 0], sizes = [2, 32], strides = [1, 1]} : vector<2x96xf32> to vector<2x32xf32>
    %516 = vector.extract_strided_slice %514 {offsets = [0, 0], sizes = [2, 32], strides = [1, 1]} : vector<2x96xf32> to vector<2x32xf32>
    %517 = arith.addf %515, %516 : vector<2x32xf32>
    %518 = arith.negf %517 : vector<2x32xf32>
    %519 = math.exp %518 : vector<2x32xf32>
    %cst_147 = arith.constant 1.000000e+00 : f32
    %520 = vector.broadcast %cst_147 : f32 to vector<2x32xf32>
    %521 = arith.addf %520, %519 : vector<2x32xf32>
    %522 = arith.divf %520, %521 : vector<2x32xf32>
    %523 = vector.extract_strided_slice %511 {offsets = [0, 32], sizes = [2, 32], strides = [1, 1]} : vector<2x96xf32> to vector<2x32xf32>
    %524 = vector.extract_strided_slice %514 {offsets = [0, 32], sizes = [2, 32], strides = [1, 1]} : vector<2x96xf32> to vector<2x32xf32>
    %525 = arith.addf %523, %524 : vector<2x32xf32>
    %526 = arith.negf %525 : vector<2x32xf32>
    %527 = math.exp %526 : vector<2x32xf32>
    %cst_148 = arith.constant 1.000000e+00 : f32
    %528 = vector.broadcast %cst_148 : f32 to vector<2x32xf32>
    %529 = arith.addf %528, %527 : vector<2x32xf32>
    %530 = arith.divf %528, %529 : vector<2x32xf32>
    %531 = vector.extract_strided_slice %511 {offsets = [0, 64], sizes = [2, 32], strides = [1, 1]} : vector<2x96xf32> to vector<2x32xf32>
    %532 = vector.extract_strided_slice %514 {offsets = [0, 64], sizes = [2, 32], strides = [1, 1]} : vector<2x96xf32> to vector<2x32xf32>
    %533 = arith.mulf %522, %532 : vector<2x32xf32>
    %534 = arith.addf %531, %533 : vector<2x32xf32>
    %535 = math.tanh %534 : vector<2x32xf32>
    %cst_149 = arith.constant 1.000000e+00 : f32
    %536 = vector.broadcast %cst_149 : f32 to vector<2x32xf32>
    %537 = arith.subf %536, %530 : vector<2x32xf32>
    %538 = arith.mulf %537, %535 : vector<2x32xf32>
    %539 = arith.mulf %530, %474 : vector<2x32xf32>
    %540 = arith.addf %538, %539 : vector<2x32xf32>
    %c7_150 = arith.constant 7 : index
    %c0_151 = arith.constant 0 : index
    %c0_152 = arith.constant 0 : index
    %541 = vector.load %arg9[%c7_150, %c0_151, %c0_152] : memref<8x2x64xf32, #tpu.memory_space<vmem>>, vector<1x2x32xf32>
    %542 = vector.shape_cast %541 : vector<1x2x32xf32> to vector<2x32xf32>
    %543 = vector.shape_cast %510 : vector<2x32xf32> to vector<1x2x32xf32>
    tpu.vector_store %arg9[%c7_150, %c0_151, %c0_152], %543 {strides = array<i32>} : memref<8x2x64xf32, #tpu.memory_space<vmem>>, vector<1x2x32xf32>,
    %c0_153 = arith.constant 0 : index
    %c0_154 = arith.constant 0 : index
    %c32_155 = arith.constant 32 : index
    %544 = vector.load %arg9[%c0_153, %c0_154, %c32_155] : memref<8x2x64xf32, #tpu.memory_space<vmem>>, vector<1x2x32xf32>
    %545 = vector.shape_cast %544 : vector<1x2x32xf32> to vector<2x32xf32>
    %546 = vector.shape_cast %540 : vector<2x32xf32> to vector<1x2x32xf32>
    tpu.vector_store %arg9[%c0_153, %c0_154, %c32_155], %546 {strides = array<i32>} : memref<8x2x64xf32, #tpu.memory_space<vmem>>, vector<1x2x32xf32>,
    return
  }
}

module attributes {stable_mosaic.version = 11 : i64} {
  func.func @_bigru_last_layer_kernel(%arg0: memref<16x64xf32, #tpu.memory_space<vmem>>, %arg1: memref<64x96xf32, #tpu.memory_space<vmem>>, %arg2: memref<32x96xf32, #tpu.memory_space<vmem>>, %arg3: memref<1x96xf32, #tpu.memory_space<vmem>>, %arg4: memref<1x96xf32, #tpu.memory_space<vmem>>, %arg5: memref<64x96xf32, #tpu.memory_space<vmem>>, %arg6: memref<32x96xf32, #tpu.memory_space<vmem>>, %arg7: memref<1x96xf32, #tpu.memory_space<vmem>>, %arg8: memref<1x96xf32, #tpu.memory_space<vmem>>, %arg9: memref<64x32xf32, #tpu.memory_space<vmem>>, %arg10: memref<1x32xf32, #tpu.memory_space<vmem>>, %arg11: memref<8x2x64xf32, #tpu.memory_space<vmem>>, %arg12: memref<2x32xf32, #tpu.memory_space<vmem>>, %arg13: memref<16x96xf32, #tpu.memory_space<vmem>>, %arg14: memref<16x96xf32, #tpu.memory_space<vmem>>) attributes {dimension_semantics = [], scalar_prefetch = 0 : i64, scratch_operands = 2 : i64, tpu.core_type = #tpu.core_type<tc>} {
    %c0 = arith.constant 0 : index
    %c0_0 = arith.constant 0 : index
    %0 = vector.load %arg0[%c0, %c0_0] : memref<16x64xf32, #tpu.memory_space<vmem>>, vector<16x64xf32>
    %c0_1 = arith.constant 0 : index
    %c0_2 = arith.constant 0 : index
    %1 = vector.load %arg1[%c0_1, %c0_2] : memref<64x96xf32, #tpu.memory_space<vmem>>, vector<64x96xf32>
    %cst = arith.constant dense<0.000000e+00> : vector<16x96xf32>
    %2 = tpu.matmul %0, %1, %cst {dimension_numbers = #tpu.dot_dimension_numbers<[1], [0], [0], [1], [0, 0, 1, 1], [], []>} : vector<16x64xf32>, vector<64x96xf32>, vector<16x96xf32> -> vector<16x96xf32>
    %c0_3 = arith.constant 0 : index
    %c0_4 = arith.constant 0 : index
    %3 = vector.load %arg3[%c0_3, %c0_4] : memref<1x96xf32, #tpu.memory_space<vmem>>, vector<1x96xf32>
    %4 = vector.broadcast %3 : vector<1x96xf32> to vector<16x96xf32>
    %5 = arith.addf %2, %4 : vector<16x96xf32>
    %c0_5 = arith.constant 0 : index
    %c0_6 = arith.constant 0 : index
    %6 = vector.load %arg13[%c0_5, %c0_6] : memref<16x96xf32, #tpu.memory_space<vmem>>, vector<16x96xf32>
    tpu.vector_store %arg13[%c0_5, %c0_6], %5 {strides = array<i32>} : memref<16x96xf32, #tpu.memory_space<vmem>>, vector<16x96xf32>,
    %c0_7 = arith.constant 0 : index
    %c0_8 = arith.constant 0 : index
    %7 = vector.load %arg5[%c0_7, %c0_8] : memref<64x96xf32, #tpu.memory_space<vmem>>, vector<64x96xf32>
    %cst_9 = arith.constant dense<0.000000e+00> : vector<16x96xf32>
    %8 = tpu.matmul %0, %7, %cst_9 {dimension_numbers = #tpu.dot_dimension_numbers<[1], [0], [0], [1], [0, 0, 1, 1], [], []>} : vector<16x64xf32>, vector<64x96xf32>, vector<16x96xf32> -> vector<16x96xf32>
    %c0_10 = arith.constant 0 : index
    %c0_11 = arith.constant 0 : index
    %9 = vector.load %arg7[%c0_10, %c0_11] : memref<1x96xf32, #tpu.memory_space<vmem>>, vector<1x96xf32>
    %10 = vector.broadcast %9 : vector<1x96xf32> to vector<16x96xf32>
    %11 = arith.addf %8, %10 : vector<16x96xf32>
    %c0_12 = arith.constant 0 : index
    %c0_13 = arith.constant 0 : index
    %12 = vector.load %arg14[%c0_12, %c0_13] : memref<16x96xf32, #tpu.memory_space<vmem>>, vector<16x96xf32>
    tpu.vector_store %arg14[%c0_12, %c0_13], %11 {strides = array<i32>} : memref<16x96xf32, #tpu.memory_space<vmem>>, vector<16x96xf32>,
    %c0_14 = arith.constant 0 : index
    %c0_15 = arith.constant 0 : index
    %13 = vector.load %arg2[%c0_14, %c0_15] : memref<32x96xf32, #tpu.memory_space<vmem>>, vector<32x96xf32>
    %c0_16 = arith.constant 0 : index
    %c0_17 = arith.constant 0 : index
    %14 = vector.load %arg4[%c0_16, %c0_17] : memref<1x96xf32, #tpu.memory_space<vmem>>, vector<1x96xf32>
    %c0_18 = arith.constant 0 : index
    %c0_19 = arith.constant 0 : index
    %15 = vector.load %arg6[%c0_18, %c0_19] : memref<32x96xf32, #tpu.memory_space<vmem>>, vector<32x96xf32>
    %c0_20 = arith.constant 0 : index
    %c0_21 = arith.constant 0 : index
    %16 = vector.load %arg8[%c0_20, %c0_21] : memref<1x96xf32, #tpu.memory_space<vmem>>, vector<1x96xf32>
    %cst_22 = arith.constant 0.000000e+00 : f32
    %17 = vector.broadcast %cst_22 : f32 to vector<2x32xf32>
    %cst_23 = arith.constant 0.000000e+00 : f32
    %18 = vector.broadcast %cst_23 : f32 to vector<2x32xf32>
    %c0_24 = arith.constant 0 : index
    %c0_25 = arith.constant 0 : index
    %19 = vector.load %arg13[%c0_24, %c0_25] : memref<16x96xf32, #tpu.memory_space<vmem>>, vector<2x96xf32>
    %cst_26 = arith.constant dense<0.000000e+00> : vector<2x96xf32>
    %20 = tpu.matmul %17, %13, %cst_26 {dimension_numbers = #tpu.dot_dimension_numbers<[1], [0], [0], [1], [0, 0, 1, 1], [], []>} : vector<2x32xf32>, vector<32x96xf32>, vector<2x96xf32> -> vector<2x96xf32>
    %21 = vector.broadcast %14 : vector<1x96xf32> to vector<2x96xf32>
    %22 = arith.addf %20, %21 : vector<2x96xf32>
    %23 = vector.extract_strided_slice %19 {offsets = [0, 0], sizes = [2, 32], strides = [1, 1]} : vector<2x96xf32> to vector<2x32xf32>
    %24 = vector.extract_strided_slice %22 {offsets = [0, 0], sizes = [2, 32], strides = [1, 1]} : vector<2x96xf32> to vector<2x32xf32>
    %25 = arith.addf %23, %24 : vector<2x32xf32>
    %26 = arith.negf %25 : vector<2x32xf32>
    %27 = math.exp %26 : vector<2x32xf32>
    %cst_27 = arith.constant 1.000000e+00 : f32
    %28 = vector.broadcast %cst_27 : f32 to vector<2x32xf32>
    %29 = arith.addf %28, %27 : vector<2x32xf32>
    %30 = arith.divf %28, %29 : vector<2x32xf32>
    %31 = vector.extract_strided_slice %19 {offsets = [0, 32], sizes = [2, 32], strides = [1, 1]} : vector<2x96xf32> to vector<2x32xf32>
    %32 = vector.extract_strided_slice %22 {offsets = [0, 32], sizes = [2, 32], strides = [1, 1]} : vector<2x96xf32> to vector<2x32xf32>
    %33 = arith.addf %31, %32 : vector<2x32xf32>
    %34 = arith.negf %33 : vector<2x32xf32>
    %35 = math.exp %34 : vector<2x32xf32>
    %cst_28 = arith.constant 1.000000e+00 : f32
    %36 = vector.broadcast %cst_28 : f32 to vector<2x32xf32>
    %37 = arith.addf %36, %35 : vector<2x32xf32>
    %38 = arith.divf %36, %37 : vector<2x32xf32>
    %39 = vector.extract_strided_slice %19 {offsets = [0, 64], sizes = [2, 32], strides = [1, 1]} : vector<2x96xf32> to vector<2x32xf32>
    %40 = vector.extract_strided_slice %22 {offsets = [0, 64], sizes = [2, 32], strides = [1, 1]} : vector<2x96xf32> to vector<2x32xf32>
    %41 = arith.mulf %30, %40 : vector<2x32xf32>
    %42 = arith.addf %39, %41 : vector<2x32xf32>
    %43 = math.tanh %42 : vector<2x32xf32>
    %cst_29 = arith.constant 1.000000e+00 : f32
    %44 = vector.broadcast %cst_29 : f32 to vector<2x32xf32>
    %45 = arith.subf %44, %38 : vector<2x32xf32>
    %46 = arith.mulf %45, %43 : vector<2x32xf32>
    %47 = arith.mulf %38, %17 : vector<2x32xf32>
    %48 = arith.addf %46, %47 : vector<2x32xf32>
    %c14 = arith.constant 14 : index
    %c0_30 = arith.constant 0 : index
    %49 = vector.load %arg14[%c14, %c0_30] : memref<16x96xf32, #tpu.memory_space<vmem>>, vector<2x96xf32>
    %cst_31 = arith.constant dense<0.000000e+00> : vector<2x96xf32>
    %50 = tpu.matmul %18, %15, %cst_31 {dimension_numbers = #tpu.dot_dimension_numbers<[1], [0], [0], [1], [0, 0, 1, 1], [], []>} : vector<2x32xf32>, vector<32x96xf32>, vector<2x96xf32> -> vector<2x96xf32>
    %51 = vector.broadcast %16 : vector<1x96xf32> to vector<2x96xf32>
    %52 = arith.addf %50, %51 : vector<2x96xf32>
    %53 = vector.extract_strided_slice %49 {offsets = [0, 0], sizes = [2, 32], strides = [1, 1]} : vector<2x96xf32> to vector<2x32xf32>
    %54 = vector.extract_strided_slice %52 {offsets = [0, 0], sizes = [2, 32], strides = [1, 1]} : vector<2x96xf32> to vector<2x32xf32>
    %55 = arith.addf %53, %54 : vector<2x32xf32>
    %56 = arith.negf %55 : vector<2x32xf32>
    %57 = math.exp %56 : vector<2x32xf32>
    %cst_32 = arith.constant 1.000000e+00 : f32
    %58 = vector.broadcast %cst_32 : f32 to vector<2x32xf32>
    %59 = arith.addf %58, %57 : vector<2x32xf32>
    %60 = arith.divf %58, %59 : vector<2x32xf32>
    %61 = vector.extract_strided_slice %49 {offsets = [0, 32], sizes = [2, 32], strides = [1, 1]} : vector<2x96xf32> to vector<2x32xf32>
    %62 = vector.extract_strided_slice %52 {offsets = [0, 32], sizes = [2, 32], strides = [1, 1]} : vector<2x96xf32> to vector<2x32xf32>
    %63 = arith.addf %61, %62 : vector<2x32xf32>
    %64 = arith.negf %63 : vector<2x32xf32>
    %65 = math.exp %64 : vector<2x32xf32>
    %cst_33 = arith.constant 1.000000e+00 : f32
    %66 = vector.broadcast %cst_33 : f32 to vector<2x32xf32>
    %67 = arith.addf %66, %65 : vector<2x32xf32>
    %68 = arith.divf %66, %67 : vector<2x32xf32>
    %69 = vector.extract_strided_slice %49 {offsets = [0, 64], sizes = [2, 32], strides = [1, 1]} : vector<2x96xf32> to vector<2x32xf32>
    %70 = vector.extract_strided_slice %52 {offsets = [0, 64], sizes = [2, 32], strides = [1, 1]} : vector<2x96xf32> to vector<2x32xf32>
    %71 = arith.mulf %60, %70 : vector<2x32xf32>
    %72 = arith.addf %69, %71 : vector<2x32xf32>
    %73 = math.tanh %72 : vector<2x32xf32>
    %cst_34 = arith.constant 1.000000e+00 : f32
    %74 = vector.broadcast %cst_34 : f32 to vector<2x32xf32>
    %75 = arith.subf %74, %68 : vector<2x32xf32>
    %76 = arith.mulf %75, %73 : vector<2x32xf32>
    %77 = arith.mulf %68, %18 : vector<2x32xf32>
    %78 = arith.addf %76, %77 : vector<2x32xf32>
    %c0_35 = arith.constant 0 : index
    %c0_36 = arith.constant 0 : index
    %c0_37 = arith.constant 0 : index
    %79 = vector.load %arg11[%c0_35, %c0_36, %c0_37] : memref<8x2x64xf32, #tpu.memory_space<vmem>>, vector<1x2x32xf32>
    %80 = vector.shape_cast %79 : vector<1x2x32xf32> to vector<2x32xf32>
    %81 = vector.shape_cast %48 : vector<2x32xf32> to vector<1x2x32xf32>
    tpu.vector_store %arg11[%c0_35, %c0_36, %c0_37], %81 {strides = array<i32>} : memref<8x2x64xf32, #tpu.memory_space<vmem>>, vector<1x2x32xf32>,
    %c7 = arith.constant 7 : index
    %c0_38 = arith.constant 0 : index
    %c32 = arith.constant 32 : index
    %82 = vector.load %arg11[%c7, %c0_38, %c32] : memref<8x2x64xf32, #tpu.memory_space<vmem>>, vector<1x2x32xf32>
    %83 = vector.shape_cast %82 : vector<1x2x32xf32> to vector<2x32xf32>
    %84 = vector.shape_cast %78 : vector<2x32xf32> to vector<1x2x32xf32>
    tpu.vector_store %arg11[%c7, %c0_38, %c32], %84 {strides = array<i32>} : memref<8x2x64xf32, #tpu.memory_space<vmem>>, vector<1x2x32xf32>,
    %c2 = arith.constant 2 : index
    %c0_39 = arith.constant 0 : index
    %85 = vector.load %arg13[%c2, %c0_39] : memref<16x96xf32, #tpu.memory_space<vmem>>, vector<2x96xf32>
    %cst_40 = arith.constant dense<0.000000e+00> : vector<2x96xf32>
    %86 = tpu.matmul %48, %13, %cst_40 {dimension_numbers = #tpu.dot_dimension_numbers<[1], [0], [0], [1], [0, 0, 1, 1], [], []>} : vector<2x32xf32>, vector<32x96xf32>, vector<2x96xf32> -> vector<2x96xf32>
    %87 = vector.broadcast %14 : vector<1x96xf32> to vector<2x96xf32>
    %88 = arith.addf %86, %87 : vector<2x96xf32>
    %89 = vector.extract_strided_slice %85 {offsets = [0, 0], sizes = [2, 32], strides = [1, 1]} : vector<2x96xf32> to vector<2x32xf32>
    %90 = vector.extract_strided_slice %88 {offsets = [0, 0], sizes = [2, 32], strides = [1, 1]} : vector<2x96xf32> to vector<2x32xf32>
    %91 = arith.addf %89, %90 : vector<2x32xf32>
    %92 = arith.negf %91 : vector<2x32xf32>
    %93 = math.exp %92 : vector<2x32xf32>
    %cst_41 = arith.constant 1.000000e+00 : f32
    %94 = vector.broadcast %cst_41 : f32 to vector<2x32xf32>
    %95 = arith.addf %94, %93 : vector<2x32xf32>
    %96 = arith.divf %94, %95 : vector<2x32xf32>
    %97 = vector.extract_strided_slice %85 {offsets = [0, 32], sizes = [2, 32], strides = [1, 1]} : vector<2x96xf32> to vector<2x32xf32>
    %98 = vector.extract_strided_slice %88 {offsets = [0, 32], sizes = [2, 32], strides = [1, 1]} : vector<2x96xf32> to vector<2x32xf32>
    %99 = arith.addf %97, %98 : vector<2x32xf32>
    %100 = arith.negf %99 : vector<2x32xf32>
    %101 = math.exp %100 : vector<2x32xf32>
    %cst_42 = arith.constant 1.000000e+00 : f32
    %102 = vector.broadcast %cst_42 : f32 to vector<2x32xf32>
    %103 = arith.addf %102, %101 : vector<2x32xf32>
    %104 = arith.divf %102, %103 : vector<2x32xf32>
    %105 = vector.extract_strided_slice %85 {offsets = [0, 64], sizes = [2, 32], strides = [1, 1]} : vector<2x96xf32> to vector<2x32xf32>
    %106 = vector.extract_strided_slice %88 {offsets = [0, 64], sizes = [2, 32], strides = [1, 1]} : vector<2x96xf32> to vector<2x32xf32>
    %107 = arith.mulf %96, %106 : vector<2x32xf32>
    %108 = arith.addf %105, %107 : vector<2x32xf32>
    %109 = math.tanh %108 : vector<2x32xf32>
    %cst_43 = arith.constant 1.000000e+00 : f32
    %110 = vector.broadcast %cst_43 : f32 to vector<2x32xf32>
    %111 = arith.subf %110, %104 : vector<2x32xf32>
    %112 = arith.mulf %111, %109 : vector<2x32xf32>
    %113 = arith.mulf %104, %48 : vector<2x32xf32>
    %114 = arith.addf %112, %113 : vector<2x32xf32>
    %c12 = arith.constant 12 : index
    %c0_44 = arith.constant 0 : index
    %115 = vector.load %arg14[%c12, %c0_44] : memref<16x96xf32, #tpu.memory_space<vmem>>, vector<2x96xf32>
    %cst_45 = arith.constant dense<0.000000e+00> : vector<2x96xf32>
    %116 = tpu.matmul %78, %15, %cst_45 {dimension_numbers = #tpu.dot_dimension_numbers<[1], [0], [0], [1], [0, 0, 1, 1], [], []>} : vector<2x32xf32>, vector<32x96xf32>, vector<2x96xf32> -> vector<2x96xf32>
    %117 = vector.broadcast %16 : vector<1x96xf32> to vector<2x96xf32>
    %118 = arith.addf %116, %117 : vector<2x96xf32>
    %119 = vector.extract_strided_slice %115 {offsets = [0, 0], sizes = [2, 32], strides = [1, 1]} : vector<2x96xf32> to vector<2x32xf32>
    %120 = vector.extract_strided_slice %118 {offsets = [0, 0], sizes = [2, 32], strides = [1, 1]} : vector<2x96xf32> to vector<2x32xf32>
    %121 = arith.addf %119, %120 : vector<2x32xf32>
    %122 = arith.negf %121 : vector<2x32xf32>
    %123 = math.exp %122 : vector<2x32xf32>
    %cst_46 = arith.constant 1.000000e+00 : f32
    %124 = vector.broadcast %cst_46 : f32 to vector<2x32xf32>
    %125 = arith.addf %124, %123 : vector<2x32xf32>
    %126 = arith.divf %124, %125 : vector<2x32xf32>
    %127 = vector.extract_strided_slice %115 {offsets = [0, 32], sizes = [2, 32], strides = [1, 1]} : vector<2x96xf32> to vector<2x32xf32>
    %128 = vector.extract_strided_slice %118 {offsets = [0, 32], sizes = [2, 32], strides = [1, 1]} : vector<2x96xf32> to vector<2x32xf32>
    %129 = arith.addf %127, %128 : vector<2x32xf32>
    %130 = arith.negf %129 : vector<2x32xf32>
    %131 = math.exp %130 : vector<2x32xf32>
    %cst_47 = arith.constant 1.000000e+00 : f32
    %132 = vector.broadcast %cst_47 : f32 to vector<2x32xf32>
    %133 = arith.addf %132, %131 : vector<2x32xf32>
    %134 = arith.divf %132, %133 : vector<2x32xf32>
    %135 = vector.extract_strided_slice %115 {offsets = [0, 64], sizes = [2, 32], strides = [1, 1]} : vector<2x96xf32> to vector<2x32xf32>
    %136 = vector.extract_strided_slice %118 {offsets = [0, 64], sizes = [2, 32], strides = [1, 1]} : vector<2x96xf32> to vector<2x32xf32>
    %137 = arith.mulf %126, %136 : vector<2x32xf32>
    %138 = arith.addf %135, %137 : vector<2x32xf32>
    %139 = math.tanh %138 : vector<2x32xf32>
    %cst_48 = arith.constant 1.000000e+00 : f32
    %140 = vector.broadcast %cst_48 : f32 to vector<2x32xf32>
    %141 = arith.subf %140, %134 : vector<2x32xf32>
    %142 = arith.mulf %141, %139 : vector<2x32xf32>
    %143 = arith.mulf %134, %78 : vector<2x32xf32>
    %144 = arith.addf %142, %143 : vector<2x32xf32>
    %c1 = arith.constant 1 : index
    %c0_49 = arith.constant 0 : index
    %c0_50 = arith.constant 0 : index
    %145 = vector.load %arg11[%c1, %c0_49, %c0_50] : memref<8x2x64xf32, #tpu.memory_space<vmem>>, vector<1x2x32xf32>
    %146 = vector.shape_cast %145 : vector<1x2x32xf32> to vector<2x32xf32>
    %147 = vector.shape_cast %114 : vector<2x32xf32> to vector<1x2x32xf32>
    tpu.vector_store %arg11[%c1, %c0_49, %c0_50], %147 {strides = array<i32>} : memref<8x2x64xf32, #tpu.memory_space<vmem>>, vector<1x2x32xf32>,
    %c6 = arith.constant 6 : index
    %c0_51 = arith.constant 0 : index
    %c32_52 = arith.constant 32 : index
    %148 = vector.load %arg11[%c6, %c0_51, %c32_52] : memref<8x2x64xf32, #tpu.memory_space<vmem>>, vector<1x2x32xf32>
    %149 = vector.shape_cast %148 : vector<1x2x32xf32> to vector<2x32xf32>
    %150 = vector.shape_cast %144 : vector<2x32xf32> to vector<1x2x32xf32>
    tpu.vector_store %arg11[%c6, %c0_51, %c32_52], %150 {strides = array<i32>} : memref<8x2x64xf32, #tpu.memory_space<vmem>>, vector<1x2x32xf32>,
    %c4 = arith.constant 4 : index
    %c0_53 = arith.constant 0 : index
    %151 = vector.load %arg13[%c4, %c0_53] : memref<16x96xf32, #tpu.memory_space<vmem>>, vector<2x96xf32>
    %cst_54 = arith.constant dense<0.000000e+00> : vector<2x96xf32>
    %152 = tpu.matmul %114, %13, %cst_54 {dimension_numbers = #tpu.dot_dimension_numbers<[1], [0], [0], [1], [0, 0, 1, 1], [], []>} : vector<2x32xf32>, vector<32x96xf32>, vector<2x96xf32> -> vector<2x96xf32>
    %153 = vector.broadcast %14 : vector<1x96xf32> to vector<2x96xf32>
    %154 = arith.addf %152, %153 : vector<2x96xf32>
    %155 = vector.extract_strided_slice %151 {offsets = [0, 0], sizes = [2, 32], strides = [1, 1]} : vector<2x96xf32> to vector<2x32xf32>
    %156 = vector.extract_strided_slice %154 {offsets = [0, 0], sizes = [2, 32], strides = [1, 1]} : vector<2x96xf32> to vector<2x32xf32>
    %157 = arith.addf %155, %156 : vector<2x32xf32>
    %158 = arith.negf %157 : vector<2x32xf32>
    %159 = math.exp %158 : vector<2x32xf32>
    %cst_55 = arith.constant 1.000000e+00 : f32
    %160 = vector.broadcast %cst_55 : f32 to vector<2x32xf32>
    %161 = arith.addf %160, %159 : vector<2x32xf32>
    %162 = arith.divf %160, %161 : vector<2x32xf32>
    %163 = vector.extract_strided_slice %151 {offsets = [0, 32], sizes = [2, 32], strides = [1, 1]} : vector<2x96xf32> to vector<2x32xf32>
    %164 = vector.extract_strided_slice %154 {offsets = [0, 32], sizes = [2, 32], strides = [1, 1]} : vector<2x96xf32> to vector<2x32xf32>
    %165 = arith.addf %163, %164 : vector<2x32xf32>
    %166 = arith.negf %165 : vector<2x32xf32>
    %167 = math.exp %166 : vector<2x32xf32>
    %cst_56 = arith.constant 1.000000e+00 : f32
    %168 = vector.broadcast %cst_56 : f32 to vector<2x32xf32>
    %169 = arith.addf %168, %167 : vector<2x32xf32>
    %170 = arith.divf %168, %169 : vector<2x32xf32>
    %171 = vector.extract_strided_slice %151 {offsets = [0, 64], sizes = [2, 32], strides = [1, 1]} : vector<2x96xf32> to vector<2x32xf32>
    %172 = vector.extract_strided_slice %154 {offsets = [0, 64], sizes = [2, 32], strides = [1, 1]} : vector<2x96xf32> to vector<2x32xf32>
    %173 = arith.mulf %162, %172 : vector<2x32xf32>
    %174 = arith.addf %171, %173 : vector<2x32xf32>
    %175 = math.tanh %174 : vector<2x32xf32>
    %cst_57 = arith.constant 1.000000e+00 : f32
    %176 = vector.broadcast %cst_57 : f32 to vector<2x32xf32>
    %177 = arith.subf %176, %170 : vector<2x32xf32>
    %178 = arith.mulf %177, %175 : vector<2x32xf32>
    %179 = arith.mulf %170, %114 : vector<2x32xf32>
    %180 = arith.addf %178, %179 : vector<2x32xf32>
    %c10 = arith.constant 10 : index
    %c0_58 = arith.constant 0 : index
    %181 = vector.load %arg14[%c10, %c0_58] : memref<16x96xf32, #tpu.memory_space<vmem>>, vector<2x96xf32>
    %cst_59 = arith.constant dense<0.000000e+00> : vector<2x96xf32>
    %182 = tpu.matmul %144, %15, %cst_59 {dimension_numbers = #tpu.dot_dimension_numbers<[1], [0], [0], [1], [0, 0, 1, 1], [], []>} : vector<2x32xf32>, vector<32x96xf32>, vector<2x96xf32> -> vector<2x96xf32>
    %183 = vector.broadcast %16 : vector<1x96xf32> to vector<2x96xf32>
    %184 = arith.addf %182, %183 : vector<2x96xf32>
    %185 = vector.extract_strided_slice %181 {offsets = [0, 0], sizes = [2, 32], strides = [1, 1]} : vector<2x96xf32> to vector<2x32xf32>
    %186 = vector.extract_strided_slice %184 {offsets = [0, 0], sizes = [2, 32], strides = [1, 1]} : vector<2x96xf32> to vector<2x32xf32>
    %187 = arith.addf %185, %186 : vector<2x32xf32>
    %188 = arith.negf %187 : vector<2x32xf32>
    %189 = math.exp %188 : vector<2x32xf32>
    %cst_60 = arith.constant 1.000000e+00 : f32
    %190 = vector.broadcast %cst_60 : f32 to vector<2x32xf32>
    %191 = arith.addf %190, %189 : vector<2x32xf32>
    %192 = arith.divf %190, %191 : vector<2x32xf32>
    %193 = vector.extract_strided_slice %181 {offsets = [0, 32], sizes = [2, 32], strides = [1, 1]} : vector<2x96xf32> to vector<2x32xf32>
    %194 = vector.extract_strided_slice %184 {offsets = [0, 32], sizes = [2, 32], strides = [1, 1]} : vector<2x96xf32> to vector<2x32xf32>
    %195 = arith.addf %193, %194 : vector<2x32xf32>
    %196 = arith.negf %195 : vector<2x32xf32>
    %197 = math.exp %196 : vector<2x32xf32>
    %cst_61 = arith.constant 1.000000e+00 : f32
    %198 = vector.broadcast %cst_61 : f32 to vector<2x32xf32>
    %199 = arith.addf %198, %197 : vector<2x32xf32>
    %200 = arith.divf %198, %199 : vector<2x32xf32>
    %201 = vector.extract_strided_slice %181 {offsets = [0, 64], sizes = [2, 32], strides = [1, 1]} : vector<2x96xf32> to vector<2x32xf32>
    %202 = vector.extract_strided_slice %184 {offsets = [0, 64], sizes = [2, 32], strides = [1, 1]} : vector<2x96xf32> to vector<2x32xf32>
    %203 = arith.mulf %192, %202 : vector<2x32xf32>
    %204 = arith.addf %201, %203 : vector<2x32xf32>
    %205 = math.tanh %204 : vector<2x32xf32>
    %cst_62 = arith.constant 1.000000e+00 : f32
    %206 = vector.broadcast %cst_62 : f32 to vector<2x32xf32>
    %207 = arith.subf %206, %200 : vector<2x32xf32>
    %208 = arith.mulf %207, %205 : vector<2x32xf32>
    %209 = arith.mulf %200, %144 : vector<2x32xf32>
    %210 = arith.addf %208, %209 : vector<2x32xf32>
    %c2_63 = arith.constant 2 : index
    %c0_64 = arith.constant 0 : index
    %c0_65 = arith.constant 0 : index
    %211 = vector.load %arg11[%c2_63, %c0_64, %c0_65] : memref<8x2x64xf32, #tpu.memory_space<vmem>>, vector<1x2x32xf32>
    %212 = vector.shape_cast %211 : vector<1x2x32xf32> to vector<2x32xf32>
    %213 = vector.shape_cast %180 : vector<2x32xf32> to vector<1x2x32xf32>
    tpu.vector_store %arg11[%c2_63, %c0_64, %c0_65], %213 {strides = array<i32>} : memref<8x2x64xf32, #tpu.memory_space<vmem>>, vector<1x2x32xf32>,
    %c5 = arith.constant 5 : index
    %c0_66 = arith.constant 0 : index
    %c32_67 = arith.constant 32 : index
    %214 = vector.load %arg11[%c5, %c0_66, %c32_67] : memref<8x2x64xf32, #tpu.memory_space<vmem>>, vector<1x2x32xf32>
    %215 = vector.shape_cast %214 : vector<1x2x32xf32> to vector<2x32xf32>
    %216 = vector.shape_cast %210 : vector<2x32xf32> to vector<1x2x32xf32>
    tpu.vector_store %arg11[%c5, %c0_66, %c32_67], %216 {strides = array<i32>} : memref<8x2x64xf32, #tpu.memory_space<vmem>>, vector<1x2x32xf32>,
    %c6_68 = arith.constant 6 : index
    %c0_69 = arith.constant 0 : index
    %217 = vector.load %arg13[%c6_68, %c0_69] : memref<16x96xf32, #tpu.memory_space<vmem>>, vector<2x96xf32>
    %cst_70 = arith.constant dense<0.000000e+00> : vector<2x96xf32>
    %218 = tpu.matmul %180, %13, %cst_70 {dimension_numbers = #tpu.dot_dimension_numbers<[1], [0], [0], [1], [0, 0, 1, 1], [], []>} : vector<2x32xf32>, vector<32x96xf32>, vector<2x96xf32> -> vector<2x96xf32>
    %219 = vector.broadcast %14 : vector<1x96xf32> to vector<2x96xf32>
    %220 = arith.addf %218, %219 : vector<2x96xf32>
    %221 = vector.extract_strided_slice %217 {offsets = [0, 0], sizes = [2, 32], strides = [1, 1]} : vector<2x96xf32> to vector<2x32xf32>
    %222 = vector.extract_strided_slice %220 {offsets = [0, 0], sizes = [2, 32], strides = [1, 1]} : vector<2x96xf32> to vector<2x32xf32>
    %223 = arith.addf %221, %222 : vector<2x32xf32>
    %224 = arith.negf %223 : vector<2x32xf32>
    %225 = math.exp %224 : vector<2x32xf32>
    %cst_71 = arith.constant 1.000000e+00 : f32
    %226 = vector.broadcast %cst_71 : f32 to vector<2x32xf32>
    %227 = arith.addf %226, %225 : vector<2x32xf32>
    %228 = arith.divf %226, %227 : vector<2x32xf32>
    %229 = vector.extract_strided_slice %217 {offsets = [0, 32], sizes = [2, 32], strides = [1, 1]} : vector<2x96xf32> to vector<2x32xf32>
    %230 = vector.extract_strided_slice %220 {offsets = [0, 32], sizes = [2, 32], strides = [1, 1]} : vector<2x96xf32> to vector<2x32xf32>
    %231 = arith.addf %229, %230 : vector<2x32xf32>
    %232 = arith.negf %231 : vector<2x32xf32>
    %233 = math.exp %232 : vector<2x32xf32>
    %cst_72 = arith.constant 1.000000e+00 : f32
    %234 = vector.broadcast %cst_72 : f32 to vector<2x32xf32>
    %235 = arith.addf %234, %233 : vector<2x32xf32>
    %236 = arith.divf %234, %235 : vector<2x32xf32>
    %237 = vector.extract_strided_slice %217 {offsets = [0, 64], sizes = [2, 32], strides = [1, 1]} : vector<2x96xf32> to vector<2x32xf32>
    %238 = vector.extract_strided_slice %220 {offsets = [0, 64], sizes = [2, 32], strides = [1, 1]} : vector<2x96xf32> to vector<2x32xf32>
    %239 = arith.mulf %228, %238 : vector<2x32xf32>
    %240 = arith.addf %237, %239 : vector<2x32xf32>
    %241 = math.tanh %240 : vector<2x32xf32>
    %cst_73 = arith.constant 1.000000e+00 : f32
    %242 = vector.broadcast %cst_73 : f32 to vector<2x32xf32>
    %243 = arith.subf %242, %236 : vector<2x32xf32>
    %244 = arith.mulf %243, %241 : vector<2x32xf32>
    %245 = arith.mulf %236, %180 : vector<2x32xf32>
    %246 = arith.addf %244, %245 : vector<2x32xf32>
    %c8 = arith.constant 8 : index
    %c0_74 = arith.constant 0 : index
    %247 = vector.load %arg14[%c8, %c0_74] : memref<16x96xf32, #tpu.memory_space<vmem>>, vector<2x96xf32>
    %cst_75 = arith.constant dense<0.000000e+00> : vector<2x96xf32>
    %248 = tpu.matmul %210, %15, %cst_75 {dimension_numbers = #tpu.dot_dimension_numbers<[1], [0], [0], [1], [0, 0, 1, 1], [], []>} : vector<2x32xf32>, vector<32x96xf32>, vector<2x96xf32> -> vector<2x96xf32>
    %249 = vector.broadcast %16 : vector<1x96xf32> to vector<2x96xf32>
    %250 = arith.addf %248, %249 : vector<2x96xf32>
    %251 = vector.extract_strided_slice %247 {offsets = [0, 0], sizes = [2, 32], strides = [1, 1]} : vector<2x96xf32> to vector<2x32xf32>
    %252 = vector.extract_strided_slice %250 {offsets = [0, 0], sizes = [2, 32], strides = [1, 1]} : vector<2x96xf32> to vector<2x32xf32>
    %253 = arith.addf %251, %252 : vector<2x32xf32>
    %254 = arith.negf %253 : vector<2x32xf32>
    %255 = math.exp %254 : vector<2x32xf32>
    %cst_76 = arith.constant 1.000000e+00 : f32
    %256 = vector.broadcast %cst_76 : f32 to vector<2x32xf32>
    %257 = arith.addf %256, %255 : vector<2x32xf32>
    %258 = arith.divf %256, %257 : vector<2x32xf32>
    %259 = vector.extract_strided_slice %247 {offsets = [0, 32], sizes = [2, 32], strides = [1, 1]} : vector<2x96xf32> to vector<2x32xf32>
    %260 = vector.extract_strided_slice %250 {offsets = [0, 32], sizes = [2, 32], strides = [1, 1]} : vector<2x96xf32> to vector<2x32xf32>
    %261 = arith.addf %259, %260 : vector<2x32xf32>
    %262 = arith.negf %261 : vector<2x32xf32>
    %263 = math.exp %262 : vector<2x32xf32>
    %cst_77 = arith.constant 1.000000e+00 : f32
    %264 = vector.broadcast %cst_77 : f32 to vector<2x32xf32>
    %265 = arith.addf %264, %263 : vector<2x32xf32>
    %266 = arith.divf %264, %265 : vector<2x32xf32>
    %267 = vector.extract_strided_slice %247 {offsets = [0, 64], sizes = [2, 32], strides = [1, 1]} : vector<2x96xf32> to vector<2x32xf32>
    %268 = vector.extract_strided_slice %250 {offsets = [0, 64], sizes = [2, 32], strides = [1, 1]} : vector<2x96xf32> to vector<2x32xf32>
    %269 = arith.mulf %258, %268 : vector<2x32xf32>
    %270 = arith.addf %267, %269 : vector<2x32xf32>
    %271 = math.tanh %270 : vector<2x32xf32>
    %cst_78 = arith.constant 1.000000e+00 : f32
    %272 = vector.broadcast %cst_78 : f32 to vector<2x32xf32>
    %273 = arith.subf %272, %266 : vector<2x32xf32>
    %274 = arith.mulf %273, %271 : vector<2x32xf32>
    %275 = arith.mulf %266, %210 : vector<2x32xf32>
    %276 = arith.addf %274, %275 : vector<2x32xf32>
    %c3 = arith.constant 3 : index
    %c0_79 = arith.constant 0 : index
    %c0_80 = arith.constant 0 : index
    %277 = vector.load %arg11[%c3, %c0_79, %c0_80] : memref<8x2x64xf32, #tpu.memory_space<vmem>>, vector<1x2x32xf32>
    %278 = vector.shape_cast %277 : vector<1x2x32xf32> to vector<2x32xf32>
    %279 = vector.shape_cast %246 : vector<2x32xf32> to vector<1x2x32xf32>
    tpu.vector_store %arg11[%c3, %c0_79, %c0_80], %279 {strides = array<i32>} : memref<8x2x64xf32, #tpu.memory_space<vmem>>, vector<1x2x32xf32>,
    %c4_81 = arith.constant 4 : index
    %c0_82 = arith.constant 0 : index
    %c32_83 = arith.constant 32 : index
    %280 = vector.load %arg11[%c4_81, %c0_82, %c32_83] : memref<8x2x64xf32, #tpu.memory_space<vmem>>, vector<1x2x32xf32>
    %281 = vector.shape_cast %280 : vector<1x2x32xf32> to vector<2x32xf32>
    %282 = vector.shape_cast %276 : vector<2x32xf32> to vector<1x2x32xf32>
    tpu.vector_store %arg11[%c4_81, %c0_82, %c32_83], %282 {strides = array<i32>} : memref<8x2x64xf32, #tpu.memory_space<vmem>>, vector<1x2x32xf32>,
    %c8_84 = arith.constant 8 : index
    %c0_85 = arith.constant 0 : index
    %283 = vector.load %arg13[%c8_84, %c0_85] : memref<16x96xf32, #tpu.memory_space<vmem>>, vector<2x96xf32>
    %cst_86 = arith.constant dense<0.000000e+00> : vector<2x96xf32>
    %284 = tpu.matmul %246, %13, %cst_86 {dimension_numbers = #tpu.dot_dimension_numbers<[1], [0], [0], [1], [0, 0, 1, 1], [], []>} : vector<2x32xf32>, vector<32x96xf32>, vector<2x96xf32> -> vector<2x96xf32>
    %285 = vector.broadcast %14 : vector<1x96xf32> to vector<2x96xf32>
    %286 = arith.addf %284, %285 : vector<2x96xf32>
    %287 = vector.extract_strided_slice %283 {offsets = [0, 0], sizes = [2, 32], strides = [1, 1]} : vector<2x96xf32> to vector<2x32xf32>
    %288 = vector.extract_strided_slice %286 {offsets = [0, 0], sizes = [2, 32], strides = [1, 1]} : vector<2x96xf32> to vector<2x32xf32>
    %289 = arith.addf %287, %288 : vector<2x32xf32>
    %290 = arith.negf %289 : vector<2x32xf32>
    %291 = math.exp %290 : vector<2x32xf32>
    %cst_87 = arith.constant 1.000000e+00 : f32
    %292 = vector.broadcast %cst_87 : f32 to vector<2x32xf32>
    %293 = arith.addf %292, %291 : vector<2x32xf32>
    %294 = arith.divf %292, %293 : vector<2x32xf32>
    %295 = vector.extract_strided_slice %283 {offsets = [0, 32], sizes = [2, 32], strides = [1, 1]} : vector<2x96xf32> to vector<2x32xf32>
    %296 = vector.extract_strided_slice %286 {offsets = [0, 32], sizes = [2, 32], strides = [1, 1]} : vector<2x96xf32> to vector<2x32xf32>
    %297 = arith.addf %295, %296 : vector<2x32xf32>
    %298 = arith.negf %297 : vector<2x32xf32>
    %299 = math.exp %298 : vector<2x32xf32>
    %cst_88 = arith.constant 1.000000e+00 : f32
    %300 = vector.broadcast %cst_88 : f32 to vector<2x32xf32>
    %301 = arith.addf %300, %299 : vector<2x32xf32>
    %302 = arith.divf %300, %301 : vector<2x32xf32>
    %303 = vector.extract_strided_slice %283 {offsets = [0, 64], sizes = [2, 32], strides = [1, 1]} : vector<2x96xf32> to vector<2x32xf32>
    %304 = vector.extract_strided_slice %286 {offsets = [0, 64], sizes = [2, 32], strides = [1, 1]} : vector<2x96xf32> to vector<2x32xf32>
    %305 = arith.mulf %294, %304 : vector<2x32xf32>
    %306 = arith.addf %303, %305 : vector<2x32xf32>
    %307 = math.tanh %306 : vector<2x32xf32>
    %cst_89 = arith.constant 1.000000e+00 : f32
    %308 = vector.broadcast %cst_89 : f32 to vector<2x32xf32>
    %309 = arith.subf %308, %302 : vector<2x32xf32>
    %310 = arith.mulf %309, %307 : vector<2x32xf32>
    %311 = arith.mulf %302, %246 : vector<2x32xf32>
    %312 = arith.addf %310, %311 : vector<2x32xf32>
    %c6_90 = arith.constant 6 : index
    %c0_91 = arith.constant 0 : index
    %313 = vector.load %arg14[%c6_90, %c0_91] : memref<16x96xf32, #tpu.memory_space<vmem>>, vector<2x96xf32>
    %cst_92 = arith.constant dense<0.000000e+00> : vector<2x96xf32>
    %314 = tpu.matmul %276, %15, %cst_92 {dimension_numbers = #tpu.dot_dimension_numbers<[1], [0], [0], [1], [0, 0, 1, 1], [], []>} : vector<2x32xf32>, vector<32x96xf32>, vector<2x96xf32> -> vector<2x96xf32>
    %315 = vector.broadcast %16 : vector<1x96xf32> to vector<2x96xf32>
    %316 = arith.addf %314, %315 : vector<2x96xf32>
    %317 = vector.extract_strided_slice %313 {offsets = [0, 0], sizes = [2, 32], strides = [1, 1]} : vector<2x96xf32> to vector<2x32xf32>
    %318 = vector.extract_strided_slice %316 {offsets = [0, 0], sizes = [2, 32], strides = [1, 1]} : vector<2x96xf32> to vector<2x32xf32>
    %319 = arith.addf %317, %318 : vector<2x32xf32>
    %320 = arith.negf %319 : vector<2x32xf32>
    %321 = math.exp %320 : vector<2x32xf32>
    %cst_93 = arith.constant 1.000000e+00 : f32
    %322 = vector.broadcast %cst_93 : f32 to vector<2x32xf32>
    %323 = arith.addf %322, %321 : vector<2x32xf32>
    %324 = arith.divf %322, %323 : vector<2x32xf32>
    %325 = vector.extract_strided_slice %313 {offsets = [0, 32], sizes = [2, 32], strides = [1, 1]} : vector<2x96xf32> to vector<2x32xf32>
    %326 = vector.extract_strided_slice %316 {offsets = [0, 32], sizes = [2, 32], strides = [1, 1]} : vector<2x96xf32> to vector<2x32xf32>
    %327 = arith.addf %325, %326 : vector<2x32xf32>
    %328 = arith.negf %327 : vector<2x32xf32>
    %329 = math.exp %328 : vector<2x32xf32>
    %cst_94 = arith.constant 1.000000e+00 : f32
    %330 = vector.broadcast %cst_94 : f32 to vector<2x32xf32>
    %331 = arith.addf %330, %329 : vector<2x32xf32>
    %332 = arith.divf %330, %331 : vector<2x32xf32>
    %333 = vector.extract_strided_slice %313 {offsets = [0, 64], sizes = [2, 32], strides = [1, 1]} : vector<2x96xf32> to vector<2x32xf32>
    %334 = vector.extract_strided_slice %316 {offsets = [0, 64], sizes = [2, 32], strides = [1, 1]} : vector<2x96xf32> to vector<2x32xf32>
    %335 = arith.mulf %324, %334 : vector<2x32xf32>
    %336 = arith.addf %333, %335 : vector<2x32xf32>
    %337 = math.tanh %336 : vector<2x32xf32>
    %cst_95 = arith.constant 1.000000e+00 : f32
    %338 = vector.broadcast %cst_95 : f32 to vector<2x32xf32>
    %339 = arith.subf %338, %332 : vector<2x32xf32>
    %340 = arith.mulf %339, %337 : vector<2x32xf32>
    %341 = arith.mulf %332, %276 : vector<2x32xf32>
    %342 = arith.addf %340, %341 : vector<2x32xf32>
    %c4_96 = arith.constant 4 : index
    %c0_97 = arith.constant 0 : index
    %c0_98 = arith.constant 0 : index
    %343 = vector.load %arg11[%c4_96, %c0_97, %c0_98] : memref<8x2x64xf32, #tpu.memory_space<vmem>>, vector<1x2x32xf32>
    %344 = vector.shape_cast %343 : vector<1x2x32xf32> to vector<2x32xf32>
    %345 = vector.shape_cast %312 : vector<2x32xf32> to vector<1x2x32xf32>
    tpu.vector_store %arg11[%c4_96, %c0_97, %c0_98], %345 {strides = array<i32>} : memref<8x2x64xf32, #tpu.memory_space<vmem>>, vector<1x2x32xf32>,
    %c3_99 = arith.constant 3 : index
    %c0_100 = arith.constant 0 : index
    %c32_101 = arith.constant 32 : index
    %346 = vector.load %arg11[%c3_99, %c0_100, %c32_101] : memref<8x2x64xf32, #tpu.memory_space<vmem>>, vector<1x2x32xf32>
    %347 = vector.shape_cast %346 : vector<1x2x32xf32> to vector<2x32xf32>
    %348 = vector.shape_cast %342 : vector<2x32xf32> to vector<1x2x32xf32>
    tpu.vector_store %arg11[%c3_99, %c0_100, %c32_101], %348 {strides = array<i32>} : memref<8x2x64xf32, #tpu.memory_space<vmem>>, vector<1x2x32xf32>,
    %c10_102 = arith.constant 10 : index
    %c0_103 = arith.constant 0 : index
    %349 = vector.load %arg13[%c10_102, %c0_103] : memref<16x96xf32, #tpu.memory_space<vmem>>, vector<2x96xf32>
    %cst_104 = arith.constant dense<0.000000e+00> : vector<2x96xf32>
    %350 = tpu.matmul %312, %13, %cst_104 {dimension_numbers = #tpu.dot_dimension_numbers<[1], [0], [0], [1], [0, 0, 1, 1], [], []>} : vector<2x32xf32>, vector<32x96xf32>, vector<2x96xf32> -> vector<2x96xf32>
    %351 = vector.broadcast %14 : vector<1x96xf32> to vector<2x96xf32>
    %352 = arith.addf %350, %351 : vector<2x96xf32>
    %353 = vector.extract_strided_slice %349 {offsets = [0, 0], sizes = [2, 32], strides = [1, 1]} : vector<2x96xf32> to vector<2x32xf32>
    %354 = vector.extract_strided_slice %352 {offsets = [0, 0], sizes = [2, 32], strides = [1, 1]} : vector<2x96xf32> to vector<2x32xf32>
    %355 = arith.addf %353, %354 : vector<2x32xf32>
    %356 = arith.negf %355 : vector<2x32xf32>
    %357 = math.exp %356 : vector<2x32xf32>
    %cst_105 = arith.constant 1.000000e+00 : f32
    %358 = vector.broadcast %cst_105 : f32 to vector<2x32xf32>
    %359 = arith.addf %358, %357 : vector<2x32xf32>
    %360 = arith.divf %358, %359 : vector<2x32xf32>
    %361 = vector.extract_strided_slice %349 {offsets = [0, 32], sizes = [2, 32], strides = [1, 1]} : vector<2x96xf32> to vector<2x32xf32>
    %362 = vector.extract_strided_slice %352 {offsets = [0, 32], sizes = [2, 32], strides = [1, 1]} : vector<2x96xf32> to vector<2x32xf32>
    %363 = arith.addf %361, %362 : vector<2x32xf32>
    %364 = arith.negf %363 : vector<2x32xf32>
    %365 = math.exp %364 : vector<2x32xf32>
    %cst_106 = arith.constant 1.000000e+00 : f32
    %366 = vector.broadcast %cst_106 : f32 to vector<2x32xf32>
    %367 = arith.addf %366, %365 : vector<2x32xf32>
    %368 = arith.divf %366, %367 : vector<2x32xf32>
    %369 = vector.extract_strided_slice %349 {offsets = [0, 64], sizes = [2, 32], strides = [1, 1]} : vector<2x96xf32> to vector<2x32xf32>
    %370 = vector.extract_strided_slice %352 {offsets = [0, 64], sizes = [2, 32], strides = [1, 1]} : vector<2x96xf32> to vector<2x32xf32>
    %371 = arith.mulf %360, %370 : vector<2x32xf32>
    %372 = arith.addf %369, %371 : vector<2x32xf32>
    %373 = math.tanh %372 : vector<2x32xf32>
    %cst_107 = arith.constant 1.000000e+00 : f32
    %374 = vector.broadcast %cst_107 : f32 to vector<2x32xf32>
    %375 = arith.subf %374, %368 : vector<2x32xf32>
    %376 = arith.mulf %375, %373 : vector<2x32xf32>
    %377 = arith.mulf %368, %312 : vector<2x32xf32>
    %378 = arith.addf %376, %377 : vector<2x32xf32>
    %c4_108 = arith.constant 4 : index
    %c0_109 = arith.constant 0 : index
    %379 = vector.load %arg14[%c4_108, %c0_109] : memref<16x96xf32, #tpu.memory_space<vmem>>, vector<2x96xf32>
    %cst_110 = arith.constant dense<0.000000e+00> : vector<2x96xf32>
    %380 = tpu.matmul %342, %15, %cst_110 {dimension_numbers = #tpu.dot_dimension_numbers<[1], [0], [0], [1], [0, 0, 1, 1], [], []>} : vector<2x32xf32>, vector<32x96xf32>, vector<2x96xf32> -> vector<2x96xf32>
    %381 = vector.broadcast %16 : vector<1x96xf32> to vector<2x96xf32>
    %382 = arith.addf %380, %381 : vector<2x96xf32>
    %383 = vector.extract_strided_slice %379 {offsets = [0, 0], sizes = [2, 32], strides = [1, 1]} : vector<2x96xf32> to vector<2x32xf32>
    %384 = vector.extract_strided_slice %382 {offsets = [0, 0], sizes = [2, 32], strides = [1, 1]} : vector<2x96xf32> to vector<2x32xf32>
    %385 = arith.addf %383, %384 : vector<2x32xf32>
    %386 = arith.negf %385 : vector<2x32xf32>
    %387 = math.exp %386 : vector<2x32xf32>
    %cst_111 = arith.constant 1.000000e+00 : f32
    %388 = vector.broadcast %cst_111 : f32 to vector<2x32xf32>
    %389 = arith.addf %388, %387 : vector<2x32xf32>
    %390 = arith.divf %388, %389 : vector<2x32xf32>
    %391 = vector.extract_strided_slice %379 {offsets = [0, 32], sizes = [2, 32], strides = [1, 1]} : vector<2x96xf32> to vector<2x32xf32>
    %392 = vector.extract_strided_slice %382 {offsets = [0, 32], sizes = [2, 32], strides = [1, 1]} : vector<2x96xf32> to vector<2x32xf32>
    %393 = arith.addf %391, %392 : vector<2x32xf32>
    %394 = arith.negf %393 : vector<2x32xf32>
    %395 = math.exp %394 : vector<2x32xf32>
    %cst_112 = arith.constant 1.000000e+00 : f32
    %396 = vector.broadcast %cst_112 : f32 to vector<2x32xf32>
    %397 = arith.addf %396, %395 : vector<2x32xf32>
    %398 = arith.divf %396, %397 : vector<2x32xf32>
    %399 = vector.extract_strided_slice %379 {offsets = [0, 64], sizes = [2, 32], strides = [1, 1]} : vector<2x96xf32> to vector<2x32xf32>
    %400 = vector.extract_strided_slice %382 {offsets = [0, 64], sizes = [2, 32], strides = [1, 1]} : vector<2x96xf32> to vector<2x32xf32>
    %401 = arith.mulf %390, %400 : vector<2x32xf32>
    %402 = arith.addf %399, %401 : vector<2x32xf32>
    %403 = math.tanh %402 : vector<2x32xf32>
    %cst_113 = arith.constant 1.000000e+00 : f32
    %404 = vector.broadcast %cst_113 : f32 to vector<2x32xf32>
    %405 = arith.subf %404, %398 : vector<2x32xf32>
    %406 = arith.mulf %405, %403 : vector<2x32xf32>
    %407 = arith.mulf %398, %342 : vector<2x32xf32>
    %408 = arith.addf %406, %407 : vector<2x32xf32>
    %c5_114 = arith.constant 5 : index
    %c0_115 = arith.constant 0 : index
    %c0_116 = arith.constant 0 : index
    %409 = vector.load %arg11[%c5_114, %c0_115, %c0_116] : memref<8x2x64xf32, #tpu.memory_space<vmem>>, vector<1x2x32xf32>
    %410 = vector.shape_cast %409 : vector<1x2x32xf32> to vector<2x32xf32>
    %411 = vector.shape_cast %378 : vector<2x32xf32> to vector<1x2x32xf32>
    tpu.vector_store %arg11[%c5_114, %c0_115, %c0_116], %411 {strides = array<i32>} : memref<8x2x64xf32, #tpu.memory_space<vmem>>, vector<1x2x32xf32>,
    %c2_117 = arith.constant 2 : index
    %c0_118 = arith.constant 0 : index
    %c32_119 = arith.constant 32 : index
    %412 = vector.load %arg11[%c2_117, %c0_118, %c32_119] : memref<8x2x64xf32, #tpu.memory_space<vmem>>, vector<1x2x32xf32>
    %413 = vector.shape_cast %412 : vector<1x2x32xf32> to vector<2x32xf32>
    %414 = vector.shape_cast %408 : vector<2x32xf32> to vector<1x2x32xf32>
    tpu.vector_store %arg11[%c2_117, %c0_118, %c32_119], %414 {strides = array<i32>} : memref<8x2x64xf32, #tpu.memory_space<vmem>>, vector<1x2x32xf32>,
    %c12_120 = arith.constant 12 : index
    %c0_121 = arith.constant 0 : index
    %415 = vector.load %arg13[%c12_120, %c0_121] : memref<16x96xf32, #tpu.memory_space<vmem>>, vector<2x96xf32>
    %cst_122 = arith.constant dense<0.000000e+00> : vector<2x96xf32>
    %416 = tpu.matmul %378, %13, %cst_122 {dimension_numbers = #tpu.dot_dimension_numbers<[1], [0], [0], [1], [0, 0, 1, 1], [], []>} : vector<2x32xf32>, vector<32x96xf32>, vector<2x96xf32> -> vector<2x96xf32>
    %417 = vector.broadcast %14 : vector<1x96xf32> to vector<2x96xf32>
    %418 = arith.addf %416, %417 : vector<2x96xf32>
    %419 = vector.extract_strided_slice %415 {offsets = [0, 0], sizes = [2, 32], strides = [1, 1]} : vector<2x96xf32> to vector<2x32xf32>
    %420 = vector.extract_strided_slice %418 {offsets = [0, 0], sizes = [2, 32], strides = [1, 1]} : vector<2x96xf32> to vector<2x32xf32>
    %421 = arith.addf %419, %420 : vector<2x32xf32>
    %422 = arith.negf %421 : vector<2x32xf32>
    %423 = math.exp %422 : vector<2x32xf32>
    %cst_123 = arith.constant 1.000000e+00 : f32
    %424 = vector.broadcast %cst_123 : f32 to vector<2x32xf32>
    %425 = arith.addf %424, %423 : vector<2x32xf32>
    %426 = arith.divf %424, %425 : vector<2x32xf32>
    %427 = vector.extract_strided_slice %415 {offsets = [0, 32], sizes = [2, 32], strides = [1, 1]} : vector<2x96xf32> to vector<2x32xf32>
    %428 = vector.extract_strided_slice %418 {offsets = [0, 32], sizes = [2, 32], strides = [1, 1]} : vector<2x96xf32> to vector<2x32xf32>
    %429 = arith.addf %427, %428 : vector<2x32xf32>
    %430 = arith.negf %429 : vector<2x32xf32>
    %431 = math.exp %430 : vector<2x32xf32>
    %cst_124 = arith.constant 1.000000e+00 : f32
    %432 = vector.broadcast %cst_124 : f32 to vector<2x32xf32>
    %433 = arith.addf %432, %431 : vector<2x32xf32>
    %434 = arith.divf %432, %433 : vector<2x32xf32>
    %435 = vector.extract_strided_slice %415 {offsets = [0, 64], sizes = [2, 32], strides = [1, 1]} : vector<2x96xf32> to vector<2x32xf32>
    %436 = vector.extract_strided_slice %418 {offsets = [0, 64], sizes = [2, 32], strides = [1, 1]} : vector<2x96xf32> to vector<2x32xf32>
    %437 = arith.mulf %426, %436 : vector<2x32xf32>
    %438 = arith.addf %435, %437 : vector<2x32xf32>
    %439 = math.tanh %438 : vector<2x32xf32>
    %cst_125 = arith.constant 1.000000e+00 : f32
    %440 = vector.broadcast %cst_125 : f32 to vector<2x32xf32>
    %441 = arith.subf %440, %434 : vector<2x32xf32>
    %442 = arith.mulf %441, %439 : vector<2x32xf32>
    %443 = arith.mulf %434, %378 : vector<2x32xf32>
    %444 = arith.addf %442, %443 : vector<2x32xf32>
    %c2_126 = arith.constant 2 : index
    %c0_127 = arith.constant 0 : index
    %445 = vector.load %arg14[%c2_126, %c0_127] : memref<16x96xf32, #tpu.memory_space<vmem>>, vector<2x96xf32>
    %cst_128 = arith.constant dense<0.000000e+00> : vector<2x96xf32>
    %446 = tpu.matmul %408, %15, %cst_128 {dimension_numbers = #tpu.dot_dimension_numbers<[1], [0], [0], [1], [0, 0, 1, 1], [], []>} : vector<2x32xf32>, vector<32x96xf32>, vector<2x96xf32> -> vector<2x96xf32>
    %447 = vector.broadcast %16 : vector<1x96xf32> to vector<2x96xf32>
    %448 = arith.addf %446, %447 : vector<2x96xf32>
    %449 = vector.extract_strided_slice %445 {offsets = [0, 0], sizes = [2, 32], strides = [1, 1]} : vector<2x96xf32> to vector<2x32xf32>
    %450 = vector.extract_strided_slice %448 {offsets = [0, 0], sizes = [2, 32], strides = [1, 1]} : vector<2x96xf32> to vector<2x32xf32>
    %451 = arith.addf %449, %450 : vector<2x32xf32>
    %452 = arith.negf %451 : vector<2x32xf32>
    %453 = math.exp %452 : vector<2x32xf32>
    %cst_129 = arith.constant 1.000000e+00 : f32
    %454 = vector.broadcast %cst_129 : f32 to vector<2x32xf32>
    %455 = arith.addf %454, %453 : vector<2x32xf32>
    %456 = arith.divf %454, %455 : vector<2x32xf32>
    %457 = vector.extract_strided_slice %445 {offsets = [0, 32], sizes = [2, 32], strides = [1, 1]} : vector<2x96xf32> to vector<2x32xf32>
    %458 = vector.extract_strided_slice %448 {offsets = [0, 32], sizes = [2, 32], strides = [1, 1]} : vector<2x96xf32> to vector<2x32xf32>
    %459 = arith.addf %457, %458 : vector<2x32xf32>
    %460 = arith.negf %459 : vector<2x32xf32>
    %461 = math.exp %460 : vector<2x32xf32>
    %cst_130 = arith.constant 1.000000e+00 : f32
    %462 = vector.broadcast %cst_130 : f32 to vector<2x32xf32>
    %463 = arith.addf %462, %461 : vector<2x32xf32>
    %464 = arith.divf %462, %463 : vector<2x32xf32>
    %465 = vector.extract_strided_slice %445 {offsets = [0, 64], sizes = [2, 32], strides = [1, 1]} : vector<2x96xf32> to vector<2x32xf32>
    %466 = vector.extract_strided_slice %448 {offsets = [0, 64], sizes = [2, 32], strides = [1, 1]} : vector<2x96xf32> to vector<2x32xf32>
    %467 = arith.mulf %456, %466 : vector<2x32xf32>
    %468 = arith.addf %465, %467 : vector<2x32xf32>
    %469 = math.tanh %468 : vector<2x32xf32>
    %cst_131 = arith.constant 1.000000e+00 : f32
    %470 = vector.broadcast %cst_131 : f32 to vector<2x32xf32>
    %471 = arith.subf %470, %464 : vector<2x32xf32>
    %472 = arith.mulf %471, %469 : vector<2x32xf32>
    %473 = arith.mulf %464, %408 : vector<2x32xf32>
    %474 = arith.addf %472, %473 : vector<2x32xf32>
    %c6_132 = arith.constant 6 : index
    %c0_133 = arith.constant 0 : index
    %c0_134 = arith.constant 0 : index
    %475 = vector.load %arg11[%c6_132, %c0_133, %c0_134] : memref<8x2x64xf32, #tpu.memory_space<vmem>>, vector<1x2x32xf32>
    %476 = vector.shape_cast %475 : vector<1x2x32xf32> to vector<2x32xf32>
    %477 = vector.shape_cast %444 : vector<2x32xf32> to vector<1x2x32xf32>
    tpu.vector_store %arg11[%c6_132, %c0_133, %c0_134], %477 {strides = array<i32>} : memref<8x2x64xf32, #tpu.memory_space<vmem>>, vector<1x2x32xf32>,
    %c1_135 = arith.constant 1 : index
    %c0_136 = arith.constant 0 : index
    %c32_137 = arith.constant 32 : index
    %478 = vector.load %arg11[%c1_135, %c0_136, %c32_137] : memref<8x2x64xf32, #tpu.memory_space<vmem>>, vector<1x2x32xf32>
    %479 = vector.shape_cast %478 : vector<1x2x32xf32> to vector<2x32xf32>
    %480 = vector.shape_cast %474 : vector<2x32xf32> to vector<1x2x32xf32>
    tpu.vector_store %arg11[%c1_135, %c0_136, %c32_137], %480 {strides = array<i32>} : memref<8x2x64xf32, #tpu.memory_space<vmem>>, vector<1x2x32xf32>,
    %c14_138 = arith.constant 14 : index
    %c0_139 = arith.constant 0 : index
    %481 = vector.load %arg13[%c14_138, %c0_139] : memref<16x96xf32, #tpu.memory_space<vmem>>, vector<2x96xf32>
    %cst_140 = arith.constant dense<0.000000e+00> : vector<2x96xf32>
    %482 = tpu.matmul %444, %13, %cst_140 {dimension_numbers = #tpu.dot_dimension_numbers<[1], [0], [0], [1], [0, 0, 1, 1], [], []>} : vector<2x32xf32>, vector<32x96xf32>, vector<2x96xf32> -> vector<2x96xf32>
    %483 = vector.broadcast %14 : vector<1x96xf32> to vector<2x96xf32>
    %484 = arith.addf %482, %483 : vector<2x96xf32>
    %485 = vector.extract_strided_slice %481 {offsets = [0, 0], sizes = [2, 32], strides = [1, 1]} : vector<2x96xf32> to vector<2x32xf32>
    %486 = vector.extract_strided_slice %484 {offsets = [0, 0], sizes = [2, 32], strides = [1, 1]} : vector<2x96xf32> to vector<2x32xf32>
    %487 = arith.addf %485, %486 : vector<2x32xf32>
    %488 = arith.negf %487 : vector<2x32xf32>
    %489 = math.exp %488 : vector<2x32xf32>
    %cst_141 = arith.constant 1.000000e+00 : f32
    %490 = vector.broadcast %cst_141 : f32 to vector<2x32xf32>
    %491 = arith.addf %490, %489 : vector<2x32xf32>
    %492 = arith.divf %490, %491 : vector<2x32xf32>
    %493 = vector.extract_strided_slice %481 {offsets = [0, 32], sizes = [2, 32], strides = [1, 1]} : vector<2x96xf32> to vector<2x32xf32>
    %494 = vector.extract_strided_slice %484 {offsets = [0, 32], sizes = [2, 32], strides = [1, 1]} : vector<2x96xf32> to vector<2x32xf32>
    %495 = arith.addf %493, %494 : vector<2x32xf32>
    %496 = arith.negf %495 : vector<2x32xf32>
    %497 = math.exp %496 : vector<2x32xf32>
    %cst_142 = arith.constant 1.000000e+00 : f32
    %498 = vector.broadcast %cst_142 : f32 to vector<2x32xf32>
    %499 = arith.addf %498, %497 : vector<2x32xf32>
    %500 = arith.divf %498, %499 : vector<2x32xf32>
    %501 = vector.extract_strided_slice %481 {offsets = [0, 64], sizes = [2, 32], strides = [1, 1]} : vector<2x96xf32> to vector<2x32xf32>
    %502 = vector.extract_strided_slice %484 {offsets = [0, 64], sizes = [2, 32], strides = [1, 1]} : vector<2x96xf32> to vector<2x32xf32>
    %503 = arith.mulf %492, %502 : vector<2x32xf32>
    %504 = arith.addf %501, %503 : vector<2x32xf32>
    %505 = math.tanh %504 : vector<2x32xf32>
    %cst_143 = arith.constant 1.000000e+00 : f32
    %506 = vector.broadcast %cst_143 : f32 to vector<2x32xf32>
    %507 = arith.subf %506, %500 : vector<2x32xf32>
    %508 = arith.mulf %507, %505 : vector<2x32xf32>
    %509 = arith.mulf %500, %444 : vector<2x32xf32>
    %510 = arith.addf %508, %509 : vector<2x32xf32>
    %c0_144 = arith.constant 0 : index
    %c0_145 = arith.constant 0 : index
    %511 = vector.load %arg14[%c0_144, %c0_145] : memref<16x96xf32, #tpu.memory_space<vmem>>, vector<2x96xf32>
    %cst_146 = arith.constant dense<0.000000e+00> : vector<2x96xf32>
    %512 = tpu.matmul %474, %15, %cst_146 {dimension_numbers = #tpu.dot_dimension_numbers<[1], [0], [0], [1], [0, 0, 1, 1], [], []>} : vector<2x32xf32>, vector<32x96xf32>, vector<2x96xf32> -> vector<2x96xf32>
    %513 = vector.broadcast %16 : vector<1x96xf32> to vector<2x96xf32>
    %514 = arith.addf %512, %513 : vector<2x96xf32>
    %515 = vector.extract_strided_slice %511 {offsets = [0, 0], sizes = [2, 32], strides = [1, 1]} : vector<2x96xf32> to vector<2x32xf32>
    %516 = vector.extract_strided_slice %514 {offsets = [0, 0], sizes = [2, 32], strides = [1, 1]} : vector<2x96xf32> to vector<2x32xf32>
    %517 = arith.addf %515, %516 : vector<2x32xf32>
    %518 = arith.negf %517 : vector<2x32xf32>
    %519 = math.exp %518 : vector<2x32xf32>
    %cst_147 = arith.constant 1.000000e+00 : f32
    %520 = vector.broadcast %cst_147 : f32 to vector<2x32xf32>
    %521 = arith.addf %520, %519 : vector<2x32xf32>
    %522 = arith.divf %520, %521 : vector<2x32xf32>
    %523 = vector.extract_strided_slice %511 {offsets = [0, 32], sizes = [2, 32], strides = [1, 1]} : vector<2x96xf32> to vector<2x32xf32>
    %524 = vector.extract_strided_slice %514 {offsets = [0, 32], sizes = [2, 32], strides = [1, 1]} : vector<2x96xf32> to vector<2x32xf32>
    %525 = arith.addf %523, %524 : vector<2x32xf32>
    %526 = arith.negf %525 : vector<2x32xf32>
    %527 = math.exp %526 : vector<2x32xf32>
    %cst_148 = arith.constant 1.000000e+00 : f32
    %528 = vector.broadcast %cst_148 : f32 to vector<2x32xf32>
    %529 = arith.addf %528, %527 : vector<2x32xf32>
    %530 = arith.divf %528, %529 : vector<2x32xf32>
    %531 = vector.extract_strided_slice %511 {offsets = [0, 64], sizes = [2, 32], strides = [1, 1]} : vector<2x96xf32> to vector<2x32xf32>
    %532 = vector.extract_strided_slice %514 {offsets = [0, 64], sizes = [2, 32], strides = [1, 1]} : vector<2x96xf32> to vector<2x32xf32>
    %533 = arith.mulf %522, %532 : vector<2x32xf32>
    %534 = arith.addf %531, %533 : vector<2x32xf32>
    %535 = math.tanh %534 : vector<2x32xf32>
    %cst_149 = arith.constant 1.000000e+00 : f32
    %536 = vector.broadcast %cst_149 : f32 to vector<2x32xf32>
    %537 = arith.subf %536, %530 : vector<2x32xf32>
    %538 = arith.mulf %537, %535 : vector<2x32xf32>
    %539 = arith.mulf %530, %474 : vector<2x32xf32>
    %540 = arith.addf %538, %539 : vector<2x32xf32>
    %c7_150 = arith.constant 7 : index
    %c0_151 = arith.constant 0 : index
    %c0_152 = arith.constant 0 : index
    %541 = vector.load %arg11[%c7_150, %c0_151, %c0_152] : memref<8x2x64xf32, #tpu.memory_space<vmem>>, vector<1x2x32xf32>
    %542 = vector.shape_cast %541 : vector<1x2x32xf32> to vector<2x32xf32>
    %543 = vector.shape_cast %510 : vector<2x32xf32> to vector<1x2x32xf32>
    tpu.vector_store %arg11[%c7_150, %c0_151, %c0_152], %543 {strides = array<i32>} : memref<8x2x64xf32, #tpu.memory_space<vmem>>, vector<1x2x32xf32>,
    %c0_153 = arith.constant 0 : index
    %c0_154 = arith.constant 0 : index
    %c32_155 = arith.constant 32 : index
    %544 = vector.load %arg11[%c0_153, %c0_154, %c32_155] : memref<8x2x64xf32, #tpu.memory_space<vmem>>, vector<1x2x32xf32>
    %545 = vector.shape_cast %544 : vector<1x2x32xf32> to vector<2x32xf32>
    %546 = vector.shape_cast %540 : vector<2x32xf32> to vector<1x2x32xf32>
    tpu.vector_store %arg11[%c0_153, %c0_154, %c32_155], %546 {strides = array<i32>} : memref<8x2x64xf32, #tpu.memory_space<vmem>>, vector<1x2x32xf32>,
    %c0_156 = arith.constant 0 : index
    %c0_157 = arith.constant 0 : index
    %547 = vector.load %arg9[%c0_156, %c0_157] : memref<64x32xf32, #tpu.memory_space<vmem>>, vector<64x32xf32>
    %548 = vector.extract_strided_slice %547 {offsets = [0, 0], sizes = [32, 32], strides = [1, 1]} : vector<64x32xf32> to vector<32x32xf32>
    %cst_158 = arith.constant dense<0.000000e+00> : vector<2x32xf32>
    %549 = tpu.matmul %510, %548, %cst_158 {dimension_numbers = #tpu.dot_dimension_numbers<[1], [0], [0], [1], [0, 0, 1, 1], [], []>} : vector<2x32xf32>, vector<32x32xf32>, vector<2x32xf32> -> vector<2x32xf32>
    %550 = vector.extract_strided_slice %547 {offsets = [32, 0], sizes = [32, 32], strides = [1, 1]} : vector<64x32xf32> to vector<32x32xf32>
    %cst_159 = arith.constant dense<0.000000e+00> : vector<2x32xf32>
    %551 = tpu.matmul %540, %550, %cst_159 {dimension_numbers = #tpu.dot_dimension_numbers<[1], [0], [0], [1], [0, 0, 1, 1], [], []>} : vector<2x32xf32>, vector<32x32xf32>, vector<2x32xf32> -> vector<2x32xf32>
    %552 = arith.addf %549, %551 : vector<2x32xf32>
    %c0_160 = arith.constant 0 : index
    %c0_161 = arith.constant 0 : index
    %553 = vector.load %arg10[%c0_160, %c0_161] : memref<1x32xf32, #tpu.memory_space<vmem>>, vector<1x32xf32>
    %554 = vector.broadcast %553 : vector<1x32xf32> to vector<2x32xf32>
    %555 = arith.addf %552, %554 : vector<2x32xf32>
    %556 = math.tanh %555 : vector<2x32xf32>
    %c0_162 = arith.constant 0 : index
    %c0_163 = arith.constant 0 : index
    %557 = vector.load %arg12[%c0_162, %c0_163] : memref<2x32xf32, #tpu.memory_space<vmem>>, vector<2x32xf32>
    tpu.vector_store %arg12[%c0_162, %c0_163], %556 {strides = array<i32>} : memref<2x32xf32, #tpu.memory_space<vmem>>, vector<2x32xf32>,
    return
  }
}

</mosaic_0001>

<llo_original>
// kernel: encoder_gru_forward.2
$region0: #{encoder_gru_forward.2}
  #allocation0 [shape = 'u32[]', space=smem, size = 0x4, offset = 0x4, fixed_abs, tag = 'smem constant byte address 0x4 - core index']
  #allocation1 [shape = 'u32[144,128]{1,0:T(1,128)}', space=vmem, size = 0x12000, scoped, tag = 'internal scratch']
  #allocation2 [shape = 'f32[16,96]{1,0:T(8,128)}', space=vmem, size = 0x2000, scoped, tag = 'scratch operand']
  #allocation3 [shape = 'f32[16,96]{1,0:T(8,128)}', space=vmem, size = 0x2000, scoped, tag = 'scratch operand']
  %s0 = inlined_call_operand.vmem [shape: f32[16,16], index: 0, kind: input, shape index: {}]
  %s1 = inlined_call_operand.vmem [shape: f32[16,96], index: 1, kind: input, shape index: {}]
  %s2 = inlined_call_operand.vmem [shape: f32[32,96], index: 2, kind: input, shape index: {}]
  %s3 = inlined_call_operand.vmem [shape: f32[1,96], index: 3, kind: input, shape index: {}]
  %s4 = inlined_call_operand.vmem [shape: f32[1,96], index: 4, kind: input, shape index: {}]
  %s5 = inlined_call_operand.vmem [shape: f32[16,96], index: 5, kind: input, shape index: {}]
  %s6 = inlined_call_operand.vmem [shape: f32[32,96], index: 6, kind: input, shape index: {}]
  %s7 = inlined_call_operand.vmem [shape: f32[1,96], index: 7, kind: input, shape index: {}]
  %s8 = inlined_call_operand.vmem [shape: f32[1,96], index: 8, kind: input, shape index: {}]
  %s9 = inlined_call_operand.vmem [shape: f32[8,2,64], index: 9, kind: output, shape index: {}]
  %s10 = sld [smem:[#allocation0]]
  $region46: #{encoder_gru_forward.2} parent=0
    _
  %s12 = ssub.s32 1, %s10
  %s13 = scalar_select 0, %s12, %s10
  // Predicated region
  $region2: #{encoder_gru_forward.2} parent=0 // pred_check
    _
  $region3: #{encoder_gru_forward.2} parent=0 // pred_check_branch
    %15 = sbr.rel (0) target = $region5
  $region4: #{encoder_gru_forward.2} parent=0 // pred_region
    _
  $region5: #{encoder_gru_forward.2} parent=0 // pred_fallthru
    _
  // Predicated region
  $region6: #{encoder_gru_forward.2} parent=0 // pred_check
    _
  $region7: #{encoder_gru_forward.2} parent=0 // pred_check_branch
    %17 = sbr.rel (0) target = $region9
  $region8: #{encoder_gru_forward.2} parent=0 // pred_region
    _
  $region9: #{encoder_gru_forward.2} parent=0 // pred_fallthru
    _
  // Predicated region
  $region10: #{encoder_gru_forward.2} parent=0 // pred_check
    _
  $region11: #{encoder_gru_forward.2} parent=0 // pred_check_branch
    %19 = sbr.rel (0) target = $region13
  $region12: #{encoder_gru_forward.2} parent=0 // pred_region
    _
  $region13: #{encoder_gru_forward.2} parent=0 // pred_fallthru
    _
  // Predicated region
  $region14: #{encoder_gru_forward.2} parent=0 // pred_check
    _
  $region15: #{encoder_gru_forward.2} parent=0 // pred_check_branch
    %21 = sbr.rel (0) target = $region17
  $region16: #{encoder_gru_forward.2} parent=0 // pred_region
    _
  $region17: #{encoder_gru_forward.2} parent=0 // pred_fallthru
    _
  // Predicated region
  $region18: #{encoder_gru_forward.2} parent=0 // pred_check
    _
  $region19: #{encoder_gru_forward.2} parent=0 // pred_check_branch
    %23 = sbr.rel (0) target = $region21
  $region20: #{encoder_gru_forward.2} parent=0 // pred_region
    _
  $region21: #{encoder_gru_forward.2} parent=0 // pred_fallthru
    _
  // Predicated region
  $region22: #{encoder_gru_forward.2} parent=0 // pred_check
    _
  $region23: #{encoder_gru_forward.2} parent=0 // pred_check_branch
    %25 = sbr.rel (0) target = $region25
  $region24: #{encoder_gru_forward.2} parent=0 // pred_region
    _
  $region25: #{encoder_gru_forward.2} parent=0 // pred_fallthru
    _
  // Predicated region
  $region26: #{encoder_gru_forward.2} parent=0 // pred_check
    _
  $region27: #{encoder_gru_forward.2} parent=0 // pred_check_branch
    %27 = sbr.rel (0) target = $region29
  $region28: #{encoder_gru_forward.2} parent=0 // pred_region
    _
  $region29: #{encoder_gru_forward.2} parent=0 // pred_fallthru
    _
  // Predicated region
  $region30: #{encoder_gru_forward.2} parent=0 // pred_check
    _
  $region31: #{encoder_gru_forward.2} parent=0 // pred_check_branch
    %29 = sbr.rel (0) target = $region33
  $region32: #{encoder_gru_forward.2} parent=0 // pred_region
    _
  $region33: #{encoder_gru_forward.2} parent=0 // pred_fallthru
    _
  // Predicated region
  $region34: #{encoder_gru_forward.2} parent=0 // pred_check
    _
  $region35: #{encoder_gru_forward.2} parent=0 // pred_check_branch
    %31 = sbr.rel (0) target = $region37
  $region36: #{encoder_gru_forward.2} parent=0 // pred_region
    _
  $region37: #{encoder_gru_forward.2} parent=0 // pred_fallthru
    _
  %v32 = vld [vmem:[%s0] sm:$0xff]
  %v33 = vld [vmem:[%s0 + $0x8] sm:$0xff]
  %v34 = vld [vmem:[%s1] sm:$0xff]
  %v35 = vld [vmem:[%s1 + $0x8] sm:$0xff]
  %v36 = vld [vmem:[%s3] sm:$0x1]
  %v38 = vlaneseq
  %v39 = vshrl.u32 %v38, 7
  %v40 = vsub.s32 0, %v39
  %v41 = vrot.slane %v36, %v40
  %vm43 = vcmask 130048
  %v45 = vsel %vm43, %v32, 0
  %v48 = vsel %vm43, %v33, 0
  %50 = vmatprep.subr.mxu0 0.0
  %51 = vmatpush1.msra.mxu0 %v34
  %52 = vmatprep.subr.mxu0 0.0
  %53 = vmatpush1.msra.mxu0 %v35
  %54 = vmatprep.subr.mxu0 0.0
  %55 = vmatpush1.msra.mxu0 0.0
  %56 = vmatprep.subr.mxu0 0.0
  %57 = vmatpush1.msra.mxu0 0.0
  %58 = vmatprep.subr.mxu0 0.0
  %59 = vmatpush1.msra.mxu0 0.0
  %60 = vmatprep.subr.mxu0 0.0
  %61 = vmatpush1.msra.mxu0 0.0
  %62 = vmatprep.subr.mxu0 0.0
  %63 = vmatpush1.msra.mxu0 0.0
  %64 = vmatprep.subr.mxu0 0.0
  %65 = vmatpush1.msra.mxu0 0.0
  %66 = vmatprep.subr.mxu0 0.0
  %67 = vmatpush1.msra.mxu0 0.0
  %68 = vmatprep.subr.mxu0 0.0
  %69 = vmatpush1.msra.mxu0 0.0
  %70 = vmatprep.subr.mxu0 0.0
  %71 = vmatpush1.msra.mxu0 0.0
  %72 = vmatprep.subr.mxu0 0.0
  %73 = vmatpush1.msra.mxu0 0.0
  %74 = vmatprep.subr.mxu0 0.0
  %75 = vmatpush1.msra.mxu0 0.0
  %76 = vmatprep.subr.mxu0 0.0
  %77 = vmatpush1.msra.mxu0 0.0
  %78 = vmatprep.subr.mxu0 0.0
  %79 = vmatpush1.msra.mxu0 0.0
  %80 = vmatprep.subr.mxu0 0.0
  %81 = vmatpush1.msra.mxu0 0.0
  %82 = vmatprep.subr.mxu0 0.0
  %83 = vmatpush1.msra.mxu0 0.0
  %84 = vmatprep.subr.mxu0 0.0
  %85 = vmatpush1.msra.mxu0 0.0
  %86 = vmatprep.subr.mxu0 0.0
  %87 = vmatpush1.msra.mxu0 0.0
  %88 = vmatprep.subr.mxu0 0.0
  %89 = vmatpush1.msra.mxu0 0.0
  %90 = vmatprep.subr.mxu0 0.0
  %91 = vmatpush1.msra.mxu0 0.0
  %92 = vmatprep.subr.mxu0 0.0
  %93 = vmatpush1.msra.mxu0 0.0
  %94 = vmatprep.subr.mxu0 0.0
  %95 = vmatpush1.msra.mxu0 0.0
  %96 = vmatprep.subr.mxu0 0.0
  %97 = vmatpush1.msra.mxu0 0.0
  %98 = vmatprep.subr.mxu0 0.0
  %99 = vmatpush1.msra.mxu0 0.0
  %100 = vmatprep.subr.mxu0 0.0
  %101 = vmatpush1.msra.mxu0 0.0
  %102 = vmatprep.subr.mxu0 0.0
  %103 = vmatpush1.msra.mxu0 0.0
  %104 = vmatprep.subr.mxu0 0.0
  %105 = vmatpush1.msra.mxu0 0.0
  %106 = vmatprep.subr.mxu0 0.0
  %107 = vmatpush1.msra.mxu0 0.0
  %108 = vmatprep.subr.mxu0 0.0
  %109 = vmatpush1.msra.mxu0 0.0
  %110 = vmatprep.subr.mxu0 0.0
  %111 = vmatpush1.msra.mxu0 0.0
  %112 = vmatprep.subr.mxu0 0.0
  %113 = vmatpush1.msra.mxu0 0.0
  %114 = vmatprep.mubr.f32.mxu0 0.0
  %115 = vmatmul.mubr.f32.gmra.mrb[0].mxu0 %v45
  %v116 = vpop.f32.mrb[0].mxu0
  %v117 = vadd.f32 %v41, %v116
  %v118 = vpop.f32.mrb[0].mxu0
  %119 = vmatprep.mubr.f32.mxu0 0.0
  %120 = vmatmul.mubr.f32.gmra.mrb[0].mxu0 %v48
  %v121 = vpop.f32.mrb[0].mxu0
  %v122 = vadd.f32 %v41, %v121
  %v123 = vpop.f32.mrb[0].mxu0
  %124 = vdwg.mxu0
  %vm125 = vcmask 785408
  %126 = vst.msk [vmem:[#allocation2] sm:$0xff] %vm125, %v117
  %127 = vst.msk [vmem:[#allocation2 + $0x8] sm:$0xff] %vm125, %v122
  %v128 = vld [vmem:[%s5] sm:$0xff]
  %v129 = vld [vmem:[%s5 + $0x8] sm:$0xff]
  %v130 = vld [vmem:[%s7] sm:$0x1]
  %v132 = vlaneseq
  %v133 = vshrl.u32 %v132, 7
  %v134 = vsub.s32 0, %v133
  %v135 = vrot.slane %v130, %v134
  %137 = vmatprep.subr.mxu0 0.0
  %138 = vmatpush1.msra.mxu0 %v128
  %139 = vmatprep.subr.mxu0 0.0
  %140 = vmatpush1.msra.mxu0 %v129
  %141 = vmatprep.subr.mxu0 0.0
  %142 = vmatpush1.msra.mxu0 0.0
  %143 = vmatprep.subr.mxu0 0.0
  %144 = vmatpush1.msra.mxu0 0.0
  %145 = vmatprep.subr.mxu0 0.0
  %146 = vmatpush1.msra.mxu0 0.0
  %147 = vmatprep.subr.mxu0 0.0
  %148 = vmatpush1.msra.mxu0 0.0
  %149 = vmatprep.subr.mxu0 0.0
  %150 = vmatpush1.msra.mxu0 0.0
  %151 = vmatprep.subr.mxu0 0.0
  %152 = vmatpush1.msra.mxu0 0.0
  %153 = vmatprep.subr.mxu0 0.0
  %154 = vmatpush1.msra.mxu0 0.0
  %155 = vmatprep.subr.mxu0 0.0
  %156 = vmatpush1.msra.mxu0 0.0
  %157 = vmatprep.subr.mxu0 0.0
  %158 = vmatpush1.msra.mxu0 0.0
  %159 = vmatprep.subr.mxu0 0.0
  %160 = vmatpush1.msra.mxu0 0.0
  %161 = vmatprep.subr.mxu0 0.0
  %162 = vmatpush1.msra.mxu0 0.0
  %163 = vmatprep.subr.mxu0 0.0
  %164 = vmatpush1.msra.mxu0 0.0
  %165 = vmatprep.subr.mxu0 0.0
  %166 = vmatpush1.msra.mxu0 0.0
  %167 = vmatprep.subr.mxu0 0.0
  %168 = vmatpush1.msra.mxu0 0.0
  %169 = vmatprep.subr.mxu0 0.0
  %170 = vmatpush1.msra.mxu0 0.0
  %171 = vmatprep.subr.mxu0 0.0
  %172 = vmatpush1.msra.mxu0 0.0
  %173 = vmatprep.subr.mxu0 0.0
  %174 = vmatpush1.msra.mxu0 0.0
  %175 = vmatprep.subr.mxu0 0.0
  %176 = vmatpush1.msra.mxu0 0.0
  %177 = vmatprep.subr.mxu0 0.0
  %178 = vmatpush1.msra.mxu0 0.0
  %179 = vmatprep.subr.mxu0 0.0
  %180 = vmatpush1.msra.mxu0 0.0
  %181 = vmatprep.subr.mxu0 0.0
  %182 = vmatpush1.msra.mxu0 0.0
  %183 = vmatprep.subr.mxu0 0.0
  %184 = vmatpush1.msra.mxu0 0.0
  %185 = vmatprep.subr.mxu0 0.0
  %186 = vmatpush1.msra.mxu0 0.0
  %187 = vmatprep.subr.mxu0 0.0
  %188 = vmatpush1.msra.mxu0 0.0
  %189 = vmatprep.subr.mxu0 0.0
  %190 = vmatpush1.msra.mxu0 0.0
  %191 = vmatprep.subr.mxu0 0.0
  %192 = vmatpush1.msra.mxu0 0.0
  %193 = vmatprep.subr.mxu0 0.0
  %194 = vmatpush1.msra.mxu0 0.0
  %195 = vmatprep.subr.mxu0 0.0
  %196 = vmatpush1.msra.mxu0 0.0
  %197 = vmatprep.subr.mxu0 0.0
  %198 = vmatpush1.msra.mxu0 0.0
  %199 = vmatprep.subr.mxu0 0.0
  %200 = vmatpush1.msra.mxu0 0.0
  %201 = vmatprep.mubr.f32.mxu0 0.0
  %202 = vmatmul.mubr.f32.gmra.mrb[0].mxu0 %v45
  %v203 = vpop.f32.mrb[0].mxu0
  %v204 = vadd.f32 %v135, %v203
  %v205 = vpop.f32.mrb[0].mxu0
  %206 = vmatprep.mubr.f32.mxu0 0.0
  %207 = vmatmul.mubr.f32.gmra.mrb[0].mxu0 %v48
  %v208 = vpop.f32.mrb[0].mxu0
  %v209 = vadd.f32 %v135, %v208
  %v210 = vpop.f32.mrb[0].mxu0
  %211 = vdwg.mxu0
  %212 = vst.msk [vmem:[#allocation3] sm:$0xff] %vm125, %v204
  %213 = vst.msk [vmem:[#allocation3 + $0x8] sm:$0xff] %vm125, %v209
  %v214 = vld [vmem:[%s2] sm:$0xff]
  %v215 = vld [vmem:[%s2 + $0x8] sm:$0xff]
  %v216 = vld [vmem:[%s2 + $0x10] sm:$0xff]
  %v217 = vld [vmem:[%s2 + $0x18] sm:$0xff]
  %v218 = vld [vmem:[%s4] sm:$0x1]
  %v219 = vld [vmem:[%s6] sm:$0xff]
  %v220 = vld [vmem:[%s6 + $0x8] sm:$0xff]
  %v221 = vld [vmem:[%s6 + $0x10] sm:$0xff]
  %v222 = vld [vmem:[%s6 + $0x18] sm:$0xff]
  %v223 = vld [vmem:[%s8] sm:$0x1]
  %v224 = vld [vmem:[#allocation2] sm:$0x3]
  %v226 = vlaneseq
  %v227 = vshrl.u32 %v226, 7
  %v228 = vsub.s32 0, %v227
  %v229 = vrot.slane %v218, %v228
  %vm231 = vcmask 261120
  %v233 = vsel %vm231, 0.0, 0
  %235 = vmatprep.subr.mxu0 0.0
  %236 = vmatpush1.msra.mxu0 %v214
  %237 = vmatprep.subr.mxu0 0.0
  %238 = vmatpush1.msra.mxu0 %v215
  %239 = vmatprep.subr.mxu0 0.0
  %240 = vmatpush1.msra.mxu0 %v216
  %241 = vmatprep.subr.mxu0 0.0
  %242 = vmatpush1.msra.mxu0 %v217
  %243 = vmatprep.subr.mxu0 0.0
  %244 = vmatpush1.msra.mxu0 0.0
  %245 = vmatprep.subr.mxu0 0.0
  %246 = vmatpush1.msra.mxu0 0.0
  %247 = vmatprep.subr.mxu0 0.0
  %248 = vmatpush1.msra.mxu0 0.0
  %249 = vmatprep.subr.mxu0 0.0
  %250 = vmatpush1.msra.mxu0 0.0
  %251 = vmatprep.subr.mxu0 0.0
  %252 = vmatpush1.msra.mxu0 0.0
  %253 = vmatprep.subr.mxu0 0.0
  %254 = vmatpush1.msra.mxu0 0.0
  %255 = vmatprep.subr.mxu0 0.0
  %256 = vmatpush1.msra.mxu0 0.0
  %257 = vmatprep.subr.mxu0 0.0
  %258 = vmatpush1.msra.mxu0 0.0
  %259 = vmatprep.subr.mxu0 0.0
  %260 = vmatpush1.msra.mxu0 0.0
  %261 = vmatprep.subr.mxu0 0.0
  %262 = vmatpush1.msra.mxu0 0.0
  %263 = vmatprep.subr.mxu0 0.0
  %264 = vmatpush1.msra.mxu0 0.0
  %265 = vmatprep.subr.mxu0 0.0
  %266 = vmatpush1.msra.mxu0 0.0
  %267 = vmatprep.subr.mxu0 0.0
  %268 = vmatpush1.msra.mxu0 0.0
  %269 = vmatprep.subr.mxu0 0.0
  %270 = vmatpush1.msra.mxu0 0.0
  %271 = vmatprep.subr.mxu0 0.0
  %272 = vmatpush1.msra.mxu0 0.0
  %273 = vmatprep.subr.mxu0 0.0
  %274 = vmatpush1.msra.mxu0 0.0
  %275 = vmatprep.subr.mxu0 0.0
  %276 = vmatpush1.msra.mxu0 0.0
  %277 = vmatprep.subr.mxu0 0.0
  %278 = vmatpush1.msra.mxu0 0.0
  %279 = vmatprep.subr.mxu0 0.0
  %280 = vmatpush1.msra.mxu0 0.0
  %281 = vmatprep.subr.mxu0 0.0
  %282 = vmatpush1.msra.mxu0 0.0
  %283 = vmatprep.subr.mxu0 0.0
  %284 = vmatpush1.msra.mxu0 0.0
  %285 = vmatprep.subr.mxu0 0.0
  %286 = vmatpush1.msra.mxu0 0.0
  %287 = vmatprep.subr.mxu0 0.0
  %288 = vmatpush1.msra.mxu0 0.0
  %289 = vmatprep.subr.mxu0 0.0
  %290 = vmatpush1.msra.mxu0 0.0
  %291 = vmatprep.subr.mxu0 0.0
  %292 = vmatpush1.msra.mxu0 0.0
  %293 = vmatprep.subr.mxu0 0.0
  %294 = vmatpush1.msra.mxu0 0.0
  %295 = vmatprep.subr.mxu0 0.0
  %296 = vmatpush1.msra.mxu0 0.0
  %297 = vmatprep.subr.mxu0 0.0
  %298 = vmatpush1.msra.mxu0 0.0
  %299 = vmatprep.mubr.f32.mxu0 0.0
  %300 = vmatmul.mubr.f32.gmra.mrb[0].mxu0 %v233
  %v301 = vpop.f32.mrb[0].mxu0
  %v302 = vadd.f32 %v229, %v301
  %v303 = vpop.f32.mrb[0].mxu0
  %304 = vdwg.mxu0
  %v305 = vadd.f32 %v224, %v302
  %v306 = vxor.u32 %v305, 2147483648
  %v307 = vmul.f32 %v306, 1.442695
  %v308 = vpow.pop %v307
  %v309 = vadd.f32 %v308, 1.0
  %v310 = vrcp.pop %v309
  %v311 = vmul.f32 1.0, %v310
  %313 = vrot.lane.b32.xlu0 %v302, 64
  %v314 = vpop.permute.xlu0 %313
  %v316 = vmul.f32 %v311, %v314
  %318 = vrot.lane.b32.xlu0 %v316, 64
  %v319 = vpop.permute.xlu0 %318
  %v321 = vadd.f32 %v224, %v319
  %v322 = vtanh.pop %v321
  %v323 = vsub.f32 1.0, %v311
  %325 = vrot.lane.b32.xlu0 %v322, 96
  %v326 = vpop.permute.xlu0 %325
  %v328 = vmul.f32 %v323, %v326
  %v329 = vmul.f32 %v311, 0.0
  %v330 = vadd.f32 %v328, %v329
  %v331 = vld [vmem:[#allocation3 + $0xe] sm:$0x3]
  %v333 = vlaneseq
  %v334 = vshrl.u32 %v333, 7
  %v335 = vsub.s32 0, %v334
  %v336 = vrot.slane %v223, %v335
  %338 = vmatprep.subr.mxu0 0.0
  %339 = vmatpush1.msra.mxu0 %v219
  %340 = vmatprep.subr.mxu0 0.0
  %341 = vmatpush1.msra.mxu0 %v220
  %342 = vmatprep.subr.mxu0 0.0
  %343 = vmatpush1.msra.mxu0 %v221
  %344 = vmatprep.subr.mxu0 0.0
  %345 = vmatpush1.msra.mxu0 %v222
  %346 = vmatprep.subr.mxu0 0.0
  %347 = vmatpush1.msra.mxu0 0.0
  %348 = vmatprep.subr.mxu0 0.0
  %349 = vmatpush1.msra.mxu0 0.0
  %350 = vmatprep.subr.mxu0 0.0
  %351 = vmatpush1.msra.mxu0 0.0
  %352 = vmatprep.subr.mxu0 0.0
  %353 = vmatpush1.msra.mxu0 0.0
  %354 = vmatprep.subr.mxu0 0.0
  %355 = vmatpush1.msra.mxu0 0.0
  %356 = vmatprep.subr.mxu0 0.0
  %357 = vmatpush1.msra.mxu0 0.0
  %358 = vmatprep.subr.mxu0 0.0
  %359 = vmatpush1.msra.mxu0 0.0
  %360 = vmatprep.subr.mxu0 0.0
  %361 = vmatpush1.msra.mxu0 0.0
  %362 = vmatprep.subr.mxu0 0.0
  %363 = vmatpush1.msra.mxu0 0.0
  %364 = vmatprep.subr.mxu0 0.0
  %365 = vmatpush1.msra.mxu0 0.0
  %366 = vmatprep.subr.mxu0 0.0
  %367 = vmatpush1.msra.mxu0 0.0
  %368 = vmatprep.subr.mxu0 0.0
  %369 = vmatpush1.msra.mxu0 0.0
  %370 = vmatprep.subr.mxu0 0.0
  %371 = vmatpush1.msra.mxu0 0.0
  %372 = vmatprep.subr.mxu0 0.0
  %373 = vmatpush1.msra.mxu0 0.0
  %374 = vmatprep.subr.mxu0 0.0
  %375 = vmatpush1.msra.mxu0 0.0
  %376 = vmatprep.subr.mxu0 0.0
  %377 = vmatpush1.msra.mxu0 0.0
  %378 = vmatprep.subr.mxu0 0.0
  %379 = vmatpush1.msra.mxu0 0.0
  %380 = vmatprep.subr.mxu0 0.0
  %381 = vmatpush1.msra.mxu0 0.0
  %382 = vmatprep.subr.mxu0 0.0
  %383 = vmatpush1.msra.mxu0 0.0
  %384 = vmatprep.subr.mxu0 0.0
  %385 = vmatpush1.msra.mxu0 0.0
  %386 = vmatprep.subr.mxu0 0.0
  %387 = vmatpush1.msra.mxu0 0.0
  %388 = vmatprep.subr.mxu0 0.0
  %389 = vmatpush1.msra.mxu0 0.0
  %390 = vmatprep.subr.mxu0 0.0
  %391 = vmatpush1.msra.mxu0 0.0
  %392 = vmatprep.subr.mxu0 0.0
  %393 = vmatpush1.msra.mxu0 0.0
  %394 = vmatprep.subr.mxu0 0.0
  %395 = vmatpush1.msra.mxu0 0.0
  %396 = vmatprep.subr.mxu0 0.0
  %397 = vmatpush1.msra.mxu0 0.0
  %398 = vmatprep.subr.mxu0 0.0
  %399 = vmatpush1.msra.mxu0 0.0
  %400 = vmatprep.subr.mxu0 0.0
  %401 = vmatpush1.msra.mxu0 0.0
  %402 = vmatprep.mubr.f32.mxu0 0.0
  %403 = vmatmul.mubr.f32.gmra.mrb[0].mxu0 %v233
  %v404 = vpop.f32.mrb[0].mxu0
  %v405 = vadd.f32 %v336, %v404
  %v406 = vpop.f32.mrb[0].mxu0
  %407 = vdwg.mxu0
  %v408 = vadd.f32 %v331, %v405
  %v409 = vxor.u32 %v408, 2147483648
  %v410 = vmul.f32 %v409, 1.442695
  %v411 = vpow.pop %v410
  %v412 = vadd.f32 %v411, 1.0
  %v413 = vrcp.pop %v412
  %v414 = vmul.f32 1.0, %v413
  %416 = vrot.lane.b32.xlu0 %v405, 64
  %v417 = vpop.permute.xlu0 %416
  %v419 = vmul.f32 %v414, %v417
  %421 = vrot.lane.b32.xlu0 %v419, 64
  %v422 = vpop.permute.xlu0 %421
  %v424 = vadd.f32 %v331, %v422
  %v425 = vtanh.pop %v424
  %v426 = vsub.f32 1.0, %v414
  %428 = vrot.lane.b32.xlu0 %v425, 96
  %v429 = vpop.permute.xlu0 %428
  %v431 = vmul.f32 %v426, %v429
  %v432 = vmul.f32 %v414, 0.0
  %v433 = vadd.f32 %v431, %v432
  %435 = vrot.lane.b32.xlu0 %v330, 96
  %v436 = vpop.permute.xlu0 %435
  %vm438 = vcmask 254976
  %439 = vst.msk [vmem:[%s9] sm:$0x3] %vm438, %v436
  %s440 = scalar_lea.vmem %s9, 14
  %vm441 = vcmask 517376
  %442 = vst.msk [vmem:[%s440] sm:$0x3] %vm441, %v433
  %v443 = vld [vmem:[#allocation2 + $0x2] sm:$0x3]
  %v444 = vsel %vm231, %v436, 0
  %446 = vmatprep.subr.mxu0 0.0
  %447 = vmatpush1.msra.mxu0 %v214
  %448 = vmatprep.subr.mxu0 0.0
  %449 = vmatpush1.msra.mxu0 %v215
  %450 = vmatprep.subr.mxu0 0.0
  %451 = vmatpush1.msra.mxu0 %v216
  %452 = vmatprep.subr.mxu0 0.0
  %453 = vmatpush1.msra.mxu0 %v217
  %454 = vmatprep.subr.mxu0 0.0
  %455 = vmatpush1.msra.mxu0 0.0
  %456 = vmatprep.subr.mxu0 0.0
  %457 = vmatpush1.msra.mxu0 0.0
  %458 = vmatprep.subr.mxu0 0.0
  %459 = vmatpush1.msra.mxu0 0.0
  %460 = vmatprep.subr.mxu0 0.0
  %461 = vmatpush1.msra.mxu0 0.0
  %462 = vmatprep.subr.mxu0 0.0
  %463 = vmatpush1.msra.mxu0 0.0
  %464 = vmatprep.subr.mxu0 0.0
  %465 = vmatpush1.msra.mxu0 0.0
  %466 = vmatprep.subr.mxu0 0.0
  %467 = vmatpush1.msra.mxu0 0.0
  %468 = vmatprep.subr.mxu0 0.0
  %469 = vmatpush1.msra.mxu0 0.0
  %470 = vmatprep.subr.mxu0 0.0
  %471 = vmatpush1.msra.mxu0 0.0
  %472 = vmatprep.subr.mxu0 0.0
  %473 = vmatpush1.msra.mxu0 0.0
  %474 = vmatprep.subr.mxu0 0.0
  %475 = vmatpush1.msra.mxu0 0.0
  %476 = vmatprep.subr.mxu0 0.0
  %477 = vmatpush1.msra.mxu0 0.0
  %478 = vmatprep.subr.mxu0 0.0
  %479 = vmatpush1.msra.mxu0 0.0
  %480 = vmatprep.subr.mxu0 0.0
  %481 = vmatpush1.msra.mxu0 0.0
  %482 = vmatprep.subr.mxu0 0.0
  %483 = vmatpush1.msra.mxu0 0.0
  %484 = vmatprep.subr.mxu0 0.0
  %485 = vmatpush1.msra.mxu0 0.0
  %486 = vmatprep.subr.mxu0 0.0
  %487 = vmatpush1.msra.mxu0 0.0
  %488 = vmatprep.subr.mxu0 0.0
  %489 = vmatpush1.msra.mxu0 0.0
  %490 = vmatprep.subr.mxu0 0.0
  %491 = vmatpush1.msra.mxu0 0.0
  %492 = vmatprep.subr.mxu0 0.0
  %493 = vmatpush1.msra.mxu0 0.0
  %494 = vmatprep.subr.mxu0 0.0
  %495 = vmatpush1.msra.mxu0 0.0
  %496 = vmatprep.subr.mxu0 0.0
  %497 = vmatpush1.msra.mxu0 0.0
  %498 = vmatprep.subr.mxu0 0.0
  %499 = vmatpush1.msra.mxu0 0.0
  %500 = vmatprep.subr.mxu0 0.0
  %501 = vmatpush1.msra.mxu0 0.0
  %502 = vmatprep.subr.mxu0 0.0
  %503 = vmatpush1.msra.mxu0 0.0
  %504 = vmatprep.subr.mxu0 0.0
  %505 = vmatpush1.msra.mxu0 0.0
  %506 = vmatprep.subr.mxu0 0.0
  %507 = vmatpush1.msra.mxu0 0.0
  %508 = vmatprep.subr.mxu0 0.0
  %509 = vmatpush1.msra.mxu0 0.0
  %510 = vmatprep.mubr.f32.mxu0 0.0
  %511 = vmatmul.mubr.f32.gmra.mrb[0].mxu0 %v444
  %v512 = vpop.f32.mrb[0].mxu0
  %v513 = vadd.f32 %v229, %v512
  %v514 = vpop.f32.mrb[0].mxu0
  %515 = vdwg.mxu0
  %v516 = vadd.f32 %v443, %v513
  %v517 = vxor.u32 %v516, 2147483648
  %v518 = vmul.f32 %v517, 1.442695
  %v519 = vpow.pop %v518
  %v520 = vadd.f32 %v519, 1.0
  %v521 = vrcp.pop %v520
  %v522 = vmul.f32 1.0, %v521
  %524 = vrot.lane.b32.xlu0 %v513, 64
  %v525 = vpop.permute.xlu0 %524
  %v527 = vmul.f32 %v522, %v525
  %529 = vrot.lane.b32.xlu0 %v527, 64
  %v530 = vpop.permute.xlu0 %529
  %v532 = vadd.f32 %v443, %v530
  %v533 = vtanh.pop %v532
  %v534 = vsub.f32 1.0, %v522
  %536 = vrot.lane.b32.xlu0 %v533, 96
  %v537 = vpop.permute.xlu0 %536
  %v539 = vmul.f32 %v534, %v537
  %v540 = vmul.f32 %v522, %v330
  %v541 = vadd.f32 %v539, %v540
  %v542 = vld [vmem:[#allocation3 + $0xc] sm:$0x3]
  %544 = vrot.lane.b32.xlu0 %v433, 96
  %v545 = vpop.permute.xlu0 %544
  %v546 = vsel %vm231, %v545, 0
  %548 = vmatprep.subr.mxu0 0.0
  %549 = vmatpush1.msra.mxu0 %v219
  %550 = vmatprep.subr.mxu0 0.0
  %551 = vmatpush1.msra.mxu0 %v220
  %552 = vmatprep.subr.mxu0 0.0
  %553 = vmatpush1.msra.mxu0 %v221
  %554 = vmatprep.subr.mxu0 0.0
  %555 = vmatpush1.msra.mxu0 %v222
  %556 = vmatprep.subr.mxu0 0.0
  %557 = vmatpush1.msra.mxu0 0.0
  %558 = vmatprep.subr.mxu0 0.0
  %559 = vmatpush1.msra.mxu0 0.0
  %560 = vmatprep.subr.mxu0 0.0
  %561 = vmatpush1.msra.mxu0 0.0
  %562 = vmatprep.subr.mxu0 0.0
  %563 = vmatpush1.msra.mxu0 0.0
  %564 = vmatprep.subr.mxu0 0.0
  %565 = vmatpush1.msra.mxu0 0.0
  %566 = vmatprep.subr.mxu0 0.0
  %567 = vmatpush1.msra.mxu0 0.0
  %568 = vmatprep.subr.mxu0 0.0
  %569 = vmatpush1.msra.mxu0 0.0
  %570 = vmatprep.subr.mxu0 0.0
  %571 = vmatpush1.msra.mxu0 0.0
  %572 = vmatprep.subr.mxu0 0.0
  %573 = vmatpush1.msra.mxu0 0.0
  %574 = vmatprep.subr.mxu0 0.0
  %575 = vmatpush1.msra.mxu0 0.0
  %576 = vmatprep.subr.mxu0 0.0
  %577 = vmatpush1.msra.mxu0 0.0
  %578 = vmatprep.subr.mxu0 0.0
  %579 = vmatpush1.msra.mxu0 0.0
  %580 = vmatprep.subr.mxu0 0.0
  %581 = vmatpush1.msra.mxu0 0.0
  %582 = vmatprep.subr.mxu0 0.0
  %583 = vmatpush1.msra.mxu0 0.0
  %584 = vmatprep.subr.mxu0 0.0
  %585 = vmatpush1.msra.mxu0 0.0
  %586 = vmatprep.subr.mxu0 0.0
  %587 = vmatpush1.msra.mxu0 0.0
  %588 = vmatprep.subr.mxu0 0.0
  %589 = vmatpush1.msra.mxu0 0.0
  %590 = vmatprep.subr.mxu0 0.0
  %591 = vmatpush1.msra.mxu0 0.0
  %592 = vmatprep.subr.mxu0 0.0
  %593 = vmatpush1.msra.mxu0 0.0
  %594 = vmatprep.subr.mxu0 0.0
  %595 = vmatpush1.msra.mxu0 0.0
  %596 = vmatprep.subr.mxu0 0.0
  %597 = vmatpush1.msra.mxu0 0.0
  %598 = vmatprep.subr.mxu0 0.0
  %599 = vmatpush1.msra.mxu0 0.0
  %600 = vmatprep.subr.mxu0 0.0
  %601 = vmatpush1.msra.mxu0 0.0
  %602 = vmatprep.subr.mxu0 0.0
  %603 = vmatpush1.msra.mxu0 0.0
  %604 = vmatprep.subr.mxu0 0.0
  %605 = vmatpush1.msra.mxu0 0.0
  %606 = vmatprep.subr.mxu0 0.0
  %607 = vmatpush1.msra.mxu0 0.0
  %608 = vmatprep.subr.mxu0 0.0
  %609 = vmatpush1.msra.mxu0 0.0
  %610 = vmatprep.subr.mxu0 0.0
  %611 = vmatpush1.msra.mxu0 0.0
  %612 = vmatprep.mubr.f32.mxu0 0.0
  %613 = vmatmul.mubr.f32.gmra.mrb[0].mxu0 %v546
  %v614 = vpop.f32.mrb[0].mxu0
  %v615 = vadd.f32 %v336, %v614
  %v616 = vpop.f32.mrb[0].mxu0
  %617 = vdwg.mxu0
  %v618 = vadd.f32 %v542, %v615
  %v619 = vxor.u32 %v618, 2147483648
  %v620 = vmul.f32 %v619, 1.442695
  %v621 = vpow.pop %v620
  %v622 = vadd.f32 %v621, 1.0
  %v623 = vrcp.pop %v622
  %v624 = vmul.f32 1.0, %v623
  %626 = vrot.lane.b32.xlu0 %v615, 64
  %v627 = vpop.permute.xlu0 %626
  %v629 = vmul.f32 %v624, %v627
  %631 = vrot.lane.b32.xlu0 %v629, 64
  %v632 = vpop.permute.xlu0 %631
  %v634 = vadd.f32 %v542, %v632
  %v635 = vtanh.pop %v634
  %v636 = vsub.f32 1.0, %v624
  %638 = vrot.lane.b32.xlu0 %v635, 96
  %v639 = vpop.permute.xlu0 %638
  %v641 = vmul.f32 %v636, %v639
  %v642 = vmul.f32 %v624, %v433
  %v643 = vadd.f32 %v641, %v642
  %645 = vrot.lane.b32.xlu0 %v541, 96
  %v646 = vpop.permute.xlu0 %645
  %s648 = scalar_lea.vmem %s9, 2
  %649 = vst.msk [vmem:[%s648] sm:$0x3] %vm438, %v646
  %s650 = scalar_lea.vmem %s9, 12
  %651 = vst.msk [vmem:[%s650] sm:$0x3] %vm441, %v643
  %v652 = vld [vmem:[#allocation2 + $0x4] sm:$0x3]
  %v653 = vsel %vm231, %v646, 0
  %655 = vmatprep.subr.mxu0 0.0
  %656 = vmatpush1.msra.mxu0 %v214
  %657 = vmatprep.subr.mxu0 0.0
  %658 = vmatpush1.msra.mxu0 %v215
  %659 = vmatprep.subr.mxu0 0.0
  %660 = vmatpush1.msra.mxu0 %v216
  %661 = vmatprep.subr.mxu0 0.0
  %662 = vmatpush1.msra.mxu0 %v217
  %663 = vmatprep.subr.mxu0 0.0
  %664 = vmatpush1.msra.mxu0 0.0
  %665 = vmatprep.subr.mxu0 0.0
  %666 = vmatpush1.msra.mxu0 0.0
  %667 = vmatprep.subr.mxu0 0.0
  %668 = vmatpush1.msra.mxu0 0.0
  %669 = vmatprep.subr.mxu0 0.0
  %670 = vmatpush1.msra.mxu0 0.0
  %671 = vmatprep.subr.mxu0 0.0
  %672 = vmatpush1.msra.mxu0 0.0
  %673 = vmatprep.subr.mxu0 0.0
  %674 = vmatpush1.msra.mxu0 0.0
  %675 = vmatprep.subr.mxu0 0.0
  %676 = vmatpush1.msra.mxu0 0.0
  %677 = vmatprep.subr.mxu0 0.0
  %678 = vmatpush1.msra.mxu0 0.0
  %679 = vmatprep.subr.mxu0 0.0
  %680 = vmatpush1.msra.mxu0 0.0
  %681 = vmatprep.subr.mxu0 0.0
  %682 = vmatpush1.msra.mxu0 0.0
  %683 = vmatprep.subr.mxu0 0.0
  %684 = vmatpush1.msra.mxu0 0.0
  %685 = vmatprep.subr.mxu0 0.0
  %686 = vmatpush1.msra.mxu0 0.0
  %687 = vmatprep.subr.mxu0 0.0
  %688 = vmatpush1.msra.mxu0 0.0
  %689 = vmatprep.subr.mxu0 0.0
  %690 = vmatpush1.msra.mxu0 0.0
  %691 = vmatprep.subr.mxu0 0.0
  %692 = vmatpush1.msra.mxu0 0.0
  %693 = vmatprep.subr.mxu0 0.0
  %694 = vmatpush1.msra.mxu0 0.0
  %695 = vmatprep.subr.mxu0 0.0
  %696 = vmatpush1.msra.mxu0 0.0
  %697 = vmatprep.subr.mxu0 0.0
  %698 = vmatpush1.msra.mxu0 0.0
  %699 = vmatprep.subr.mxu0 0.0
  %700 = vmatpush1.msra.mxu0 0.0
  %701 = vmatprep.subr.mxu0 0.0
  %702 = vmatpush1.msra.mxu0 0.0
  %703 = vmatprep.subr.mxu0 0.0
  %704 = vmatpush1.msra.mxu0 0.0
  %705 = vmatprep.subr.mxu0 0.0
  %706 = vmatpush1.msra.mxu0 0.0
  %707 = vmatprep.subr.mxu0 0.0
  %708 = vmatpush1.msra.mxu0 0.0
  %709 = vmatprep.subr.mxu0 0.0
  %710 = vmatpush1.msra.mxu0 0.0
  %711 = vmatprep.subr.mxu0 0.0
  %712 = vmatpush1.msra.mxu0 0.0
  %713 = vmatprep.subr.mxu0 0.0
  %714 = vmatpush1.msra.mxu0 0.0
  %715 = vmatprep.subr.mxu0 0.0
  %716 = vmatpush1.msra.mxu0 0.0
  %717 = vmatprep.subr.mxu0 0.0
  %718 = vmatpush1.msra.mxu0 0.0
  %719 = vmatprep.mubr.f32.mxu0 0.0
  %720 = vmatmul.mubr.f32.gmra.mrb[0].mxu0 %v653
  %v721 = vpop.f32.mrb[0].mxu0
  %v722 = vadd.f32 %v229, %v721
  %v723 = vpop.f32.mrb[0].mxu0
  %724 = vdwg.mxu0
  %v725 = vadd.f32 %v652, %v722
  %v726 = vxor.u32 %v725, 2147483648
  %v727 = vmul.f32 %v726, 1.442695
  %v728 = vpow.pop %v727
  %v729 = vadd.f32 %v728, 1.0
  %v730 = vrcp.pop %v729
  %v731 = vmul.f32 1.0, %v730
  %733 = vrot.lane.b32.xlu0 %v722, 64
  %v734 = vpop.permute.xlu0 %733
  %v736 = vmul.f32 %v731, %v734
  %738 = vrot.lane.b32.xlu0 %v736, 64
  %v739 = vpop.permute.xlu0 %738
  %v741 = vadd.f32 %v652, %v739
  %v742 = vtanh.pop %v741
  %v743 = vsub.f32 1.0, %v731
  %745 = vrot.lane.b32.xlu0 %v742, 96
  %v746 = vpop.permute.xlu0 %745
  %v748 = vmul.f32 %v743, %v746
  %v749 = vmul.f32 %v731, %v541
  %v750 = vadd.f32 %v748, %v749
  %v751 = vld [vmem:[#allocation3 + $0xa] sm:$0x3]
  %753 = vrot.lane.b32.xlu0 %v643, 96
  %v754 = vpop.permute.xlu0 %753
  %v755 = vsel %vm231, %v754, 0
  %757 = vmatprep.subr.mxu0 0.0
  %758 = vmatpush1.msra.mxu0 %v219
  %759 = vmatprep.subr.mxu0 0.0
  %760 = vmatpush1.msra.mxu0 %v220
  %761 = vmatprep.subr.mxu0 0.0
  %762 = vmatpush1.msra.mxu0 %v221
  %763 = vmatprep.subr.mxu0 0.0
  %764 = vmatpush1.msra.mxu0 %v222
  %765 = vmatprep.subr.mxu0 0.0
  %766 = vmatpush1.msra.mxu0 0.0
  %767 = vmatprep.subr.mxu0 0.0
  %768 = vmatpush1.msra.mxu0 0.0
  %769 = vmatprep.subr.mxu0 0.0
  %770 = vmatpush1.msra.mxu0 0.0
  %771 = vmatprep.subr.mxu0 0.0
  %772 = vmatpush1.msra.mxu0 0.0
  %773 = vmatprep.subr.mxu0 0.0
  %774 = vmatpush1.msra.mxu0 0.0
  %775 = vmatprep.subr.mxu0 0.0
  %776 = vmatpush1.msra.mxu0 0.0
  %777 = vmatprep.subr.mxu0 0.0
  %778 = vmatpush1.msra.mxu0 0.0
  %779 = vmatprep.subr.mxu0 0.0
  %780 = vmatpush1.msra.mxu0 0.0
  %781 = vmatprep.subr.mxu0 0.0
  %782 = vmatpush1.msra.mxu0 0.0
  %783 = vmatprep.subr.mxu0 0.0
  %784 = vmatpush1.msra.mxu0 0.0
  %785 = vmatprep.subr.mxu0 0.0
  %786 = vmatpush1.msra.mxu0 0.0
  %787 = vmatprep.subr.mxu0 0.0
  %788 = vmatpush1.msra.mxu0 0.0
  %789 = vmatprep.subr.mxu0 0.0
  %790 = vmatpush1.msra.mxu0 0.0
  %791 = vmatprep.subr.mxu0 0.0
  %792 = vmatpush1.msra.mxu0 0.0
  %793 = vmatprep.subr.mxu0 0.0
  %794 = vmatpush1.msra.mxu0 0.0
  %795 = vmatprep.subr.mxu0 0.0
  %796 = vmatpush1.msra.mxu0 0.0
  %797 = vmatprep.subr.mxu0 0.0
  %798 = vmatpush1.msra.mxu0 0.0
  %799 = vmatprep.subr.mxu0 0.0
  %800 = vmatpush1.msra.mxu0 0.0
  %801 = vmatprep.subr.mxu0 0.0
  %802 = vmatpush1.msra.mxu0 0.0
  %803 = vmatprep.subr.mxu0 0.0
  %804 = vmatpush1.msra.mxu0 0.0
  %805 = vmatprep.subr.mxu0 0.0
  %806 = vmatpush1.msra.mxu0 0.0
  %807 = vmatprep.subr.mxu0 0.0
  %808 = vmatpush1.msra.mxu0 0.0
  %809 = vmatprep.subr.mxu0 0.0
  %810 = vmatpush1.msra.mxu0 0.0
  %811 = vmatprep.subr.mxu0 0.0
  %812 = vmatpush1.msra.mxu0 0.0
  %813 = vmatprep.subr.mxu0 0.0
  %814 = vmatpush1.msra.mxu0 0.0
  %815 = vmatprep.subr.mxu0 0.0
  %816 = vmatpush1.msra.mxu0 0.0
  %817 = vmatprep.subr.mxu0 0.0
  %818 = vmatpush1.msra.mxu0 0.0
  %819 = vmatprep.subr.mxu0 0.0
  %820 = vmatpush1.msra.mxu0 0.0
  %821 = vmatprep.mubr.f32.mxu0 0.0
  %822 = vmatmul.mubr.f32.gmra.mrb[0].mxu0 %v755
  %v823 = vpop.f32.mrb[0].mxu0
  %v824 = vadd.f32 %v336, %v823
  %v825 = vpop.f32.mrb[0].mxu0
  %826 = vdwg.mxu0
  %v827 = vadd.f32 %v751, %v824
  %v828 = vxor.u32 %v827, 2147483648
  %v829 = vmul.f32 %v828, 1.442695
  %v830 = vpow.pop %v829
  %v831 = vadd.f32 %v830, 1.0
  %v832 = vrcp.pop %v831
  %v833 = vmul.f32 1.0, %v832
  %835 = vrot.lane.b32.xlu0 %v824, 64
  %v836 = vpop.permute.xlu0 %835
  %v838 = vmul.f32 %v833, %v836
  %840 = vrot.lane.b32.xlu0 %v838, 64
  %v841 = vpop.permute.xlu0 %840
  %v843 = vadd.f32 %v751, %v841
  %v844 = vtanh.pop %v843
  %v845 = vsub.f32 1.0, %v833
  %847 = vrot.lane.b32.xlu0 %v844, 96
  %v848 = vpop.permute.xlu0 %847
  %v850 = vmul.f32 %v845, %v848
  %v851 = vmul.f32 %v833, %v643
  %v852 = vadd.f32 %v850, %v851
  %854 = vrot.lane.b32.xlu0 %v750, 96
  %v855 = vpop.permute.xlu0 %854
  %s857 = scalar_lea.vmem %s9, 4
  %858 = vst.msk [vmem:[%s857] sm:$0x3] %vm438, %v855
  %s859 = scalar_lea.vmem %s9, 10
  %860 = vst.msk [vmem:[%s859] sm:$0x3] %vm441, %v852
  %v861 = vld [vmem:[#allocation2 + $0x6] sm:$0x3]
  %v862 = vsel %vm231, %v855, 0
  %864 = vmatprep.subr.mxu0 0.0
  %865 = vmatpush1.msra.mxu0 %v214
  %866 = vmatprep.subr.mxu0 0.0
  %867 = vmatpush1.msra.mxu0 %v215
  %868 = vmatprep.subr.mxu0 0.0
  %869 = vmatpush1.msra.mxu0 %v216
  %870 = vmatprep.subr.mxu0 0.0
  %871 = vmatpush1.msra.mxu0 %v217
  %872 = vmatprep.subr.mxu0 0.0
  %873 = vmatpush1.msra.mxu0 0.0
  %874 = vmatprep.subr.mxu0 0.0
  %875 = vmatpush1.msra.mxu0 0.0
  %876 = vmatprep.subr.mxu0 0.0
  %877 = vmatpush1.msra.mxu0 0.0
  %878 = vmatprep.subr.mxu0 0.0
  %879 = vmatpush1.msra.mxu0 0.0
  %880 = vmatprep.subr.mxu0 0.0
  %881 = vmatpush1.msra.mxu0 0.0
  %882 = vmatprep.subr.mxu0 0.0
  %883 = vmatpush1.msra.mxu0 0.0
  %884 = vmatprep.subr.mxu0 0.0
  %885 = vmatpush1.msra.mxu0 0.0
  %886 = vmatprep.subr.mxu0 0.0
  %887 = vmatpush1.msra.mxu0 0.0
  %888 = vmatprep.subr.mxu0 0.0
  %889 = vmatpush1.msra.mxu0 0.0
  %890 = vmatprep.subr.mxu0 0.0
  %891 = vmatpush1.msra.mxu0 0.0
  %892 = vmatprep.subr.mxu0 0.0
  %893 = vmatpush1.msra.mxu0 0.0
  %894 = vmatprep.subr.mxu0 0.0
  %895 = vmatpush1.msra.mxu0 0.0
  %896 = vmatprep.subr.mxu0 0.0
  %897 = vmatpush1.msra.mxu0 0.0
  %898 = vmatprep.subr.mxu0 0.0
  %899 = vmatpush1.msra.mxu0 0.0
  %900 = vmatprep.subr.mxu0 0.0
  %901 = vmatpush1.msra.mxu0 0.0
  %902 = vmatprep.subr.mxu0 0.0
  %903 = vmatpush1.msra.mxu0 0.0
  %904 = vmatprep.subr.mxu0 0.0
  %905 = vmatpush1.msra.mxu0 0.0
  %906 = vmatprep.subr.mxu0 0.0
  %907 = vmatpush1.msra.mxu0 0.0
  %908 = vmatprep.subr.mxu0 0.0
  %909 = vmatpush1.msra.mxu0 0.0
  %910 = vmatprep.subr.mxu0 0.0
  %911 = vmatpush1.msra.mxu0 0.0
  %912 = vmatprep.subr.mxu0 0.0
  %913 = vmatpush1.msra.mxu0 0.0
  %914 = vmatprep.subr.mxu0 0.0
  %915 = vmatpush1.msra.mxu0 0.0
  %916 = vmatprep.subr.mxu0 0.0
  %917 = vmatpush1.msra.mxu0 0.0
  %918 = vmatprep.subr.mxu0 0.0
  %919 = vmatpush1.msra.mxu0 0.0
  %920 = vmatprep.subr.mxu0 0.0
  %921 = vmatpush1.msra.mxu0 0.0
  %922 = vmatprep.subr.mxu0 0.0
  %923 = vmatpush1.msra.mxu0 0.0
  %924 = vmatprep.subr.mxu0 0.0
  %925 = vmatpush1.msra.mxu0 0.0
  %926 = vmatprep.subr.mxu0 0.0
  %927 = vmatpush1.msra.mxu0 0.0
  %928 = vmatprep.mubr.f32.mxu0 0.0
  %929 = vmatmul.mubr.f32.gmra.mrb[0].mxu0 %v862
  %v930 = vpop.f32.mrb[0].mxu0
  %v931 = vadd.f32 %v229, %v930
  %v932 = vpop.f32.mrb[0].mxu0
  %933 = vdwg.mxu0
  %v934 = vadd.f32 %v861, %v931
  %v935 = vxor.u32 %v934, 2147483648
  %v936 = vmul.f32 %v935, 1.442695
  %v937 = vpow.pop %v936
  %v938 = vadd.f32 %v937, 1.0
  %v939 = vrcp.pop %v938
  %v940 = vmul.f32 1.0, %v939
  %942 = vrot.lane.b32.xlu0 %v931, 64
  %v943 = vpop.permute.xlu0 %942
  %v945 = vmul.f32 %v940, %v943
  %947 = vrot.lane.b32.xlu0 %v945, 64
  %v948 = vpop.permute.xlu0 %947
  %v950 = vadd.f32 %v861, %v948
  %v951 = vtanh.pop %v950
  %v952 = vsub.f32 1.0, %v940
  %954 = vrot.lane.b32.xlu0 %v951, 96
  %v955 = vpop.permute.xlu0 %954
  %v957 = vmul.f32 %v952, %v955
  %v958 = vmul.f32 %v940, %v750
  %v959 = vadd.f32 %v957, %v958
  %v960 = vld [vmem:[#allocation3 + $0x8] sm:$0x3]
  %962 = vrot.lane.b32.xlu0 %v852, 96
  %v963 = vpop.permute.xlu0 %962
  %v964 = vsel %vm231, %v963, 0
  %966 = vmatprep.subr.mxu0 0.0
  %967 = vmatpush1.msra.mxu0 %v219
  %968 = vmatprep.subr.mxu0 0.0
  %969 = vmatpush1.msra.mxu0 %v220
  %970 = vmatprep.subr.mxu0 0.0
  %971 = vmatpush1.msra.mxu0 %v221
  %972 = vmatprep.subr.mxu0 0.0
  %973 = vmatpush1.msra.mxu0 %v222
  %974 = vmatprep.subr.mxu0 0.0
  %975 = vmatpush1.msra.mxu0 0.0
  %976 = vmatprep.subr.mxu0 0.0
  %977 = vmatpush1.msra.mxu0 0.0
  %978 = vmatprep.subr.mxu0 0.0
  %979 = vmatpush1.msra.mxu0 0.0
  %980 = vmatprep.subr.mxu0 0.0
  %981 = vmatpush1.msra.mxu0 0.0
  %982 = vmatprep.subr.mxu0 0.0
  %983 = vmatpush1.msra.mxu0 0.0
  %984 = vmatprep.subr.mxu0 0.0
  %985 = vmatpush1.msra.mxu0 0.0
  %986 = vmatprep.subr.mxu0 0.0
  %987 = vmatpush1.msra.mxu0 0.0
  %988 = vmatprep.subr.mxu0 0.0
  %989 = vmatpush1.msra.mxu0 0.0
  %990 = vmatprep.subr.mxu0 0.0
  %991 = vmatpush1.msra.mxu0 0.0
  %992 = vmatprep.subr.mxu0 0.0
  %993 = vmatpush1.msra.mxu0 0.0
  %994 = vmatprep.subr.mxu0 0.0
  %995 = vmatpush1.msra.mxu0 0.0
  %996 = vmatprep.subr.mxu0 0.0
  %997 = vmatpush1.msra.mxu0 0.0
  %998 = vmatprep.subr.mxu0 0.0
  %999 = vmatpush1.msra.mxu0 0.0
  %1000 = vmatprep.subr.mxu0 0.0
  %1001 = vmatpush1.msra.mxu0 0.0
  %1002 = vmatprep.subr.mxu0 0.0
  %1003 = vmatpush1.msra.mxu0 0.0
  %1004 = vmatprep.subr.mxu0 0.0
  %1005 = vmatpush1.msra.mxu0 0.0
  %1006 = vmatprep.subr.mxu0 0.0
  %1007 = vmatpush1.msra.mxu0 0.0
  %1008 = vmatprep.subr.mxu0 0.0
  %1009 = vmatpush1.msra.mxu0 0.0
  %1010 = vmatprep.subr.mxu0 0.0
  %1011 = vmatpush1.msra.mxu0 0.0
  %1012 = vmatprep.subr.mxu0 0.0
  %1013 = vmatpush1.msra.mxu0 0.0
  %1014 = vmatprep.subr.mxu0 0.0
  %1015 = vmatpush1.msra.mxu0 0.0
  %1016 = vmatprep.subr.mxu0 0.0
  %1017 = vmatpush1.msra.mxu0 0.0
  %1018 = vmatprep.subr.mxu0 0.0
  %1019 = vmatpush1.msra.mxu0 0.0
  %1020 = vmatprep.subr.mxu0 0.0
  %1021 = vmatpush1.msra.mxu0 0.0
  %1022 = vmatprep.subr.mxu0 0.0
  %1023 = vmatpush1.msra.mxu0 0.0
  %1024 = vmatprep.subr.mxu0 0.0
  %1025 = vmatpush1.msra.mxu0 0.0
  %1026 = vmatprep.subr.mxu0 0.0
  %1027 = vmatpush1.msra.mxu0 0.0
  %1028 = vmatprep.subr.mxu0 0.0
  %1029 = vmatpush1.msra.mxu0 0.0
  %1030 = vmatprep.mubr.f32.mxu0 0.0
  %1031 = vmatmul.mubr.f32.gmra.mrb[0].mxu0 %v964
  %v1032 = vpop.f32.mrb[0].mxu0
  %v1033 = vadd.f32 %v336, %v1032
  %v1034 = vpop.f32.mrb[0].mxu0
  %1035 = vdwg.mxu0
  %v1036 = vadd.f32 %v960, %v1033
  %v1037 = vxor.u32 %v1036, 2147483648
  %v1038 = vmul.f32 %v1037, 1.442695
  %v1039 = vpow.pop %v1038
  %v1040 = vadd.f32 %v1039, 1.0
  %v1041 = vrcp.pop %v1040
  %v1042 = vmul.f32 1.0, %v1041
  %1044 = vrot.lane.b32.xlu0 %v1033, 64
  %v1045 = vpop.permute.xlu0 %1044
  %v1047 = vmul.f32 %v1042, %v1045
  %1049 = vrot.lane.b32.xlu0 %v1047, 64
  %v1050 = vpop.permute.xlu0 %1049
  %v1052 = vadd.f32 %v960, %v1050
  %v1053 = vtanh.pop %v1052
  %v1054 = vsub.f32 1.0, %v1042
  %1056 = vrot.lane.b32.xlu0 %v1053, 96
  %v1057 = vpop.permute.xlu0 %1056
  %v1059 = vmul.f32 %v1054, %v1057
  %v1060 = vmul.f32 %v1042, %v852
  %v1061 = vadd.f32 %v1059, %v1060
  %1063 = vrot.lane.b32.xlu0 %v959, 96
  %v1064 = vpop.permute.xlu0 %1063
  %s1066 = scalar_lea.vmem %s9, 6
  %1067 = vst.msk [vmem:[%s1066] sm:$0x3] %vm438, %v1064
  %s1068 = scalar_lea.vmem %s9, 8
  %1069 = vst.msk [vmem:[%s1068] sm:$0x3] %vm441, %v1061
  %v1070 = vld [vmem:[#allocation2 + $0x8] sm:$0x3]
  %v1071 = vsel %vm231, %v1064, 0
  %1073 = vmatprep.subr.mxu0 0.0
  %1074 = vmatpush1.msra.mxu0 %v214
  %1075 = vmatprep.subr.mxu0 0.0
  %1076 = vmatpush1.msra.mxu0 %v215
  %1077 = vmatprep.subr.mxu0 0.0
  %1078 = vmatpush1.msra.mxu0 %v216
  %1079 = vmatprep.subr.mxu0 0.0
  %1080 = vmatpush1.msra.mxu0 %v217
  %1081 = vmatprep.subr.mxu0 0.0
  %1082 = vmatpush1.msra.mxu0 0.0
  %1083 = vmatprep.subr.mxu0 0.0
  %1084 = vmatpush1.msra.mxu0 0.0
  %1085 = vmatprep.subr.mxu0 0.0
  %1086 = vmatpush1.msra.mxu0 0.0
  %1087 = vmatprep.subr.mxu0 0.0
  %1088 = vmatpush1.msra.mxu0 0.0
  %1089 = vmatprep.subr.mxu0 0.0
  %1090 = vmatpush1.msra.mxu0 0.0
  %1091 = vmatprep.subr.mxu0 0.0
  %1092 = vmatpush1.msra.mxu0 0.0
  %1093 = vmatprep.subr.mxu0 0.0
  %1094 = vmatpush1.msra.mxu0 0.0
  %1095 = vmatprep.subr.mxu0 0.0
  %1096 = vmatpush1.msra.mxu0 0.0
  %1097 = vmatprep.subr.mxu0 0.0
  %1098 = vmatpush1.msra.mxu0 0.0
  %1099 = vmatprep.subr.mxu0 0.0
  %1100 = vmatpush1.msra.mxu0 0.0
  %1101 = vmatprep.subr.mxu0 0.0
  %1102 = vmatpush1.msra.mxu0 0.0
  %1103 = vmatprep.subr.mxu0 0.0
  %1104 = vmatpush1.msra.mxu0 0.0
  %1105 = vmatprep.subr.mxu0 0.0
  %1106 = vmatpush1.msra.mxu0 0.0
  %1107 = vmatprep.subr.mxu0 0.0
  %1108 = vmatpush1.msra.mxu0 0.0
  %1109 = vmatprep.subr.mxu0 0.0
  %1110 = vmatpush1.msra.mxu0 0.0
  %1111 = vmatprep.subr.mxu0 0.0
  %1112 = vmatpush1.msra.mxu0 0.0
  %1113 = vmatprep.subr.mxu0 0.0
  %1114 = vmatpush1.msra.mxu0 0.0
  %1115 = vmatprep.subr.mxu0 0.0
  %1116 = vmatpush1.msra.mxu0 0.0
  %1117 = vmatprep.subr.mxu0 0.0
  %1118 = vmatpush1.msra.mxu0 0.0
  %1119 = vmatprep.subr.mxu0 0.0
  %1120 = vmatpush1.msra.mxu0 0.0
  %1121 = vmatprep.subr.mxu0 0.0
  %1122 = vmatpush1.msra.mxu0 0.0
  %1123 = vmatprep.subr.mxu0 0.0
  %1124 = vmatpush1.msra.mxu0 0.0
  %1125 = vmatprep.subr.mxu0 0.0
  %1126 = vmatpush1.msra.mxu0 0.0
  %1127 = vmatprep.subr.mxu0 0.0
  %1128 = vmatpush1.msra.mxu0 0.0
  %1129 = vmatprep.subr.mxu0 0.0
  %1130 = vmatpush1.msra.mxu0 0.0
  %1131 = vmatprep.subr.mxu0 0.0
  %1132 = vmatpush1.msra.mxu0 0.0
  %1133 = vmatprep.subr.mxu0 0.0
  %1134 = vmatpush1.msra.mxu0 0.0
  %1135 = vmatprep.subr.mxu0 0.0
  %1136 = vmatpush1.msra.mxu0 0.0
  %1137 = vmatprep.mubr.f32.mxu0 0.0
  %1138 = vmatmul.mubr.f32.gmra.mrb[0].mxu0 %v1071
  %v1139 = vpop.f32.mrb[0].mxu0
  %v1140 = vadd.f32 %v229, %v1139
  %v1141 = vpop.f32.mrb[0].mxu0
  %1142 = vdwg.mxu0
  %v1143 = vadd.f32 %v1070, %v1140
  %v1144 = vxor.u32 %v1143, 2147483648
  %v1145 = vmul.f32 %v1144, 1.442695
  %v1146 = vpow.pop %v1145
  %v1147 = vadd.f32 %v1146, 1.0
  %v1148 = vrcp.pop %v1147
  %v1149 = vmul.f32 1.0, %v1148
  %1151 = vrot.lane.b32.xlu0 %v1140, 64
  %v1152 = vpop.permute.xlu0 %1151
  %v1154 = vmul.f32 %v1149, %v1152
  %1156 = vrot.lane.b32.xlu0 %v1154, 64
  %v1157 = vpop.permute.xlu0 %1156
  %v1159 = vadd.f32 %v1070, %v1157
  %v1160 = vtanh.pop %v1159
  %v1161 = vsub.f32 1.0, %v1149
  %1163 = vrot.lane.b32.xlu0 %v1160, 96
  %v1164 = vpop.permute.xlu0 %1163
  %v1166 = vmul.f32 %v1161, %v1164
  %v1167 = vmul.f32 %v1149, %v959
  %v1168 = vadd.f32 %v1166, %v1167
  %v1169 = vld [vmem:[#allocation3 + $0x6] sm:$0x3]
  %1171 = vrot.lane.b32.xlu0 %v1061, 96
  %v1172 = vpop.permute.xlu0 %1171
  %v1173 = vsel %vm231, %v1172, 0
  %1175 = vmatprep.subr.mxu0 0.0
  %1176 = vmatpush1.msra.mxu0 %v219
  %1177 = vmatprep.subr.mxu0 0.0
  %1178 = vmatpush1.msra.mxu0 %v220
  %1179 = vmatprep.subr.mxu0 0.0
  %1180 = vmatpush1.msra.mxu0 %v221
  %1181 = vmatprep.subr.mxu0 0.0
  %1182 = vmatpush1.msra.mxu0 %v222
  %1183 = vmatprep.subr.mxu0 0.0
  %1184 = vmatpush1.msra.mxu0 0.0
  %1185 = vmatprep.subr.mxu0 0.0
  %1186 = vmatpush1.msra.mxu0 0.0
  %1187 = vmatprep.subr.mxu0 0.0
  %1188 = vmatpush1.msra.mxu0 0.0
  %1189 = vmatprep.subr.mxu0 0.0
  %1190 = vmatpush1.msra.mxu0 0.0
  %1191 = vmatprep.subr.mxu0 0.0
  %1192 = vmatpush1.msra.mxu0 0.0
  %1193 = vmatprep.subr.mxu0 0.0
  %1194 = vmatpush1.msra.mxu0 0.0
  %1195 = vmatprep.subr.mxu0 0.0
  %1196 = vmatpush1.msra.mxu0 0.0
  %1197 = vmatprep.subr.mxu0 0.0
  %1198 = vmatpush1.msra.mxu0 0.0
  %1199 = vmatprep.subr.mxu0 0.0
  %1200 = vmatpush1.msra.mxu0 0.0
  %1201 = vmatprep.subr.mxu0 0.0
  %1202 = vmatpush1.msra.mxu0 0.0
  %1203 = vmatprep.subr.mxu0 0.0
  %1204 = vmatpush1.msra.mxu0 0.0
  %1205 = vmatprep.subr.mxu0 0.0
  %1206 = vmatpush1.msra.mxu0 0.0
  %1207 = vmatprep.subr.mxu0 0.0
  %1208 = vmatpush1.msra.mxu0 0.0
  %1209 = vmatprep.subr.mxu0 0.0
  %1210 = vmatpush1.msra.mxu0 0.0
  %1211 = vmatprep.subr.mxu0 0.0
  %1212 = vmatpush1.msra.mxu0 0.0
  %1213 = vmatprep.subr.mxu0 0.0
  %1214 = vmatpush1.msra.mxu0 0.0
  %1215 = vmatprep.subr.mxu0 0.0
  %1216 = vmatpush1.msra.mxu0 0.0
  %1217 = vmatprep.subr.mxu0 0.0
  %1218 = vmatpush1.msra.mxu0 0.0
  %1219 = vmatprep.subr.mxu0 0.0
  %1220 = vmatpush1.msra.mxu0 0.0
  %1221 = vmatprep.subr.mxu0 0.0
  %1222 = vmatpush1.msra.mxu0 0.0
  %1223 = vmatprep.subr.mxu0 0.0
  %1224 = vmatpush1.msra.mxu0 0.0
  %1225 = vmatprep.subr.mxu0 0.0
  %1226 = vmatpush1.msra.mxu0 0.0
  %1227 = vmatprep.subr.mxu0 0.0
  %1228 = vmatpush1.msra.mxu0 0.0
  %1229 = vmatprep.subr.mxu0 0.0
  %1230 = vmatpush1.msra.mxu0 0.0
  %1231 = vmatprep.subr.mxu0 0.0
  %1232 = vmatpush1.msra.mxu0 0.0
  %1233 = vmatprep.subr.mxu0 0.0
  %1234 = vmatpush1.msra.mxu0 0.0
  %1235 = vmatprep.subr.mxu0 0.0
  %1236 = vmatpush1.msra.mxu0 0.0
  %1237 = vmatprep.subr.mxu0 0.0
  %1238 = vmatpush1.msra.mxu0 0.0
  %1239 = vmatprep.mubr.f32.mxu0 0.0
  %1240 = vmatmul.mubr.f32.gmra.mrb[0].mxu0 %v1173
  %v1241 = vpop.f32.mrb[0].mxu0
  %v1242 = vadd.f32 %v336, %v1241
  %v1243 = vpop.f32.mrb[0].mxu0
  %1244 = vdwg.mxu0
  %v1245 = vadd.f32 %v1169, %v1242
  %v1246 = vxor.u32 %v1245, 2147483648
  %v1247 = vmul.f32 %v1246, 1.442695
  %v1248 = vpow.pop %v1247
  %v1249 = vadd.f32 %v1248, 1.0
  %v1250 = vrcp.pop %v1249
  %v1251 = vmul.f32 1.0, %v1250
  %1253 = vrot.lane.b32.xlu0 %v1242, 64
  %v1254 = vpop.permute.xlu0 %1253
  %v1256 = vmul.f32 %v1251, %v1254
  %1258 = vrot.lane.b32.xlu0 %v1256, 64
  %v1259 = vpop.permute.xlu0 %1258
  %v1261 = vadd.f32 %v1169, %v1259
  %v1262 = vtanh.pop %v1261
  %v1263 = vsub.f32 1.0, %v1251
  %1265 = vrot.lane.b32.xlu0 %v1262, 96
  %v1266 = vpop.permute.xlu0 %1265
  %v1268 = vmul.f32 %v1263, %v1266
  %v1269 = vmul.f32 %v1251, %v1061
  %v1270 = vadd.f32 %v1268, %v1269
  %1272 = vrot.lane.b32.xlu0 %v1168, 96
  %v1273 = vpop.permute.xlu0 %1272
  %1275 = vst.msk [vmem:[%s1068] sm:$0x3] %vm438, %v1273
  %1276 = vst.msk [vmem:[%s1066] sm:$0x3] %vm441, %v1270
  %v1277 = vld [vmem:[#allocation2 + $0xa] sm:$0x3]
  %v1278 = vsel %vm231, %v1273, 0
  %1280 = vmatprep.subr.mxu0 0.0
  %1281 = vmatpush1.msra.mxu0 %v214
  %1282 = vmatprep.subr.mxu0 0.0
  %1283 = vmatpush1.msra.mxu0 %v215
  %1284 = vmatprep.subr.mxu0 0.0
  %1285 = vmatpush1.msra.mxu0 %v216
  %1286 = vmatprep.subr.mxu0 0.0
  %1287 = vmatpush1.msra.mxu0 %v217
  %1288 = vmatprep.subr.mxu0 0.0
  %1289 = vmatpush1.msra.mxu0 0.0
  %1290 = vmatprep.subr.mxu0 0.0
  %1291 = vmatpush1.msra.mxu0 0.0
  %1292 = vmatprep.subr.mxu0 0.0
  %1293 = vmatpush1.msra.mxu0 0.0
  %1294 = vmatprep.subr.mxu0 0.0
  %1295 = vmatpush1.msra.mxu0 0.0
  %1296 = vmatprep.subr.mxu0 0.0
  %1297 = vmatpush1.msra.mxu0 0.0
  %1298 = vmatprep.subr.mxu0 0.0
  %1299 = vmatpush1.msra.mxu0 0.0
  %1300 = vmatprep.subr.mxu0 0.0
  %1301 = vmatpush1.msra.mxu0 0.0
  %1302 = vmatprep.subr.mxu0 0.0
  %1303 = vmatpush1.msra.mxu0 0.0
  %1304 = vmatprep.subr.mxu0 0.0
  %1305 = vmatpush1.msra.mxu0 0.0
  %1306 = vmatprep.subr.mxu0 0.0
  %1307 = vmatpush1.msra.mxu0 0.0
  %1308 = vmatprep.subr.mxu0 0.0
  %1309 = vmatpush1.msra.mxu0 0.0
  %1310 = vmatprep.subr.mxu0 0.0
  %1311 = vmatpush1.msra.mxu0 0.0
  %1312 = vmatprep.subr.mxu0 0.0
  %1313 = vmatpush1.msra.mxu0 0.0
  %1314 = vmatprep.subr.mxu0 0.0
  %1315 = vmatpush1.msra.mxu0 0.0
  %1316 = vmatprep.subr.mxu0 0.0
  %1317 = vmatpush1.msra.mxu0 0.0
  %1318 = vmatprep.subr.mxu0 0.0
  %1319 = vmatpush1.msra.mxu0 0.0
  %1320 = vmatprep.subr.mxu0 0.0
  %1321 = vmatpush1.msra.mxu0 0.0
  %1322 = vmatprep.subr.mxu0 0.0
  %1323 = vmatpush1.msra.mxu0 0.0
  %1324 = vmatprep.subr.mxu0 0.0
  %1325 = vmatpush1.msra.mxu0 0.0
  %1326 = vmatprep.subr.mxu0 0.0
  %1327 = vmatpush1.msra.mxu0 0.0
  %1328 = vmatprep.subr.mxu0 0.0
  %1329 = vmatpush1.msra.mxu0 0.0
  %1330 = vmatprep.subr.mxu0 0.0
  %1331 = vmatpush1.msra.mxu0 0.0
  %1332 = vmatprep.subr.mxu0 0.0
  %1333 = vmatpush1.msra.mxu0 0.0
  %1334 = vmatprep.subr.mxu0 0.0
  %1335 = vmatpush1.msra.mxu0 0.0
  %1336 = vmatprep.subr.mxu0 0.0
  %1337 = vmatpush1.msra.mxu0 0.0
  %1338 = vmatprep.subr.mxu0 0.0
  %1339 = vmatpush1.msra.mxu0 0.0
  %1340 = vmatprep.subr.mxu0 0.0
  %1341 = vmatpush1.msra.mxu0 0.0
  %1342 = vmatprep.subr.mxu0 0.0
  %1343 = vmatpush1.msra.mxu0 0.0
  %1344 = vmatprep.mubr.f32.mxu0 0.0
  %1345 = vmatmul.mubr.f32.gmra.mrb[0].mxu0 %v1278
  %v1346 = vpop.f32.mrb[0].mxu0
  %v1347 = vadd.f32 %v229, %v1346
  %v1348 = vpop.f32.mrb[0].mxu0
  %1349 = vdwg.mxu0
  %v1350 = vadd.f32 %v1277, %v1347
  %v1351 = vxor.u32 %v1350, 2147483648
  %v1352 = vmul.f32 %v1351, 1.442695
  %v1353 = vpow.pop %v1352
  %v1354 = vadd.f32 %v1353, 1.0
  %v1355 = vrcp.pop %v1354
  %v1356 = vmul.f32 1.0, %v1355
  %1358 = vrot.lane.b32.xlu0 %v1347, 64
  %v1359 = vpop.permute.xlu0 %1358
  %v1361 = vmul.f32 %v1356, %v1359
  %1363 = vrot.lane.b32.xlu0 %v1361, 64
  %v1364 = vpop.permute.xlu0 %1363
  %v1366 = vadd.f32 %v1277, %v1364
  %v1367 = vtanh.pop %v1366
  %v1368 = vsub.f32 1.0, %v1356
  %1370 = vrot.lane.b32.xlu0 %v1367, 96
  %v1371 = vpop.permute.xlu0 %1370
  %v1373 = vmul.f32 %v1368, %v1371
  %v1374 = vmul.f32 %v1356, %v1168
  %v1375 = vadd.f32 %v1373, %v1374
  %v1376 = vld [vmem:[#allocation3 + $0x4] sm:$0x3]
  %1378 = vrot.lane.b32.xlu0 %v1270, 96
  %v1379 = vpop.permute.xlu0 %1378
  %v1380 = vsel %vm231, %v1379, 0
  %1382 = vmatprep.subr.mxu0 0.0
  %1383 = vmatpush1.msra.mxu0 %v219
  %1384 = vmatprep.subr.mxu0 0.0
  %1385 = vmatpush1.msra.mxu0 %v220
  %1386 = vmatprep.subr.mxu0 0.0
  %1387 = vmatpush1.msra.mxu0 %v221
  %1388 = vmatprep.subr.mxu0 0.0
  %1389 = vmatpush1.msra.mxu0 %v222
  %1390 = vmatprep.subr.mxu0 0.0
  %1391 = vmatpush1.msra.mxu0 0.0
  %1392 = vmatprep.subr.mxu0 0.0
  %1393 = vmatpush1.msra.mxu0 0.0
  %1394 = vmatprep.subr.mxu0 0.0
  %1395 = vmatpush1.msra.mxu0 0.0
  %1396 = vmatprep.subr.mxu0 0.0
  %1397 = vmatpush1.msra.mxu0 0.0
  %1398 = vmatprep.subr.mxu0 0.0
  %1399 = vmatpush1.msra.mxu0 0.0
  %1400 = vmatprep.subr.mxu0 0.0
  %1401 = vmatpush1.msra.mxu0 0.0
  %1402 = vmatprep.subr.mxu0 0.0
  %1403 = vmatpush1.msra.mxu0 0.0
  %1404 = vmatprep.subr.mxu0 0.0
  %1405 = vmatpush1.msra.mxu0 0.0
  %1406 = vmatprep.subr.mxu0 0.0
  %1407 = vmatpush1.msra.mxu0 0.0
  %1408 = vmatprep.subr.mxu0 0.0
  %1409 = vmatpush1.msra.mxu0 0.0
  %1410 = vmatprep.subr.mxu0 0.0
  %1411 = vmatpush1.msra.mxu0 0.0
  %1412 = vmatprep.subr.mxu0 0.0
  %1413 = vmatpush1.msra.mxu0 0.0
  %1414 = vmatprep.subr.mxu0 0.0
  %1415 = vmatpush1.msra.mxu0 0.0
  %1416 = vmatprep.subr.mxu0 0.0
  %1417 = vmatpush1.msra.mxu0 0.0
  %1418 = vmatprep.subr.mxu0 0.0
  %1419 = vmatpush1.msra.mxu0 0.0
  %1420 = vmatprep.subr.mxu0 0.0
  %1421 = vmatpush1.msra.mxu0 0.0
  %1422 = vmatprep.subr.mxu0 0.0
  %1423 = vmatpush1.msra.mxu0 0.0
  %1424 = vmatprep.subr.mxu0 0.0
  %1425 = vmatpush1.msra.mxu0 0.0
  %1426 = vmatprep.subr.mxu0 0.0
  %1427 = vmatpush1.msra.mxu0 0.0
  %1428 = vmatprep.subr.mxu0 0.0
  %1429 = vmatpush1.msra.mxu0 0.0
  %1430 = vmatprep.subr.mxu0 0.0
  %1431 = vmatpush1.msra.mxu0 0.0
  %1432 = vmatprep.subr.mxu0 0.0
  %1433 = vmatpush1.msra.mxu0 0.0
  %1434 = vmatprep.subr.mxu0 0.0
  %1435 = vmatpush1.msra.mxu0 0.0
  %1436 = vmatprep.subr.mxu0 0.0
  %1437 = vmatpush1.msra.mxu0 0.0
  %1438 = vmatprep.subr.mxu0 0.0
  %1439 = vmatpush1.msra.mxu0 0.0
  %1440 = vmatprep.subr.mxu0 0.0
  %1441 = vmatpush1.msra.mxu0 0.0
  %1442 = vmatprep.subr.mxu0 0.0
  %1443 = vmatpush1.msra.mxu0 0.0
  %1444 = vmatprep.subr.mxu0 0.0
  %1445 = vmatpush1.msra.mxu0 0.0
  %1446 = vmatprep.mubr.f32.mxu0 0.0
  %1447 = vmatmul.mubr.f32.gmra.mrb[0].mxu0 %v1380
  %v1448 = vpop.f32.mrb[0].mxu0
  %v1449 = vadd.f32 %v336, %v1448
  %v1450 = vpop.f32.mrb[0].mxu0
  %1451 = vdwg.mxu0
  %v1452 = vadd.f32 %v1376, %v1449
  %v1453 = vxor.u32 %v1452, 2147483648
  %v1454 = vmul.f32 %v1453, 1.442695
  %v1455 = vpow.pop %v1454
  %v1456 = vadd.f32 %v1455, 1.0
  %v1457 = vrcp.pop %v1456
  %v1458 = vmul.f32 1.0, %v1457
  %1460 = vrot.lane.b32.xlu0 %v1449, 64
  %v1461 = vpop.permute.xlu0 %1460
  %v1463 = vmul.f32 %v1458, %v1461
  %1465 = vrot.lane.b32.xlu0 %v1463, 64
  %v1466 = vpop.permute.xlu0 %1465
  %v1468 = vadd.f32 %v1376, %v1466
  %v1469 = vtanh.pop %v1468
  %v1470 = vsub.f32 1.0, %v1458
  %1472 = vrot.lane.b32.xlu0 %v1469, 96
  %v1473 = vpop.permute.xlu0 %1472
  %v1475 = vmul.f32 %v1470, %v1473
  %v1476 = vmul.f32 %v1458, %v1270
  %v1477 = vadd.f32 %v1475, %v1476
  %1479 = vrot.lane.b32.xlu0 %v1375, 96
  %v1480 = vpop.permute.xlu0 %1479
  %1482 = vst.msk [vmem:[%s859] sm:$0x3] %vm438, %v1480
  %1483 = vst.msk [vmem:[%s857] sm:$0x3] %vm441, %v1477
  %v1484 = vld [vmem:[#allocation2 + $0xc] sm:$0x3]
  %v1485 = vsel %vm231, %v1480, 0
  %1487 = vmatprep.subr.mxu0 0.0
  %1488 = vmatpush1.msra.mxu0 %v214
  %1489 = vmatprep.subr.mxu0 0.0
  %1490 = vmatpush1.msra.mxu0 %v215
  %1491 = vmatprep.subr.mxu0 0.0
  %1492 = vmatpush1.msra.mxu0 %v216
  %1493 = vmatprep.subr.mxu0 0.0
  %1494 = vmatpush1.msra.mxu0 %v217
  %1495 = vmatprep.subr.mxu0 0.0
  %1496 = vmatpush1.msra.mxu0 0.0
  %1497 = vmatprep.subr.mxu0 0.0
  %1498 = vmatpush1.msra.mxu0 0.0
  %1499 = vmatprep.subr.mxu0 0.0
  %1500 = vmatpush1.msra.mxu0 0.0
  %1501 = vmatprep.subr.mxu0 0.0
  %1502 = vmatpush1.msra.mxu0 0.0
  %1503 = vmatprep.subr.mxu0 0.0
  %1504 = vmatpush1.msra.mxu0 0.0
  %1505 = vmatprep.subr.mxu0 0.0
  %1506 = vmatpush1.msra.mxu0 0.0
  %1507 = vmatprep.subr.mxu0 0.0
  %1508 = vmatpush1.msra.mxu0 0.0
  %1509 = vmatprep.subr.mxu0 0.0
  %1510 = vmatpush1.msra.mxu0 0.0
  %1511 = vmatprep.subr.mxu0 0.0
  %1512 = vmatpush1.msra.mxu0 0.0
  %1513 = vmatprep.subr.mxu0 0.0
  %1514 = vmatpush1.msra.mxu0 0.0
  %1515 = vmatprep.subr.mxu0 0.0
  %1516 = vmatpush1.msra.mxu0 0.0
  %1517 = vmatprep.subr.mxu0 0.0
  %1518 = vmatpush1.msra.mxu0 0.0
  %1519 = vmatprep.subr.mxu0 0.0
  %1520 = vmatpush1.msra.mxu0 0.0
  %1521 = vmatprep.subr.mxu0 0.0
  %1522 = vmatpush1.msra.mxu0 0.0
  %1523 = vmatprep.subr.mxu0 0.0
  %1524 = vmatpush1.msra.mxu0 0.0
  %1525 = vmatprep.subr.mxu0 0.0
  %1526 = vmatpush1.msra.mxu0 0.0
  %1527 = vmatprep.subr.mxu0 0.0
  %1528 = vmatpush1.msra.mxu0 0.0
  %1529 = vmatprep.subr.mxu0 0.0
  %1530 = vmatpush1.msra.mxu0 0.0
  %1531 = vmatprep.subr.mxu0 0.0
  %1532 = vmatpush1.msra.mxu0 0.0
  %1533 = vmatprep.subr.mxu0 0.0
  %1534 = vmatpush1.msra.mxu0 0.0
  %1535 = vmatprep.subr.mxu0 0.0
  %1536 = vmatpush1.msra.mxu0 0.0
  %1537 = vmatprep.subr.mxu0 0.0
  %1538 = vmatpush1.msra.mxu0 0.0
  %1539 = vmatprep.subr.mxu0 0.0
  %1540 = vmatpush1.msra.mxu0 0.0
  %1541 = vmatprep.subr.mxu0 0.0
  %1542 = vmatpush1.msra.mxu0 0.0
  %1543 = vmatprep.subr.mxu0 0.0
  %1544 = vmatpush1.msra.mxu0 0.0
  %1545 = vmatprep.subr.mxu0 0.0
  %1546 = vmatpush1.msra.mxu0 0.0
  %1547 = vmatprep.subr.mxu0 0.0
  %1548 = vmatpush1.msra.mxu0 0.0
  %1549 = vmatprep.subr.mxu0 0.0
  %1550 = vmatpush1.msra.mxu0 0.0
  %1551 = vmatprep.mubr.f32.mxu0 0.0
  %1552 = vmatmul.mubr.f32.gmra.mrb[0].mxu0 %v1485
  %v1553 = vpop.f32.mrb[0].mxu0
  %v1554 = vadd.f32 %v229, %v1553
  %v1555 = vpop.f32.mrb[0].mxu0
  %1556 = vdwg.mxu0
  %v1557 = vadd.f32 %v1484, %v1554
  %v1558 = vxor.u32 %v1557, 2147483648
  %v1559 = vmul.f32 %v1558, 1.442695
  %v1560 = vpow.pop %v1559
  %v1561 = vadd.f32 %v1560, 1.0
  %v1562 = vrcp.pop %v1561
  %v1563 = vmul.f32 1.0, %v1562
  %1565 = vrot.lane.b32.xlu0 %v1554, 64
  %v1566 = vpop.permute.xlu0 %1565
  %v1568 = vmul.f32 %v1563, %v1566
  %1570 = vrot.lane.b32.xlu0 %v1568, 64
  %v1571 = vpop.permute.xlu0 %1570
  %v1573 = vadd.f32 %v1484, %v1571
  %v1574 = vtanh.pop %v1573
  %v1575 = vsub.f32 1.0, %v1563
  %1577 = vrot.lane.b32.xlu0 %v1574, 96
  %v1578 = vpop.permute.xlu0 %1577
  %v1580 = vmul.f32 %v1575, %v1578
  %v1581 = vmul.f32 %v1563, %v1375
  %v1582 = vadd.f32 %v1580, %v1581
  %v1583 = vld [vmem:[#allocation3 + $0x2] sm:$0x3]
  %1585 = vrot.lane.b32.xlu0 %v1477, 96
  %v1586 = vpop.permute.xlu0 %1585
  %v1587 = vsel %vm231, %v1586, 0
  %1589 = vmatprep.subr.mxu0 0.0
  %1590 = vmatpush1.msra.mxu0 %v219
  %1591 = vmatprep.subr.mxu0 0.0
  %1592 = vmatpush1.msra.mxu0 %v220
  %1593 = vmatprep.subr.mxu0 0.0
  %1594 = vmatpush1.msra.mxu0 %v221
  %1595 = vmatprep.subr.mxu0 0.0
  %1596 = vmatpush1.msra.mxu0 %v222
  %1597 = vmatprep.subr.mxu0 0.0
  %1598 = vmatpush1.msra.mxu0 0.0
  %1599 = vmatprep.subr.mxu0 0.0
  %1600 = vmatpush1.msra.mxu0 0.0
  %1601 = vmatprep.subr.mxu0 0.0
  %1602 = vmatpush1.msra.mxu0 0.0
  %1603 = vmatprep.subr.mxu0 0.0
  %1604 = vmatpush1.msra.mxu0 0.0
  %1605 = vmatprep.subr.mxu0 0.0
  %1606 = vmatpush1.msra.mxu0 0.0
  %1607 = vmatprep.subr.mxu0 0.0
  %1608 = vmatpush1.msra.mxu0 0.0
  %1609 = vmatprep.subr.mxu0 0.0
  %1610 = vmatpush1.msra.mxu0 0.0
  %1611 = vmatprep.subr.mxu0 0.0
  %1612 = vmatpush1.msra.mxu0 0.0
  %1613 = vmatprep.subr.mxu0 0.0
  %1614 = vmatpush1.msra.mxu0 0.0
  %1615 = vmatprep.subr.mxu0 0.0
  %1616 = vmatpush1.msra.mxu0 0.0
  %1617 = vmatprep.subr.mxu0 0.0
  %1618 = vmatpush1.msra.mxu0 0.0
  %1619 = vmatprep.subr.mxu0 0.0
  %1620 = vmatpush1.msra.mxu0 0.0
  %1621 = vmatprep.subr.mxu0 0.0
  %1622 = vmatpush1.msra.mxu0 0.0
  %1623 = vmatprep.subr.mxu0 0.0
  %1624 = vmatpush1.msra.mxu0 0.0
  %1625 = vmatprep.subr.mxu0 0.0
  %1626 = vmatpush1.msra.mxu0 0.0
  %1627 = vmatprep.subr.mxu0 0.0
  %1628 = vmatpush1.msra.mxu0 0.0
  %1629 = vmatprep.subr.mxu0 0.0
  %1630 = vmatpush1.msra.mxu0 0.0
  %1631 = vmatprep.subr.mxu0 0.0
  %1632 = vmatpush1.msra.mxu0 0.0
  %1633 = vmatprep.subr.mxu0 0.0
  %1634 = vmatpush1.msra.mxu0 0.0
  %1635 = vmatprep.subr.mxu0 0.0
  %1636 = vmatpush1.msra.mxu0 0.0
  %1637 = vmatprep.subr.mxu0 0.0
  %1638 = vmatpush1.msra.mxu0 0.0
  %1639 = vmatprep.subr.mxu0 0.0
  %1640 = vmatpush1.msra.mxu0 0.0
  %1641 = vmatprep.subr.mxu0 0.0
  %1642 = vmatpush1.msra.mxu0 0.0
  %1643 = vmatprep.subr.mxu0 0.0
  %1644 = vmatpush1.msra.mxu0 0.0
  %1645 = vmatprep.subr.mxu0 0.0
  %1646 = vmatpush1.msra.mxu0 0.0
  %1647 = vmatprep.subr.mxu0 0.0
  %1648 = vmatpush1.msra.mxu0 0.0
  %1649 = vmatprep.subr.mxu0 0.0
  %1650 = vmatpush1.msra.mxu0 0.0
  %1651 = vmatprep.subr.mxu0 0.0
  %1652 = vmatpush1.msra.mxu0 0.0
  %1653 = vmatprep.mubr.f32.mxu0 0.0
  %1654 = vmatmul.mubr.f32.gmra.mrb[0].mxu0 %v1587
  %v1655 = vpop.f32.mrb[0].mxu0
  %v1656 = vadd.f32 %v336, %v1655
  %v1657 = vpop.f32.mrb[0].mxu0
  %1658 = vdwg.mxu0
  %v1659 = vadd.f32 %v1583, %v1656
  %v1660 = vxor.u32 %v1659, 2147483648
  %v1661 = vmul.f32 %v1660, 1.442695
  %v1662 = vpow.pop %v1661
  %v1663 = vadd.f32 %v1662, 1.0
  %v1664 = vrcp.pop %v1663
  %v1665 = vmul.f32 1.0, %v1664
  %1667 = vrot.lane.b32.xlu0 %v1656, 64
  %v1668 = vpop.permute.xlu0 %1667
  %v1670 = vmul.f32 %v1665, %v1668
  %1672 = vrot.lane.b32.xlu0 %v1670, 64
  %v1673 = vpop.permute.xlu0 %1672
  %v1675 = vadd.f32 %v1583, %v1673
  %v1676 = vtanh.pop %v1675
  %v1677 = vsub.f32 1.0, %v1665
  %1679 = vrot.lane.b32.xlu0 %v1676, 96
  %v1680 = vpop.permute.xlu0 %1679
  %v1682 = vmul.f32 %v1677, %v1680
  %v1683 = vmul.f32 %v1665, %v1477
  %v1684 = vadd.f32 %v1682, %v1683
  %1686 = vrot.lane.b32.xlu0 %v1582, 96
  %v1687 = vpop.permute.xlu0 %1686
  %1689 = vst.msk [vmem:[%s650] sm:$0x3] %vm438, %v1687
  %1690 = vst.msk [vmem:[%s648] sm:$0x3] %vm441, %v1684
  %v1691 = vld [vmem:[#allocation2 + $0xe] sm:$0x3]
  %v1692 = vsel %vm231, %v1687, 0
  %1694 = vmatprep.subr.mxu0 0.0
  %1695 = vmatpush1.msra.mxu0 %v214
  %1696 = vmatprep.subr.mxu0 0.0
  %1697 = vmatpush1.msra.mxu0 %v215
  %1698 = vmatprep.subr.mxu0 0.0
  %1699 = vmatpush1.msra.mxu0 %v216
  %1700 = vmatprep.subr.mxu0 0.0
  %1701 = vmatpush1.msra.mxu0 %v217
  %1702 = vmatprep.subr.mxu0 0.0
  %1703 = vmatpush1.msra.mxu0 0.0
  %1704 = vmatprep.subr.mxu0 0.0
  %1705 = vmatpush1.msra.mxu0 0.0
  %1706 = vmatprep.subr.mxu0 0.0
  %1707 = vmatpush1.msra.mxu0 0.0
  %1708 = vmatprep.subr.mxu0 0.0
  %1709 = vmatpush1.msra.mxu0 0.0
  %1710 = vmatprep.subr.mxu0 0.0
  %1711 = vmatpush1.msra.mxu0 0.0
  %1712 = vmatprep.subr.mxu0 0.0
  %1713 = vmatpush1.msra.mxu0 0.0
  %1714 = vmatprep.subr.mxu0 0.0
  %1715 = vmatpush1.msra.mxu0 0.0
  %1716 = vmatprep.subr.mxu0 0.0
  %1717 = vmatpush1.msra.mxu0 0.0
  %1718 = vmatprep.subr.mxu0 0.0
  %1719 = vmatpush1.msra.mxu0 0.0
  %1720 = vmatprep.subr.mxu0 0.0
  %1721 = vmatpush1.msra.mxu0 0.0
  %1722 = vmatprep.subr.mxu0 0.0
  %1723 = vmatpush1.msra.mxu0 0.0
  %1724 = vmatprep.subr.mxu0 0.0
  %1725 = vmatpush1.msra.mxu0 0.0
  %1726 = vmatprep.subr.mxu0 0.0
  %1727 = vmatpush1.msra.mxu0 0.0
  %1728 = vmatprep.subr.mxu0 0.0
  %1729 = vmatpush1.msra.mxu0 0.0
  %1730 = vmatprep.subr.mxu0 0.0
  %1731 = vmatpush1.msra.mxu0 0.0
  %1732 = vmatprep.subr.mxu0 0.0
  %1733 = vmatpush1.msra.mxu0 0.0
  %1734 = vmatprep.subr.mxu0 0.0
  %1735 = vmatpush1.msra.mxu0 0.0
  %1736 = vmatprep.subr.mxu0 0.0
  %1737 = vmatpush1.msra.mxu0 0.0
  %1738 = vmatprep.subr.mxu0 0.0
  %1739 = vmatpush1.msra.mxu0 0.0
  %1740 = vmatprep.subr.mxu0 0.0
  %1741 = vmatpush1.msra.mxu0 0.0
  %1742 = vmatprep.subr.mxu0 0.0
  %1743 = vmatpush1.msra.mxu0 0.0
  %1744 = vmatprep.subr.mxu0 0.0
  %1745 = vmatpush1.msra.mxu0 0.0
  %1746 = vmatprep.subr.mxu0 0.0
  %1747 = vmatpush1.msra.mxu0 0.0
  %1748 = vmatprep.subr.mxu0 0.0
  %1749 = vmatpush1.msra.mxu0 0.0
  %1750 = vmatprep.subr.mxu0 0.0
  %1751 = vmatpush1.msra.mxu0 0.0
  %1752 = vmatprep.subr.mxu0 0.0
  %1753 = vmatpush1.msra.mxu0 0.0
  %1754 = vmatprep.subr.mxu0 0.0
  %1755 = vmatpush1.msra.mxu0 0.0
  %1756 = vmatprep.subr.mxu0 0.0
  %1757 = vmatpush1.msra.mxu0 0.0
  %1758 = vmatprep.mubr.f32.mxu0 0.0
  %1759 = vmatmul.mubr.f32.gmra.mrb[0].mxu0 %v1692
  %v1760 = vpop.f32.mrb[0].mxu0
  %v1761 = vadd.f32 %v229, %v1760
  %v1762 = vpop.f32.mrb[0].mxu0
  %1763 = vdwg.mxu0
  %v1764 = vadd.f32 %v1691, %v1761
  %v1765 = vxor.u32 %v1764, 2147483648
  %v1766 = vmul.f32 %v1765, 1.442695
  %v1767 = vpow.pop %v1766
  %v1768 = vadd.f32 %v1767, 1.0
  %v1769 = vrcp.pop %v1768
  %v1770 = vmul.f32 1.0, %v1769
  %1772 = vrot.lane.b32.xlu0 %v1761, 64
  %v1773 = vpop.permute.xlu0 %1772
  %v1775 = vmul.f32 %v1770, %v1773
  %1777 = vrot.lane.b32.xlu0 %v1775, 64
  %v1778 = vpop.permute.xlu0 %1777
  %v1780 = vadd.f32 %v1691, %v1778
  %v1781 = vtanh.pop %v1780
  %v1782 = vsub.f32 1.0, %v1770
  %1784 = vrot.lane.b32.xlu0 %v1781, 96
  %v1785 = vpop.permute.xlu0 %1784
  %v1787 = vmul.f32 %v1782, %v1785
  %v1788 = vmul.f32 %v1770, %v1582
  %v1789 = vadd.f32 %v1787, %v1788
  %v1790 = vld [vmem:[#allocation3] sm:$0x3]
  %1792 = vrot.lane.b32.xlu0 %v1684, 96
  %v1793 = vpop.permute.xlu0 %1792
  %v1794 = vsel %vm231, %v1793, 0
  %1796 = vmatprep.subr.mxu0 0.0
  %1797 = vmatpush1.msra.mxu0 %v219
  %1798 = vmatprep.subr.mxu0 0.0
  %1799 = vmatpush1.msra.mxu0 %v220
  %1800 = vmatprep.subr.mxu0 0.0
  %1801 = vmatpush1.msra.mxu0 %v221
  %1802 = vmatprep.subr.mxu0 0.0
  %1803 = vmatpush1.msra.mxu0 %v222
  %1804 = vmatprep.subr.mxu0 0.0
  %1805 = vmatpush1.msra.mxu0 0.0
  %1806 = vmatprep.subr.mxu0 0.0
  %1807 = vmatpush1.msra.mxu0 0.0
  %1808 = vmatprep.subr.mxu0 0.0
  %1809 = vmatpush1.msra.mxu0 0.0
  %1810 = vmatprep.subr.mxu0 0.0
  %1811 = vmatpush1.msra.mxu0 0.0
  %1812 = vmatprep.subr.mxu0 0.0
  %1813 = vmatpush1.msra.mxu0 0.0
  %1814 = vmatprep.subr.mxu0 0.0
  %1815 = vmatpush1.msra.mxu0 0.0
  %1816 = vmatprep.subr.mxu0 0.0
  %1817 = vmatpush1.msra.mxu0 0.0
  %1818 = vmatprep.subr.mxu0 0.0
  %1819 = vmatpush1.msra.mxu0 0.0
  %1820 = vmatprep.subr.mxu0 0.0
  %1821 = vmatpush1.msra.mxu0 0.0
  %1822 = vmatprep.subr.mxu0 0.0
  %1823 = vmatpush1.msra.mxu0 0.0
  %1824 = vmatprep.subr.mxu0 0.0
  %1825 = vmatpush1.msra.mxu0 0.0
  %1826 = vmatprep.subr.mxu0 0.0
  %1827 = vmatpush1.msra.mxu0 0.0
  %1828 = vmatprep.subr.mxu0 0.0
  %1829 = vmatpush1.msra.mxu0 0.0
  %1830 = vmatprep.subr.mxu0 0.0
  %1831 = vmatpush1.msra.mxu0 0.0
  %1832 = vmatprep.subr.mxu0 0.0
  %1833 = vmatpush1.msra.mxu0 0.0
  %1834 = vmatprep.subr.mxu0 0.0
  %1835 = vmatpush1.msra.mxu0 0.0
  %1836 = vmatprep.subr.mxu0 0.0
  %1837 = vmatpush1.msra.mxu0 0.0
  %1838 = vmatprep.subr.mxu0 0.0
  %1839 = vmatpush1.msra.mxu0 0.0
  %1840 = vmatprep.subr.mxu0 0.0
  %1841 = vmatpush1.msra.mxu0 0.0
  %1842 = vmatprep.subr.mxu0 0.0
  %1843 = vmatpush1.msra.mxu0 0.0
  %1844 = vmatprep.subr.mxu0 0.0
  %1845 = vmatpush1.msra.mxu0 0.0
  %1846 = vmatprep.subr.mxu0 0.0
  %1847 = vmatpush1.msra.mxu0 0.0
  %1848 = vmatprep.subr.mxu0 0.0
  %1849 = vmatpush1.msra.mxu0 0.0
  %1850 = vmatprep.subr.mxu0 0.0
  %1851 = vmatpush1.msra.mxu0 0.0
  %1852 = vmatprep.subr.mxu0 0.0
  %1853 = vmatpush1.msra.mxu0 0.0
  %1854 = vmatprep.subr.mxu0 0.0
  %1855 = vmatpush1.msra.mxu0 0.0
  %1856 = vmatprep.subr.mxu0 0.0
  %1857 = vmatpush1.msra.mxu0 0.0
  %1858 = vmatprep.subr.mxu0 0.0
  %1859 = vmatpush1.msra.mxu0 0.0
  %1860 = vmatprep.mubr.f32.mxu0 0.0
  %1861 = vmatmul.mubr.f32.gmra.mrb[0].mxu0 %v1794
  %v1862 = vpop.f32.mrb[0].mxu0
  %v1863 = vadd.f32 %v336, %v1862
  %v1864 = vpop.f32.mrb[0].mxu0
  %1865 = vdwg.mxu0
  %v1866 = vadd.f32 %v1790, %v1863
  %v1867 = vxor.u32 %v1866, 2147483648
  %v1868 = vmul.f32 %v1867, 1.442695
  %v1869 = vpow.pop %v1868
  %v1870 = vadd.f32 %v1869, 1.0
  %v1871 = vrcp.pop %v1870
  %v1872 = vmul.f32 1.0, %v1871
  %1874 = vrot.lane.b32.xlu0 %v1863, 64
  %v1875 = vpop.permute.xlu0 %1874
  %v1877 = vmul.f32 %v1872, %v1875
  %1879 = vrot.lane.b32.xlu0 %v1877, 64
  %v1880 = vpop.permute.xlu0 %1879
  %v1882 = vadd.f32 %v1790, %v1880
  %v1883 = vtanh.pop %v1882
  %v1884 = vsub.f32 1.0, %v1872
  %1886 = vrot.lane.b32.xlu0 %v1883, 96
  %v1887 = vpop.permute.xlu0 %1886
  %v1889 = vmul.f32 %v1884, %v1887
  %v1890 = vmul.f32 %v1872, %v1684
  %v1891 = vadd.f32 %v1889, %v1890
  %1893 = vrot.lane.b32.xlu0 %v1789, 96
  %v1894 = vpop.permute.xlu0 %1893
  %1896 = vst.msk [vmem:[%s440] sm:$0x3] %vm438, %v1894
  %1897 = vst.msk [vmem:[%s9] sm:$0x3] %vm441, %v1891
  // Predicated region
  $region38: #{encoder_gru_forward.2} parent=0 // pred_check
    _
  $region39: #{encoder_gru_forward.2} parent=0 // pred_check_branch
    %1899 = sbr.rel (0) target = $region41
  $region40: #{encoder_gru_forward.2} parent=0 // pred_region
    _
  $region41: #{encoder_gru_forward.2} parent=0 // pred_fallthru
    _
  // Predicated region
  $region42: #{encoder_gru_forward.2} parent=0 // pred_check
    _
  $region43: #{encoder_gru_forward.2} parent=0 // pred_check_branch
    %1901 = sbr.rel (0) target = $region45
  $region44: #{encoder_gru_forward.2} parent=0 // pred_region
    _
  $region45: #{encoder_gru_forward.2} parent=0 // pred_fallthru
    _

// kernel: encoder_gru_forward.3
$region0: #{encoder_gru_forward.3}
  #allocation0 [shape = 'u32[]', space=smem, size = 0x4, offset = 0x4, fixed_abs, tag = 'smem constant byte address 0x4 - core index']
  #allocation1 [shape = 'u32[144,128]{1,0:T(1,128)}', space=vmem, size = 0x12000, scoped, tag = 'internal scratch']
  #allocation2 [shape = 'f32[16,96]{1,0:T(8,128)}', space=vmem, size = 0x2000, scoped, tag = 'scratch operand']
  #allocation3 [shape = 'f32[16,96]{1,0:T(8,128)}', space=vmem, size = 0x2000, scoped, tag = 'scratch operand']
  %s0 = inlined_call_operand.vmem [shape: f32[16,64], index: 0, kind: input, shape index: {}]
  %s1 = inlined_call_operand.vmem [shape: f32[64,96], index: 1, kind: input, shape index: {}]
  %s2 = inlined_call_operand.vmem [shape: f32[32,96], index: 2, kind: input, shape index: {}]
  %s3 = inlined_call_operand.vmem [shape: f32[1,96], index: 3, kind: input, shape index: {}]
  %s4 = inlined_call_operand.vmem [shape: f32[1,96], index: 4, kind: input, shape index: {}]
  %s5 = inlined_call_operand.vmem [shape: f32[64,96], index: 5, kind: input, shape index: {}]
  %s6 = inlined_call_operand.vmem [shape: f32[32,96], index: 6, kind: input, shape index: {}]
  %s7 = inlined_call_operand.vmem [shape: f32[1,96], index: 7, kind: input, shape index: {}]
  %s8 = inlined_call_operand.vmem [shape: f32[1,96], index: 8, kind: input, shape index: {}]
  %s9 = inlined_call_operand.vmem [shape: f32[64,32], index: 9, kind: input, shape index: {}]
  %s10 = inlined_call_operand.vmem [shape: f32[1,32], index: 10, kind: input, shape index: {}]
  %s11 = inlined_call_operand.hbm [shape: f32[8,2,64], index: 11, kind: output, shape index: {0}]
  %s12 = inlined_call_operand.hbm [shape: f32[2,32], index: 12, kind: output, shape index: {1}]
  %13 = xla_tuple %s11, %s12
  %s14 = sld [smem:[#allocation0]]
  $region62: #{encoder_gru_forward.3} parent=0
    _
  %s16 = ssub.s32 1, %s14
  %s17 = scalar_select 0, %s16, %s14
  $region1: #{encoder_gru_forward.3} parent=0
    #allocation4 [shape = 'u8[8192]{0}', space=vmem, size = 0x2000, scoped, tag = 'output window, operand 0, single buffered']
    #allocation5 [shape = 's32[1]{0}', space=sflag, size = 0x4, scoped, tag = 'scoped memory for encoder_gru_forward.3']
    #allocation6 [shape = 'u8[1024]{0}', space=vmem, size = 0x400, scoped, tag = 'output window, operand 1, single buffered']
    #allocation7 [shape = 's32[1]{0}', space=sflag, size = 0x4, scoped, tag = 'scoped memory for encoder_gru_forward.3']
    %18 = vsyncpa [#allocation5], 0
    %19 = vsyncpa [#allocation7], 0
    // Predicated region
    $region2: #{encoder_gru_forward.3} parent=1 // pred_check
      _
    $region3: #{encoder_gru_forward.3} parent=1 // pred_check_branch
      %21 = sbr.rel (0) target = $region5
    $region4: #{encoder_gru_forward.3} parent=1 // pred_region
      _
    $region5: #{encoder_gru_forward.3} parent=1 // pred_fallthru
      _
    // Predicated region
    $region6: #{encoder_gru_forward.3} parent=1 // pred_check
      _
    $region7: #{encoder_gru_forward.3} parent=1 // pred_check_branch
      %23 = sbr.rel (0) target = $region9
    $region8: #{encoder_gru_forward.3} parent=1 // pred_region
      _
    $region9: #{encoder_gru_forward.3} parent=1 // pred_fallthru
      _
    // Predicated region
    $region10: #{encoder_gru_forward.3} parent=1 // pred_check
      _
    $region11: #{encoder_gru_forward.3} parent=1 // pred_check_branch
      %25 = sbr.rel (0) target = $region13
    $region12: #{encoder_gru_forward.3} parent=1 // pred_region
      _
    $region13: #{encoder_gru_forward.3} parent=1 // pred_fallthru
      _
    // Predicated region
    $region14: #{encoder_gru_forward.3} parent=1 // pred_check
      _
    $region15: #{encoder_gru_forward.3} parent=1 // pred_check_branch
      %27 = sbr.rel (0) target = $region17
    $region16: #{encoder_gru_forward.3} parent=1 // pred_region
      _
    $region17: #{encoder_gru_forward.3} parent=1 // pred_fallthru
      _
    // Predicated region
    $region18: #{encoder_gru_forward.3} parent=1 // pred_check
      _
    $region19: #{encoder_gru_forward.3} parent=1 // pred_check_branch
      %29 = sbr.rel (0) target = $region21
    $region20: #{encoder_gru_forward.3} parent=1 // pred_region
      _
    $region21: #{encoder_gru_forward.3} parent=1 // pred_fallthru
      _
    // Predicated region
    $region22: #{encoder_gru_forward.3} parent=1 // pred_check
      _
    $region23: #{encoder_gru_forward.3} parent=1 // pred_check_branch
      %31 = sbr.rel (0) target = $region25
    $region24: #{encoder_gru_forward.3} parent=1 // pred_region
      _
    $region25: #{encoder_gru_forward.3} parent=1 // pred_fallthru
      _
    // Predicated region
    $region26: #{encoder_gru_forward.3} parent=1 // pred_check
      _
    $region27: #{encoder_gru_forward.3} parent=1 // pred_check_branch
      %33 = sbr.rel (0) target = $region29
    $region28: #{encoder_gru_forward.3} parent=1 // pred_region
      _
    $region29: #{encoder_gru_forward.3} parent=1 // pred_fallthru
      _
    // Predicated region
    $region30: #{encoder_gru_forward.3} parent=1 // pred_check
      _
    $region31: #{encoder_gru_forward.3} parent=1 // pred_check_branch
      %35 = sbr.rel (0) target = $region33
    $region32: #{encoder_gru_forward.3} parent=1 // pred_region
      _
    $region33: #{encoder_gru_forward.3} parent=1 // pred_fallthru
      _
    // Predicated region
    $region34: #{encoder_gru_forward.3} parent=1 // pred_check
      _
    $region35: #{encoder_gru_forward.3} parent=1 // pred_check_branch
      %37 = sbr.rel (0) target = $region37
    $region36: #{encoder_gru_forward.3} parent=1 // pred_region
      _
    $region37: #{encoder_gru_forward.3} parent=1 // pred_fallthru
      _
    // Predicated region
    $region38: #{encoder_gru_forward.3} parent=1 // pred_check
      _
    $region39: #{encoder_gru_forward.3} parent=1 // pred_check_branch
      %39 = sbr.rel (0) target = $region41
    $region40: #{encoder_gru_forward.3} parent=1 // pred_region
      _
    $region41: #{encoder_gru_forward.3} parent=1 // pred_fallthru
      _
    // Predicated region
    $region42: #{encoder_gru_forward.3} parent=1 // pred_check
      _
    $region43: #{encoder_gru_forward.3} parent=1 // pred_check_branch
      %41 = sbr.rel (0) target = $region45
    $region44: #{encoder_gru_forward.3} parent=1 // pred_region
      _
    $region45: #{encoder_gru_forward.3} parent=1 // pred_fallthru
      _
    %v42 = vld [vmem:[%s0] sm:$0xff]
    %v43 = vld [vmem:[%s0 + $0x8] sm:$0xff]
    %v44 = vld [vmem:[%s1] sm:$0xff]
    %v45 = vld [vmem:[%s1 + $0x8] sm:$0xff]
    %v46 = vld [vmem:[%s1 + $0x10] sm:$0xff]
    %v47 = vld [vmem:[%s1 + $0x18] sm:$0xff]
    %v48 = vld [vmem:[%s1 + $0x20] sm:$0xff]
    %v49 = vld [vmem:[%s1 + $0x28] sm:$0xff]
    %v50 = vld [vmem:[%s1 + $0x30] sm:$0xff]
    %v51 = vld [vmem:[%s1 + $0x38] sm:$0xff]
    %v52 = vld [vmem:[%s3] sm:$0x1]
    %v54 = vlaneseq
    %v55 = vshrl.u32 %v54, 7
    %v56 = vsub.s32 0, %v55
    %v57 = vrot.slane %v52, %v56
    %vm59 = vcmask 523264
    %v61 = vsel %vm59, %v42, 0
    %v64 = vsel %vm59, %v43, 0
    %66 = vmatprep.subr.mxu0 0.0
    %67 = vmatpush1.msra.mxu0 %v44
    %68 = vmatprep.subr.mxu0 0.0
    %69 = vmatpush1.msra.mxu0 %v45
    %70 = vmatprep.subr.mxu0 0.0
    %71 = vmatpush1.msra.mxu0 %v46
    %72 = vmatprep.subr.mxu0 0.0
    %73 = vmatpush1.msra.mxu0 %v47
    %74 = vmatprep.subr.mxu0 0.0
    %75 = vmatpush1.msra.mxu0 %v48
    %76 = vmatprep.subr.mxu0 0.0
    %77 = vmatpush1.msra.mxu0 %v49
    %78 = vmatprep.subr.mxu0 0.0
    %79 = vmatpush1.msra.mxu0 %v50
    %80 = vmatprep.subr.mxu0 0.0
    %81 = vmatpush1.msra.mxu0 %v51
    %82 = vmatprep.subr.mxu0 0.0
    %83 = vmatpush1.msra.mxu0 0.0
    %84 = vmatprep.subr.mxu0 0.0
    %85 = vmatpush1.msra.mxu0 0.0
    %86 = vmatprep.subr.mxu0 0.0
    %87 = vmatpush1.msra.mxu0 0.0
    %88 = vmatprep.subr.mxu0 0.0
    %89 = vmatpush1.msra.mxu0 0.0
    %90 = vmatprep.subr.mxu0 0.0
    %91 = vmatpush1.msra.mxu0 0.0
    %92 = vmatprep.subr.mxu0 0.0
    %93 = vmatpush1.msra.mxu0 0.0
    %94 = vmatprep.subr.mxu0 0.0
    %95 = vmatpush1.msra.mxu0 0.0
    %96 = vmatprep.subr.mxu0 0.0
    %97 = vmatpush1.msra.mxu0 0.0
    %98 = vmatprep.subr.mxu0 0.0
    %99 = vmatpush1.msra.mxu0 0.0
    %100 = vmatprep.subr.mxu0 0.0
    %101 = vmatpush1.msra.mxu0 0.0
    %102 = vmatprep.subr.mxu0 0.0
    %103 = vmatpush1.msra.mxu0 0.0
    %104 = vmatprep.subr.mxu0 0.0
    %105 = vmatpush1.msra.mxu0 0.0
    %106 = vmatprep.subr.mxu0 0.0
    %107 = vmatpush1.msra.mxu0 0.0
    %108 = vmatprep.subr.mxu0 0.0
    %109 = vmatpush1.msra.mxu0 0.0
    %110 = vmatprep.subr.mxu0 0.0
    %111 = vmatpush1.msra.mxu0 0.0
    %112 = vmatprep.subr.mxu0 0.0
    %113 = vmatpush1.msra.mxu0 0.0
    %114 = vmatprep.subr.mxu0 0.0
    %115 = vmatpush1.msra.mxu0 0.0
    %116 = vmatprep.subr.mxu0 0.0
    %117 = vmatpush1.msra.mxu0 0.0
    %118 = vmatprep.subr.mxu0 0.0
    %119 = vmatpush1.msra.mxu0 0.0
    %120 = vmatprep.subr.mxu0 0.0
    %121 = vmatpush1.msra.mxu0 0.0
    %122 = vmatprep.subr.mxu0 0.0
    %123 = vmatpush1.msra.mxu0 0.0
    %124 = vmatprep.subr.mxu0 0.0
    %125 = vmatpush1.msra.mxu0 0.0
    %126 = vmatprep.subr.mxu0 0.0
    %127 = vmatpush1.msra.mxu0 0.0
    %128 = vmatprep.subr.mxu0 0.0
    %129 = vmatpush1.msra.mxu0 0.0
    %130 = vmatprep.mubr.f32.mxu0 0.0
    %131 = vmatmul.mubr.f32.gmra.mrb[0].mxu0 %v61
    %v132 = vpop.f32.mrb[0].mxu0
    %v133 = vadd.f32 %v57, %v132
    %v134 = vpop.f32.mrb[0].mxu0
    %135 = vmatprep.mubr.f32.mxu0 0.0
    %136 = vmatmul.mubr.f32.gmra.mrb[0].mxu0 %v64
    %v137 = vpop.f32.mrb[0].mxu0
    %v138 = vadd.f32 %v57, %v137
    %v139 = vpop.f32.mrb[0].mxu0
    %140 = vdwg.mxu0
    %vm141 = vcmask 785408
    %142 = vst.msk [vmem:[#allocation2] sm:$0xff] %vm141, %v133
    %143 = vst.msk [vmem:[#allocation2 + $0x8] sm:$0xff] %vm141, %v138
    %v144 = vld [vmem:[%s5] sm:$0xff]
    %v145 = vld [vmem:[%s5 + $0x8] sm:$0xff]
    %v146 = vld [vmem:[%s5 + $0x10] sm:$0xff]
    %v147 = vld [vmem:[%s5 + $0x18] sm:$0xff]
    %v148 = vld [vmem:[%s5 + $0x20] sm:$0xff]
    %v149 = vld [vmem:[%s5 + $0x28] sm:$0xff]
    %v150 = vld [vmem:[%s5 + $0x30] sm:$0xff]
    %v151 = vld [vmem:[%s5 + $0x38] sm:$0xff]
    %v152 = vld [vmem:[%s7] sm:$0x1]
    %v154 = vlaneseq
    %v155 = vshrl.u32 %v154, 7
    %v156 = vsub.s32 0, %v155
    %v157 = vrot.slane %v152, %v156
    %159 = vmatprep.subr.mxu0 0.0
    %160 = vmatpush1.msra.mxu0 %v144
    %161 = vmatprep.subr.mxu0 0.0
    %162 = vmatpush1.msra.mxu0 %v145
    %163 = vmatprep.subr.mxu0 0.0
    %164 = vmatpush1.msra.mxu0 %v146
    %165 = vmatprep.subr.mxu0 0.0
    %166 = vmatpush1.msra.mxu0 %v147
    %167 = vmatprep.subr.mxu0 0.0
    %168 = vmatpush1.msra.mxu0 %v148
    %169 = vmatprep.subr.mxu0 0.0
    %170 = vmatpush1.msra.mxu0 %v149
    %171 = vmatprep.subr.mxu0 0.0
    %172 = vmatpush1.msra.mxu0 %v150
    %173 = vmatprep.subr.mxu0 0.0
    %174 = vmatpush1.msra.mxu0 %v151
    %175 = vmatprep.subr.mxu0 0.0
    %176 = vmatpush1.msra.mxu0 0.0
    %177 = vmatprep.subr.mxu0 0.0
    %178 = vmatpush1.msra.mxu0 0.0
    %179 = vmatprep.subr.mxu0 0.0
    %180 = vmatpush1.msra.mxu0 0.0
    %181 = vmatprep.subr.mxu0 0.0
    %182 = vmatpush1.msra.mxu0 0.0
    %183 = vmatprep.subr.mxu0 0.0
    %184 = vmatpush1.msra.mxu0 0.0
    %185 = vmatprep.subr.mxu0 0.0
    %186 = vmatpush1.msra.mxu0 0.0
    %187 = vmatprep.subr.mxu0 0.0
    %188 = vmatpush1.msra.mxu0 0.0
    %189 = vmatprep.subr.mxu0 0.0
    %190 = vmatpush1.msra.mxu0 0.0
    %191 = vmatprep.subr.mxu0 0.0
    %192 = vmatpush1.msra.mxu0 0.0
    %193 = vmatprep.subr.mxu0 0.0
    %194 = vmatpush1.msra.mxu0 0.0
    %195 = vmatprep.subr.mxu0 0.0
    %196 = vmatpush1.msra.mxu0 0.0
    %197 = vmatprep.subr.mxu0 0.0
    %198 = vmatpush1.msra.mxu0 0.0
    %199 = vmatprep.subr.mxu0 0.0
    %200 = vmatpush1.msra.mxu0 0.0
    %201 = vmatprep.subr.mxu0 0.0
    %202 = vmatpush1.msra.mxu0 0.0
    %203 = vmatprep.subr.mxu0 0.0
    %204 = vmatpush1.msra.mxu0 0.0
    %205 = vmatprep.subr.mxu0 0.0
    %206 = vmatpush1.msra.mxu0 0.0
    %207 = vmatprep.subr.mxu0 0.0
    %208 = vmatpush1.msra.mxu0 0.0
    %209 = vmatprep.subr.mxu0 0.0
    %210 = vmatpush1.msra.mxu0 0.0
    %211 = vmatprep.subr.mxu0 0.0
    %212 = vmatpush1.msra.mxu0 0.0
    %213 = vmatprep.subr.mxu0 0.0
    %214 = vmatpush1.msra.mxu0 0.0
    %215 = vmatprep.subr.mxu0 0.0
    %216 = vmatpush1.msra.mxu0 0.0
    %217 = vmatprep.subr.mxu0 0.0
    %218 = vmatpush1.msra.mxu0 0.0
    %219 = vmatprep.subr.mxu0 0.0
    %220 = vmatpush1.msra.mxu0 0.0
    %221 = vmatprep.subr.mxu0 0.0
    %222 = vmatpush1.msra.mxu0 0.0
    %223 = vmatprep.mubr.f32.mxu0 0.0
    %224 = vmatmul.mubr.f32.gmra.mrb[0].mxu0 %v61
    %v225 = vpop.f32.mrb[0].mxu0
    %v226 = vadd.f32 %v157, %v225
    %v227 = vpop.f32.mrb[0].mxu0
    %228 = vmatprep.mubr.f32.mxu0 0.0
    %229 = vmatmul.mubr.f32.gmra.mrb[0].mxu0 %v64
    %v230 = vpop.f32.mrb[0].mxu0
    %v231 = vadd.f32 %v157, %v230
    %v232 = vpop.f32.mrb[0].mxu0
    %233 = vdwg.mxu0
    %234 = vst.msk [vmem:[#allocation3] sm:$0xff] %vm141, %v226
    %235 = vst.msk [vmem:[#allocation3 + $0x8] sm:$0xff] %vm141, %v231
    %v236 = vld [vmem:[%s2] sm:$0xff]
    %v237 = vld [vmem:[%s2 + $0x8] sm:$0xff]
    %v238 = vld [vmem:[%s2 + $0x10] sm:$0xff]
    %v239 = vld [vmem:[%s2 + $0x18] sm:$0xff]
    %v240 = vld [vmem:[%s4] sm:$0x1]
    %v241 = vld [vmem:[%s6] sm:$0xff]
    %v242 = vld [vmem:[%s6 + $0x8] sm:$0xff]
    %v243 = vld [vmem:[%s6 + $0x10] sm:$0xff]
    %v244 = vld [vmem:[%s6 + $0x18] sm:$0xff]
    %v245 = vld [vmem:[%s8] sm:$0x1]
    %v246 = vld [vmem:[#allocation2] sm:$0x3]
    %v248 = vlaneseq
    %v249 = vshrl.u32 %v248, 7
    %v250 = vsub.s32 0, %v249
    %v251 = vrot.slane %v240, %v250
    %vm253 = vcmask 261120
    %v255 = vsel %vm253, 0.0, 0
    %257 = vmatprep.subr.mxu0 0.0
    %258 = vmatpush1.msra.mxu0 %v236
    %259 = vmatprep.subr.mxu0 0.0
    %260 = vmatpush1.msra.mxu0 %v237
    %261 = vmatprep.subr.mxu0 0.0
    %262 = vmatpush1.msra.mxu0 %v238
    %263 = vmatprep.subr.mxu0 0.0
    %264 = vmatpush1.msra.mxu0 %v239
    %265 = vmatprep.subr.mxu0 0.0
    %266 = vmatpush1.msra.mxu0 0.0
    %267 = vmatprep.subr.mxu0 0.0
    %268 = vmatpush1.msra.mxu0 0.0
    %269 = vmatprep.subr.mxu0 0.0
    %270 = vmatpush1.msra.mxu0 0.0
    %271 = vmatprep.subr.mxu0 0.0
    %272 = vmatpush1.msra.mxu0 0.0
    %273 = vmatprep.subr.mxu0 0.0
    %274 = vmatpush1.msra.mxu0 0.0
    %275 = vmatprep.subr.mxu0 0.0
    %276 = vmatpush1.msra.mxu0 0.0
    %277 = vmatprep.subr.mxu0 0.0
    %278 = vmatpush1.msra.mxu0 0.0
    %279 = vmatprep.subr.mxu0 0.0
    %280 = vmatpush1.msra.mxu0 0.0
    %281 = vmatprep.subr.mxu0 0.0
    %282 = vmatpush1.msra.mxu0 0.0
    %283 = vmatprep.subr.mxu0 0.0
    %284 = vmatpush1.msra.mxu0 0.0
    %285 = vmatprep.subr.mxu0 0.0
    %286 = vmatpush1.msra.mxu0 0.0
    %287 = vmatprep.subr.mxu0 0.0
    %288 = vmatpush1.msra.mxu0 0.0
    %289 = vmatprep.subr.mxu0 0.0
    %290 = vmatpush1.msra.mxu0 0.0
    %291 = vmatprep.subr.mxu0 0.0
    %292 = vmatpush1.msra.mxu0 0.0
    %293 = vmatprep.subr.mxu0 0.0
    %294 = vmatpush1.msra.mxu0 0.0
    %295 = vmatprep.subr.mxu0 0.0
    %296 = vmatpush1.msra.mxu0 0.0
    %297 = vmatprep.subr.mxu0 0.0
    %298 = vmatpush1.msra.mxu0 0.0
    %299 = vmatprep.subr.mxu0 0.0
    %300 = vmatpush1.msra.mxu0 0.0
    %301 = vmatprep.subr.mxu0 0.0
    %302 = vmatpush1.msra.mxu0 0.0
    %303 = vmatprep.subr.mxu0 0.0
    %304 = vmatpush1.msra.mxu0 0.0
    %305 = vmatprep.subr.mxu0 0.0
    %306 = vmatpush1.msra.mxu0 0.0
    %307 = vmatprep.subr.mxu0 0.0
    %308 = vmatpush1.msra.mxu0 0.0
    %309 = vmatprep.subr.mxu0 0.0
    %310 = vmatpush1.msra.mxu0 0.0
    %311 = vmatprep.subr.mxu0 0.0
    %312 = vmatpush1.msra.mxu0 0.0
    %313 = vmatprep.subr.mxu0 0.0
    %314 = vmatpush1.msra.mxu0 0.0
    %315 = vmatprep.subr.mxu0 0.0
    %316 = vmatpush1.msra.mxu0 0.0
    %317 = vmatprep.subr.mxu0 0.0
    %318 = vmatpush1.msra.mxu0 0.0
    %319 = vmatprep.subr.mxu0 0.0
    %320 = vmatpush1.msra.mxu0 0.0
    %321 = vmatprep.mubr.f32.mxu0 0.0
    %322 = vmatmul.mubr.f32.gmra.mrb[0].mxu0 %v255
    %v323 = vpop.f32.mrb[0].mxu0
    %v324 = vadd.f32 %v251, %v323
    %v325 = vpop.f32.mrb[0].mxu0
    %326 = vdwg.mxu0
    %v327 = vadd.f32 %v246, %v324
    %v328 = vxor.u32 %v327, 2147483648
    %v329 = vmul.f32 %v328, 1.442695
    %v330 = vpow.pop %v329
    %v331 = vadd.f32 %v330, 1.0
    %v332 = vrcp.pop %v331
    %v333 = vmul.f32 1.0, %v332
    %335 = vrot.lane.b32.xlu0 %v324, 64
    %v336 = vpop.permute.xlu0 %335
    %v338 = vmul.f32 %v333, %v336
    %340 = vrot.lane.b32.xlu0 %v338, 64
    %v341 = vpop.permute.xlu0 %340
    %v343 = vadd.f32 %v246, %v341
    %v344 = vtanh.pop %v343
    %v345 = vsub.f32 1.0, %v333
    %347 = vrot.lane.b32.xlu0 %v344, 96
    %v348 = vpop.permute.xlu0 %347
    %v350 = vmul.f32 %v345, %v348
    %v351 = vmul.f32 %v333, 0.0
    %v352 = vadd.f32 %v350, %v351
    %v353 = vld [vmem:[#allocation3 + $0xe] sm:$0x3]
    %v355 = vlaneseq
    %v356 = vshrl.u32 %v355, 7
    %v357 = vsub.s32 0, %v356
    %v358 = vrot.slane %v245, %v357
    %360 = vmatprep.subr.mxu0 0.0
    %361 = vmatpush1.msra.mxu0 %v241
    %362 = vmatprep.subr.mxu0 0.0
    %363 = vmatpush1.msra.mxu0 %v242
    %364 = vmatprep.subr.mxu0 0.0
    %365 = vmatpush1.msra.mxu0 %v243
    %366 = vmatprep.subr.mxu0 0.0
    %367 = vmatpush1.msra.mxu0 %v244
    %368 = vmatprep.subr.mxu0 0.0
    %369 = vmatpush1.msra.mxu0 0.0
    %370 = vmatprep.subr.mxu0 0.0
    %371 = vmatpush1.msra.mxu0 0.0
    %372 = vmatprep.subr.mxu0 0.0
    %373 = vmatpush1.msra.mxu0 0.0
    %374 = vmatprep.subr.mxu0 0.0
    %375 = vmatpush1.msra.mxu0 0.0
    %376 = vmatprep.subr.mxu0 0.0
    %377 = vmatpush1.msra.mxu0 0.0
    %378 = vmatprep.subr.mxu0 0.0
    %379 = vmatpush1.msra.mxu0 0.0
    %380 = vmatprep.subr.mxu0 0.0
    %381 = vmatpush1.msra.mxu0 0.0
    %382 = vmatprep.subr.mxu0 0.0
    %383 = vmatpush1.msra.mxu0 0.0
    %384 = vmatprep.subr.mxu0 0.0
    %385 = vmatpush1.msra.mxu0 0.0
    %386 = vmatprep.subr.mxu0 0.0
    %387 = vmatpush1.msra.mxu0 0.0
    %388 = vmatprep.subr.mxu0 0.0
    %389 = vmatpush1.msra.mxu0 0.0
    %390 = vmatprep.subr.mxu0 0.0
    %391 = vmatpush1.msra.mxu0 0.0
    %392 = vmatprep.subr.mxu0 0.0
    %393 = vmatpush1.msra.mxu0 0.0
    %394 = vmatprep.subr.mxu0 0.0
    %395 = vmatpush1.msra.mxu0 0.0
    %396 = vmatprep.subr.mxu0 0.0
    %397 = vmatpush1.msra.mxu0 0.0
    %398 = vmatprep.subr.mxu0 0.0
    %399 = vmatpush1.msra.mxu0 0.0
    %400 = vmatprep.subr.mxu0 0.0
    %401 = vmatpush1.msra.mxu0 0.0
    %402 = vmatprep.subr.mxu0 0.0
    %403 = vmatpush1.msra.mxu0 0.0
    %404 = vmatprep.subr.mxu0 0.0
    %405 = vmatpush1.msra.mxu0 0.0
    %406 = vmatprep.subr.mxu0 0.0
    %407 = vmatpush1.msra.mxu0 0.0
    %408 = vmatprep.subr.mxu0 0.0
    %409 = vmatpush1.msra.mxu0 0.0
    %410 = vmatprep.subr.mxu0 0.0
    %411 = vmatpush1.msra.mxu0 0.0
    %412 = vmatprep.subr.mxu0 0.0
    %413 = vmatpush1.msra.mxu0 0.0
    %414 = vmatprep.subr.mxu0 0.0
    %415 = vmatpush1.msra.mxu0 0.0
    %416 = vmatprep.subr.mxu0 0.0
    %417 = vmatpush1.msra.mxu0 0.0
    %418 = vmatprep.subr.mxu0 0.0
    %419 = vmatpush1.msra.mxu0 0.0
    %420 = vmatprep.subr.mxu0 0.0
    %421 = vmatpush1.msra.mxu0 0.0
    %422 = vmatprep.subr.mxu0 0.0
    %423 = vmatpush1.msra.mxu0 0.0
    %424 = vmatprep.mubr.f32.mxu0 0.0
    %425 = vmatmul.mubr.f32.gmra.mrb[0].mxu0 %v255
    %v426 = vpop.f32.mrb[0].mxu0
    %v427 = vadd.f32 %v358, %v426
    %v428 = vpop.f32.mrb[0].mxu0
    %429 = vdwg.mxu0
    %v430 = vadd.f32 %v353, %v427
    %v431 = vxor.u32 %v430, 2147483648
    %v432 = vmul.f32 %v431, 1.442695
    %v433 = vpow.pop %v432
    %v434 = vadd.f32 %v433, 1.0
    %v435 = vrcp.pop %v434
    %v436 = vmul.f32 1.0, %v435
    %438 = vrot.lane.b32.xlu0 %v427, 64
    %v439 = vpop.permute.xlu0 %438
    %v441 = vmul.f32 %v436, %v439
    %443 = vrot.lane.b32.xlu0 %v441, 64
    %v444 = vpop.permute.xlu0 %443
    %v446 = vadd.f32 %v353, %v444
    %v447 = vtanh.pop %v446
    %v448 = vsub.f32 1.0, %v436
    %450 = vrot.lane.b32.xlu0 %v447, 96
    %v451 = vpop.permute.xlu0 %450
    %v453 = vmul.f32 %v448, %v451
    %v454 = vmul.f32 %v436, 0.0
    %v455 = vadd.f32 %v453, %v454
    %457 = vrot.lane.b32.xlu0 %v352, 96
    %v458 = vpop.permute.xlu0 %457
    %vm460 = vcmask 254976
    %461 = vst.msk [vmem:[#allocation4] sm:$0x3] %vm460, %v458
    %s462 = scalar_lea.vmem [#allocation4], 14
    %vm463 = vcmask 517376
    %464 = vst.msk [vmem:[%s462] sm:$0x3] %vm463, %v455
    %v465 = vld [vmem:[#allocation2 + $0x2] sm:$0x3]
    %v466 = vsel %vm253, %v458, 0
    %468 = vmatprep.subr.mxu0 0.0
    %469 = vmatpush1.msra.mxu0 %v236
    %470 = vmatprep.subr.mxu0 0.0
    %471 = vmatpush1.msra.mxu0 %v237
    %472 = vmatprep.subr.mxu0 0.0
    %473 = vmatpush1.msra.mxu0 %v238
    %474 = vmatprep.subr.mxu0 0.0
    %475 = vmatpush1.msra.mxu0 %v239
    %476 = vmatprep.subr.mxu0 0.0
    %477 = vmatpush1.msra.mxu0 0.0
    %478 = vmatprep.subr.mxu0 0.0
    %479 = vmatpush1.msra.mxu0 0.0
    %480 = vmatprep.subr.mxu0 0.0
    %481 = vmatpush1.msra.mxu0 0.0
    %482 = vmatprep.subr.mxu0 0.0
    %483 = vmatpush1.msra.mxu0 0.0
    %484 = vmatprep.subr.mxu0 0.0
    %485 = vmatpush1.msra.mxu0 0.0
    %486 = vmatprep.subr.mxu0 0.0
    %487 = vmatpush1.msra.mxu0 0.0
    %488 = vmatprep.subr.mxu0 0.0
    %489 = vmatpush1.msra.mxu0 0.0
    %490 = vmatprep.subr.mxu0 0.0
    %491 = vmatpush1.msra.mxu0 0.0
    %492 = vmatprep.subr.mxu0 0.0
    %493 = vmatpush1.msra.mxu0 0.0
    %494 = vmatprep.subr.mxu0 0.0
    %495 = vmatpush1.msra.mxu0 0.0
    %496 = vmatprep.subr.mxu0 0.0
    %497 = vmatpush1.msra.mxu0 0.0
    %498 = vmatprep.subr.mxu0 0.0
    %499 = vmatpush1.msra.mxu0 0.0
    %500 = vmatprep.subr.mxu0 0.0
    %501 = vmatpush1.msra.mxu0 0.0
    %502 = vmatprep.subr.mxu0 0.0
    %503 = vmatpush1.msra.mxu0 0.0
    %504 = vmatprep.subr.mxu0 0.0
    %505 = vmatpush1.msra.mxu0 0.0
    %506 = vmatprep.subr.mxu0 0.0
    %507 = vmatpush1.msra.mxu0 0.0
    %508 = vmatprep.subr.mxu0 0.0
    %509 = vmatpush1.msra.mxu0 0.0
    %510 = vmatprep.subr.mxu0 0.0
    %511 = vmatpush1.msra.mxu0 0.0
    %512 = vmatprep.subr.mxu0 0.0
    %513 = vmatpush1.msra.mxu0 0.0
    %514 = vmatprep.subr.mxu0 0.0
    %515 = vmatpush1.msra.mxu0 0.0
    %516 = vmatprep.subr.mxu0 0.0
    %517 = vmatpush1.msra.mxu0 0.0
    %518 = vmatprep.subr.mxu0 0.0
    %519 = vmatpush1.msra.mxu0 0.0
    %520 = vmatprep.subr.mxu0 0.0
    %521 = vmatpush1.msra.mxu0 0.0
    %522 = vmatprep.subr.mxu0 0.0
    %523 = vmatpush1.msra.mxu0 0.0
    %524 = vmatprep.subr.mxu0 0.0
    %525 = vmatpush1.msra.mxu0 0.0
    %526 = vmatprep.subr.mxu0 0.0
    %527 = vmatpush1.msra.mxu0 0.0
    %528 = vmatprep.subr.mxu0 0.0
    %529 = vmatpush1.msra.mxu0 0.0
    %530 = vmatprep.subr.mxu0 0.0
    %531 = vmatpush1.msra.mxu0 0.0
    %532 = vmatprep.mubr.f32.mxu0 0.0
    %533 = vmatmul.mubr.f32.gmra.mrb[0].mxu0 %v466
    %v534 = vpop.f32.mrb[0].mxu0
    %v535 = vadd.f32 %v251, %v534
    %v536 = vpop.f32.mrb[0].mxu0
    %537 = vdwg.mxu0
    %v538 = vadd.f32 %v465, %v535
    %v539 = vxor.u32 %v538, 2147483648
    %v540 = vmul.f32 %v539, 1.442695
    %v541 = vpow.pop %v540
    %v542 = vadd.f32 %v541, 1.0
    %v543 = vrcp.pop %v542
    %v544 = vmul.f32 1.0, %v543
    %546 = vrot.lane.b32.xlu0 %v535, 64
    %v547 = vpop.permute.xlu0 %546
    %v549 = vmul.f32 %v544, %v547
    %551 = vrot.lane.b32.xlu0 %v549, 64
    %v552 = vpop.permute.xlu0 %551
    %v554 = vadd.f32 %v465, %v552
    %v555 = vtanh.pop %v554
    %v556 = vsub.f32 1.0, %v544
    %558 = vrot.lane.b32.xlu0 %v555, 96
    %v559 = vpop.permute.xlu0 %558
    %v561 = vmul.f32 %v556, %v559
    %v562 = vmul.f32 %v544, %v352
    %v563 = vadd.f32 %v561, %v562
    %v564 = vld [vmem:[#allocation3 + $0xc] sm:$0x3]
    %566 = vrot.lane.b32.xlu0 %v455, 96
    %v567 = vpop.permute.xlu0 %566
    %v568 = vsel %vm253, %v567, 0
    %570 = vmatprep.subr.mxu0 0.0
    %571 = vmatpush1.msra.mxu0 %v241
    %572 = vmatprep.subr.mxu0 0.0
    %573 = vmatpush1.msra.mxu0 %v242
    %574 = vmatprep.subr.mxu0 0.0
    %575 = vmatpush1.msra.mxu0 %v243
    %576 = vmatprep.subr.mxu0 0.0
    %577 = vmatpush1.msra.mxu0 %v244
    %578 = vmatprep.subr.mxu0 0.0
    %579 = vmatpush1.msra.mxu0 0.0
    %580 = vmatprep.subr.mxu0 0.0
    %581 = vmatpush1.msra.mxu0 0.0
    %582 = vmatprep.subr.mxu0 0.0
    %583 = vmatpush1.msra.mxu0 0.0
    %584 = vmatprep.subr.mxu0 0.0
    %585 = vmatpush1.msra.mxu0 0.0
    %586 = vmatprep.subr.mxu0 0.0
    %587 = vmatpush1.msra.mxu0 0.0
    %588 = vmatprep.subr.mxu0 0.0
    %589 = vmatpush1.msra.mxu0 0.0
    %590 = vmatprep.subr.mxu0 0.0
    %591 = vmatpush1.msra.mxu0 0.0
    %592 = vmatprep.subr.mxu0 0.0
    %593 = vmatpush1.msra.mxu0 0.0
    %594 = vmatprep.subr.mxu0 0.0
    %595 = vmatpush1.msra.mxu0 0.0
    %596 = vmatprep.subr.mxu0 0.0
    %597 = vmatpush1.msra.mxu0 0.0
    %598 = vmatprep.subr.mxu0 0.0
    %599 = vmatpush1.msra.mxu0 0.0
    %600 = vmatprep.subr.mxu0 0.0
    %601 = vmatpush1.msra.mxu0 0.0
    %602 = vmatprep.subr.mxu0 0.0
    %603 = vmatpush1.msra.mxu0 0.0
    %604 = vmatprep.subr.mxu0 0.0
    %605 = vmatpush1.msra.mxu0 0.0
    %606 = vmatprep.subr.mxu0 0.0
    %607 = vmatpush1.msra.mxu0 0.0
    %608 = vmatprep.subr.mxu0 0.0
    %609 = vmatpush1.msra.mxu0 0.0
    %610 = vmatprep.subr.mxu0 0.0
    %611 = vmatpush1.msra.mxu0 0.0
    %612 = vmatprep.subr.mxu0 0.0
    %613 = vmatpush1.msra.mxu0 0.0
    %614 = vmatprep.subr.mxu0 0.0
    %615 = vmatpush1.msra.mxu0 0.0
    %616 = vmatprep.subr.mxu0 0.0
    %617 = vmatpush1.msra.mxu0 0.0
    %618 = vmatprep.subr.mxu0 0.0
    %619 = vmatpush1.msra.mxu0 0.0
    %620 = vmatprep.subr.mxu0 0.0
    %621 = vmatpush1.msra.mxu0 0.0
    %622 = vmatprep.subr.mxu0 0.0
    %623 = vmatpush1.msra.mxu0 0.0
    %624 = vmatprep.subr.mxu0 0.0
    %625 = vmatpush1.msra.mxu0 0.0
    %626 = vmatprep.subr.mxu0 0.0
    %627 = vmatpush1.msra.mxu0 0.0
    %628 = vmatprep.subr.mxu0 0.0
    %629 = vmatpush1.msra.mxu0 0.0
    %630 = vmatprep.subr.mxu0 0.0
    %631 = vmatpush1.msra.mxu0 0.0
    %632 = vmatprep.subr.mxu0 0.0
    %633 = vmatpush1.msra.mxu0 0.0
    %634 = vmatprep.mubr.f32.mxu0 0.0
    %635 = vmatmul.mubr.f32.gmra.mrb[0].mxu0 %v568
    %v636 = vpop.f32.mrb[0].mxu0
    %v637 = vadd.f32 %v358, %v636
    %v638 = vpop.f32.mrb[0].mxu0
    %639 = vdwg.mxu0
    %v640 = vadd.f32 %v564, %v637
    %v641 = vxor.u32 %v640, 2147483648
    %v642 = vmul.f32 %v641, 1.442695
    %v643 = vpow.pop %v642
    %v644 = vadd.f32 %v643, 1.0
    %v645 = vrcp.pop %v644
    %v646 = vmul.f32 1.0, %v645
    %648 = vrot.lane.b32.xlu0 %v637, 64
    %v649 = vpop.permute.xlu0 %648
    %v651 = vmul.f32 %v646, %v649
    %653 = vrot.lane.b32.xlu0 %v651, 64
    %v654 = vpop.permute.xlu0 %653
    %v656 = vadd.f32 %v564, %v654
    %v657 = vtanh.pop %v656
    %v658 = vsub.f32 1.0, %v646
    %660 = vrot.lane.b32.xlu0 %v657, 96
    %v661 = vpop.permute.xlu0 %660
    %v663 = vmul.f32 %v658, %v661
    %v664 = vmul.f32 %v646, %v455
    %v665 = vadd.f32 %v663, %v664
    %667 = vrot.lane.b32.xlu0 %v563, 96
    %v668 = vpop.permute.xlu0 %667
    %s670 = scalar_lea.vmem [#allocation4], 2
    %671 = vst.msk [vmem:[%s670] sm:$0x3] %vm460, %v668
    %s672 = scalar_lea.vmem [#allocation4], 12
    %673 = vst.msk [vmem:[%s672] sm:$0x3] %vm463, %v665
    %v674 = vld [vmem:[#allocation2 + $0x4] sm:$0x3]
    %v675 = vsel %vm253, %v668, 0
    %677 = vmatprep.subr.mxu0 0.0
    %678 = vmatpush1.msra.mxu0 %v236
    %679 = vmatprep.subr.mxu0 0.0
    %680 = vmatpush1.msra.mxu0 %v237
    %681 = vmatprep.subr.mxu0 0.0
    %682 = vmatpush1.msra.mxu0 %v238
    %683 = vmatprep.subr.mxu0 0.0
    %684 = vmatpush1.msra.mxu0 %v239
    %685 = vmatprep.subr.mxu0 0.0
    %686 = vmatpush1.msra.mxu0 0.0
    %687 = vmatprep.subr.mxu0 0.0
    %688 = vmatpush1.msra.mxu0 0.0
    %689 = vmatprep.subr.mxu0 0.0
    %690 = vmatpush1.msra.mxu0 0.0
    %691 = vmatprep.subr.mxu0 0.0
    %692 = vmatpush1.msra.mxu0 0.0
    %693 = vmatprep.subr.mxu0 0.0
    %694 = vmatpush1.msra.mxu0 0.0
    %695 = vmatprep.subr.mxu0 0.0
    %696 = vmatpush1.msra.mxu0 0.0
    %697 = vmatprep.subr.mxu0 0.0
    %698 = vmatpush1.msra.mxu0 0.0
    %699 = vmatprep.subr.mxu0 0.0
    %700 = vmatpush1.msra.mxu0 0.0
    %701 = vmatprep.subr.mxu0 0.0
    %702 = vmatpush1.msra.mxu0 0.0
    %703 = vmatprep.subr.mxu0 0.0
    %704 = vmatpush1.msra.mxu0 0.0
    %705 = vmatprep.subr.mxu0 0.0
    %706 = vmatpush1.msra.mxu0 0.0
    %707 = vmatprep.subr.mxu0 0.0
    %708 = vmatpush1.msra.mxu0 0.0
    %709 = vmatprep.subr.mxu0 0.0
    %710 = vmatpush1.msra.mxu0 0.0
    %711 = vmatprep.subr.mxu0 0.0
    %712 = vmatpush1.msra.mxu0 0.0
    %713 = vmatprep.subr.mxu0 0.0
    %714 = vmatpush1.msra.mxu0 0.0
    %715 = vmatprep.subr.mxu0 0.0
    %716 = vmatpush1.msra.mxu0 0.0
    %717 = vmatprep.subr.mxu0 0.0
    %718 = vmatpush1.msra.mxu0 0.0
    %719 = vmatprep.subr.mxu0 0.0
    %720 = vmatpush1.msra.mxu0 0.0
    %721 = vmatprep.subr.mxu0 0.0
    %722 = vmatpush1.msra.mxu0 0.0
    %723 = vmatprep.subr.mxu0 0.0
    %724 = vmatpush1.msra.mxu0 0.0
    %725 = vmatprep.subr.mxu0 0.0
    %726 = vmatpush1.msra.mxu0 0.0
    %727 = vmatprep.subr.mxu0 0.0
    %728 = vmatpush1.msra.mxu0 0.0
    %729 = vmatprep.subr.mxu0 0.0
    %730 = vmatpush1.msra.mxu0 0.0
    %731 = vmatprep.subr.mxu0 0.0
    %732 = vmatpush1.msra.mxu0 0.0
    %733 = vmatprep.subr.mxu0 0.0
    %734 = vmatpush1.msra.mxu0 0.0
    %735 = vmatprep.subr.mxu0 0.0
    %736 = vmatpush1.msra.mxu0 0.0
    %737 = vmatprep.subr.mxu0 0.0
    %738 = vmatpush1.msra.mxu0 0.0
    %739 = vmatprep.subr.mxu0 0.0
    %740 = vmatpush1.msra.mxu0 0.0
    %741 = vmatprep.mubr.f32.mxu0 0.0
    %742 = vmatmul.mubr.f32.gmra.mrb[0].mxu0 %v675
    %v743 = vpop.f32.mrb[0].mxu0
    %v744 = vadd.f32 %v251, %v743
    %v745 = vpop.f32.mrb[0].mxu0
    %746 = vdwg.mxu0
    %v747 = vadd.f32 %v674, %v744
    %v748 = vxor.u32 %v747, 2147483648
    %v749 = vmul.f32 %v748, 1.442695
    %v750 = vpow.pop %v749
    %v751 = vadd.f32 %v750, 1.0
    %v752 = vrcp.pop %v751
    %v753 = vmul.f32 1.0, %v752
    %755 = vrot.lane.b32.xlu0 %v744, 64
    %v756 = vpop.permute.xlu0 %755
    %v758 = vmul.f32 %v753, %v756
    %760 = vrot.lane.b32.xlu0 %v758, 64
    %v761 = vpop.permute.xlu0 %760
    %v763 = vadd.f32 %v674, %v761
    %v764 = vtanh.pop %v763
    %v765 = vsub.f32 1.0, %v753
    %767 = vrot.lane.b32.xlu0 %v764, 96
    %v768 = vpop.permute.xlu0 %767
    %v770 = vmul.f32 %v765, %v768
    %v771 = vmul.f32 %v753, %v563
    %v772 = vadd.f32 %v770, %v771
    %v773 = vld [vmem:[#allocation3 + $0xa] sm:$0x3]
    %775 = vrot.lane.b32.xlu0 %v665, 96
    %v776 = vpop.permute.xlu0 %775
    %v777 = vsel %vm253, %v776, 0
    %779 = vmatprep.subr.mxu0 0.0
    %780 = vmatpush1.msra.mxu0 %v241
    %781 = vmatprep.subr.mxu0 0.0
    %782 = vmatpush1.msra.mxu0 %v242
    %783 = vmatprep.subr.mxu0 0.0
    %784 = vmatpush1.msra.mxu0 %v243
    %785 = vmatprep.subr.mxu0 0.0
    %786 = vmatpush1.msra.mxu0 %v244
    %787 = vmatprep.subr.mxu0 0.0
    %788 = vmatpush1.msra.mxu0 0.0
    %789 = vmatprep.subr.mxu0 0.0
    %790 = vmatpush1.msra.mxu0 0.0
    %791 = vmatprep.subr.mxu0 0.0
    %792 = vmatpush1.msra.mxu0 0.0
    %793 = vmatprep.subr.mxu0 0.0
    %794 = vmatpush1.msra.mxu0 0.0
    %795 = vmatprep.subr.mxu0 0.0
    %796 = vmatpush1.msra.mxu0 0.0
    %797 = vmatprep.subr.mxu0 0.0
    %798 = vmatpush1.msra.mxu0 0.0
    %799 = vmatprep.subr.mxu0 0.0
    %800 = vmatpush1.msra.mxu0 0.0
    %801 = vmatprep.subr.mxu0 0.0
    %802 = vmatpush1.msra.mxu0 0.0
    %803 = vmatprep.subr.mxu0 0.0
    %804 = vmatpush1.msra.mxu0 0.0
    %805 = vmatprep.subr.mxu0 0.0
    %806 = vmatpush1.msra.mxu0 0.0
    %807 = vmatprep.subr.mxu0 0.0
    %808 = vmatpush1.msra.mxu0 0.0
    %809 = vmatprep.subr.mxu0 0.0
    %810 = vmatpush1.msra.mxu0 0.0
    %811 = vmatprep.subr.mxu0 0.0
    %812 = vmatpush1.msra.mxu0 0.0
    %813 = vmatprep.subr.mxu0 0.0
    %814 = vmatpush1.msra.mxu0 0.0
    %815 = vmatprep.subr.mxu0 0.0
    %816 = vmatpush1.msra.mxu0 0.0
    %817 = vmatprep.subr.mxu0 0.0
    %818 = vmatpush1.msra.mxu0 0.0
    %819 = vmatprep.subr.mxu0 0.0
    %820 = vmatpush1.msra.mxu0 0.0
    %821 = vmatprep.subr.mxu0 0.0
    %822 = vmatpush1.msra.mxu0 0.0
    %823 = vmatprep.subr.mxu0 0.0
    %824 = vmatpush1.msra.mxu0 0.0
    %825 = vmatprep.subr.mxu0 0.0
    %826 = vmatpush1.msra.mxu0 0.0
    %827 = vmatprep.subr.mxu0 0.0
    %828 = vmatpush1.msra.mxu0 0.0
    %829 = vmatprep.subr.mxu0 0.0
    %830 = vmatpush1.msra.mxu0 0.0
    %831 = vmatprep.subr.mxu0 0.0
    %832 = vmatpush1.msra.mxu0 0.0
    %833 = vmatprep.subr.mxu0 0.0
    %834 = vmatpush1.msra.mxu0 0.0
    %835 = vmatprep.subr.mxu0 0.0
    %836 = vmatpush1.msra.mxu0 0.0
    %837 = vmatprep.subr.mxu0 0.0
    %838 = vmatpush1.msra.mxu0 0.0
    %839 = vmatprep.subr.mxu0 0.0
    %840 = vmatpush1.msra.mxu0 0.0
    %841 = vmatprep.subr.mxu0 0.0
    %842 = vmatpush1.msra.mxu0 0.0
    %843 = vmatprep.mubr.f32.mxu0 0.0
    %844 = vmatmul.mubr.f32.gmra.mrb[0].mxu0 %v777
    %v845 = vpop.f32.mrb[0].mxu0
    %v846 = vadd.f32 %v358, %v845
    %v847 = vpop.f32.mrb[0].mxu0
    %848 = vdwg.mxu0
    %v849 = vadd.f32 %v773, %v846
    %v850 = vxor.u32 %v849, 2147483648
    %v851 = vmul.f32 %v850, 1.442695
    %v852 = vpow.pop %v851
    %v853 = vadd.f32 %v852, 1.0
    %v854 = vrcp.pop %v853
    %v855 = vmul.f32 1.0, %v854
    %857 = vrot.lane.b32.xlu0 %v846, 64
    %v858 = vpop.permute.xlu0 %857
    %v860 = vmul.f32 %v855, %v858
    %862 = vrot.lane.b32.xlu0 %v860, 64
    %v863 = vpop.permute.xlu0 %862
    %v865 = vadd.f32 %v773, %v863
    %v866 = vtanh.pop %v865
    %v867 = vsub.f32 1.0, %v855
    %869 = vrot.lane.b32.xlu0 %v866, 96
    %v870 = vpop.permute.xlu0 %869
    %v872 = vmul.f32 %v867, %v870
    %v873 = vmul.f32 %v855, %v665
    %v874 = vadd.f32 %v872, %v873
    %876 = vrot.lane.b32.xlu0 %v772, 96
    %v877 = vpop.permute.xlu0 %876
    %s879 = scalar_lea.vmem [#allocation4], 4
    %880 = vst.msk [vmem:[%s879] sm:$0x3] %vm460, %v877
    %s881 = scalar_lea.vmem [#allocation4], 10
    %882 = vst.msk [vmem:[%s881] sm:$0x3] %vm463, %v874
    %v883 = vld [vmem:[#allocation2 + $0x6] sm:$0x3]
    %v884 = vsel %vm253, %v877, 0
    %886 = vmatprep.subr.mxu0 0.0
    %887 = vmatpush1.msra.mxu0 %v236
    %888 = vmatprep.subr.mxu0 0.0
    %889 = vmatpush1.msra.mxu0 %v237
    %890 = vmatprep.subr.mxu0 0.0
    %891 = vmatpush1.msra.mxu0 %v238
    %892 = vmatprep.subr.mxu0 0.0
    %893 = vmatpush1.msra.mxu0 %v239
    %894 = vmatprep.subr.mxu0 0.0
    %895 = vmatpush1.msra.mxu0 0.0
    %896 = vmatprep.subr.mxu0 0.0
    %897 = vmatpush1.msra.mxu0 0.0
    %898 = vmatprep.subr.mxu0 0.0
    %899 = vmatpush1.msra.mxu0 0.0
    %900 = vmatprep.subr.mxu0 0.0
    %901 = vmatpush1.msra.mxu0 0.0
    %902 = vmatprep.subr.mxu0 0.0
    %903 = vmatpush1.msra.mxu0 0.0
    %904 = vmatprep.subr.mxu0 0.0
    %905 = vmatpush1.msra.mxu0 0.0
    %906 = vmatprep.subr.mxu0 0.0
    %907 = vmatpush1.msra.mxu0 0.0
    %908 = vmatprep.subr.mxu0 0.0
    %909 = vmatpush1.msra.mxu0 0.0
    %910 = vmatprep.subr.mxu0 0.0
    %911 = vmatpush1.msra.mxu0 0.0
    %912 = vmatprep.subr.mxu0 0.0
    %913 = vmatpush1.msra.mxu0 0.0
    %914 = vmatprep.subr.mxu0 0.0
    %915 = vmatpush1.msra.mxu0 0.0
    %916 = vmatprep.subr.mxu0 0.0
    %917 = vmatpush1.msra.mxu0 0.0
    %918 = vmatprep.subr.mxu0 0.0
    %919 = vmatpush1.msra.mxu0 0.0
    %920 = vmatprep.subr.mxu0 0.0
    %921 = vmatpush1.msra.mxu0 0.0
    %922 = vmatprep.subr.mxu0 0.0
    %923 = vmatpush1.msra.mxu0 0.0
    %924 = vmatprep.subr.mxu0 0.0
    %925 = vmatpush1.msra.mxu0 0.0
    %926 = vmatprep.subr.mxu0 0.0
    %927 = vmatpush1.msra.mxu0 0.0
    %928 = vmatprep.subr.mxu0 0.0
    %929 = vmatpush1.msra.mxu0 0.0
    %930 = vmatprep.subr.mxu0 0.0
    %931 = vmatpush1.msra.mxu0 0.0
    %932 = vmatprep.subr.mxu0 0.0
    %933 = vmatpush1.msra.mxu0 0.0
    %934 = vmatprep.subr.mxu0 0.0
    %935 = vmatpush1.msra.mxu0 0.0
    %936 = vmatprep.subr.mxu0 0.0
    %937 = vmatpush1.msra.mxu0 0.0
    %938 = vmatprep.subr.mxu0 0.0
    %939 = vmatpush1.msra.mxu0 0.0
    %940 = vmatprep.subr.mxu0 0.0
    %941 = vmatpush1.msra.mxu0 0.0
    %942 = vmatprep.subr.mxu0 0.0
    %943 = vmatpush1.msra.mxu0 0.0
    %944 = vmatprep.subr.mxu0 0.0
    %945 = vmatpush1.msra.mxu0 0.0
    %946 = vmatprep.subr.mxu0 0.0
    %947 = vmatpush1.msra.mxu0 0.0
    %948 = vmatprep.subr.mxu0 0.0
    %949 = vmatpush1.msra.mxu0 0.0
    %950 = vmatprep.mubr.f32.mxu0 0.0
    %951 = vmatmul.mubr.f32.gmra.mrb[0].mxu0 %v884
    %v952 = vpop.f32.mrb[0].mxu0
    %v953 = vadd.f32 %v251, %v952
    %v954 = vpop.f32.mrb[0].mxu0
    %955 = vdwg.mxu0
    %v956 = vadd.f32 %v883, %v953
    %v957 = vxor.u32 %v956, 2147483648
    %v958 = vmul.f32 %v957, 1.442695
    %v959 = vpow.pop %v958
    %v960 = vadd.f32 %v959, 1.0
    %v961 = vrcp.pop %v960
    %v962 = vmul.f32 1.0, %v961
    %964 = vrot.lane.b32.xlu0 %v953, 64
    %v965 = vpop.permute.xlu0 %964
    %v967 = vmul.f32 %v962, %v965
    %969 = vrot.lane.b32.xlu0 %v967, 64
    %v970 = vpop.permute.xlu0 %969
    %v972 = vadd.f32 %v883, %v970
    %v973 = vtanh.pop %v972
    %v974 = vsub.f32 1.0, %v962
    %976 = vrot.lane.b32.xlu0 %v973, 96
    %v977 = vpop.permute.xlu0 %976
    %v979 = vmul.f32 %v974, %v977
    %v980 = vmul.f32 %v962, %v772
    %v981 = vadd.f32 %v979, %v980
    %v982 = vld [vmem:[#allocation3 + $0x8] sm:$0x3]
    %984 = vrot.lane.b32.xlu0 %v874, 96
    %v985 = vpop.permute.xlu0 %984
    %v986 = vsel %vm253, %v985, 0
    %988 = vmatprep.subr.mxu0 0.0
    %989 = vmatpush1.msra.mxu0 %v241
    %990 = vmatprep.subr.mxu0 0.0
    %991 = vmatpush1.msra.mxu0 %v242
    %992 = vmatprep.subr.mxu0 0.0
    %993 = vmatpush1.msra.mxu0 %v243
    %994 = vmatprep.subr.mxu0 0.0
    %995 = vmatpush1.msra.mxu0 %v244
    %996 = vmatprep.subr.mxu0 0.0
    %997 = vmatpush1.msra.mxu0 0.0
    %998 = vmatprep.subr.mxu0 0.0
    %999 = vmatpush1.msra.mxu0 0.0
    %1000 = vmatprep.subr.mxu0 0.0
    %1001 = vmatpush1.msra.mxu0 0.0
    %1002 = vmatprep.subr.mxu0 0.0
    %1003 = vmatpush1.msra.mxu0 0.0
    %1004 = vmatprep.subr.mxu0 0.0
    %1005 = vmatpush1.msra.mxu0 0.0
    %1006 = vmatprep.subr.mxu0 0.0
    %1007 = vmatpush1.msra.mxu0 0.0
    %1008 = vmatprep.subr.mxu0 0.0
    %1009 = vmatpush1.msra.mxu0 0.0
    %1010 = vmatprep.subr.mxu0 0.0
    %1011 = vmatpush1.msra.mxu0 0.0
    %1012 = vmatprep.subr.mxu0 0.0
    %1013 = vmatpush1.msra.mxu0 0.0
    %1014 = vmatprep.subr.mxu0 0.0
    %1015 = vmatpush1.msra.mxu0 0.0
    %1016 = vmatprep.subr.mxu0 0.0
    %1017 = vmatpush1.msra.mxu0 0.0
    %1018 = vmatprep.subr.mxu0 0.0
    %1019 = vmatpush1.msra.mxu0 0.0
    %1020 = vmatprep.subr.mxu0 0.0
    %1021 = vmatpush1.msra.mxu0 0.0
    %1022 = vmatprep.subr.mxu0 0.0
    %1023 = vmatpush1.msra.mxu0 0.0
    %1024 = vmatprep.subr.mxu0 0.0
    %1025 = vmatpush1.msra.mxu0 0.0
    %1026 = vmatprep.subr.mxu0 0.0
    %1027 = vmatpush1.msra.mxu0 0.0
    %1028 = vmatprep.subr.mxu0 0.0
    %1029 = vmatpush1.msra.mxu0 0.0
    %1030 = vmatprep.subr.mxu0 0.0
    %1031 = vmatpush1.msra.mxu0 0.0
    %1032 = vmatprep.subr.mxu0 0.0
    %1033 = vmatpush1.msra.mxu0 0.0
    %1034 = vmatprep.subr.mxu0 0.0
    %1035 = vmatpush1.msra.mxu0 0.0
    %1036 = vmatprep.subr.mxu0 0.0
    %1037 = vmatpush1.msra.mxu0 0.0
    %1038 = vmatprep.subr.mxu0 0.0
    %1039 = vmatpush1.msra.mxu0 0.0
    %1040 = vmatprep.subr.mxu0 0.0
    %1041 = vmatpush1.msra.mxu0 0.0
    %1042 = vmatprep.subr.mxu0 0.0
    %1043 = vmatpush1.msra.mxu0 0.0
    %1044 = vmatprep.subr.mxu0 0.0
    %1045 = vmatpush1.msra.mxu0 0.0
    %1046 = vmatprep.subr.mxu0 0.0
    %1047 = vmatpush1.msra.mxu0 0.0
    %1048 = vmatprep.subr.mxu0 0.0
    %1049 = vmatpush1.msra.mxu0 0.0
    %1050 = vmatprep.subr.mxu0 0.0
    %1051 = vmatpush1.msra.mxu0 0.0
    %1052 = vmatprep.mubr.f32.mxu0 0.0
    %1053 = vmatmul.mubr.f32.gmra.mrb[0].mxu0 %v986
    %v1054 = vpop.f32.mrb[0].mxu0
    %v1055 = vadd.f32 %v358, %v1054
    %v1056 = vpop.f32.mrb[0].mxu0
    %1057 = vdwg.mxu0
    %v1058 = vadd.f32 %v982, %v1055
    %v1059 = vxor.u32 %v1058, 2147483648
    %v1060 = vmul.f32 %v1059, 1.442695
    %v1061 = vpow.pop %v1060
    %v1062 = vadd.f32 %v1061, 1.0
    %v1063 = vrcp.pop %v1062
    %v1064 = vmul.f32 1.0, %v1063
    %1066 = vrot.lane.b32.xlu0 %v1055, 64
    %v1067 = vpop.permute.xlu0 %1066
    %v1069 = vmul.f32 %v1064, %v1067
    %1071 = vrot.lane.b32.xlu0 %v1069, 64
    %v1072 = vpop.permute.xlu0 %1071
    %v1074 = vadd.f32 %v982, %v1072
    %v1075 = vtanh.pop %v1074
    %v1076 = vsub.f32 1.0, %v1064
    %1078 = vrot.lane.b32.xlu0 %v1075, 96
    %v1079 = vpop.permute.xlu0 %1078
    %v1081 = vmul.f32 %v1076, %v1079
    %v1082 = vmul.f32 %v1064, %v874
    %v1083 = vadd.f32 %v1081, %v1082
    %1085 = vrot.lane.b32.xlu0 %v981, 96
    %v1086 = vpop.permute.xlu0 %1085
    %s1088 = scalar_lea.vmem [#allocation4], 6
    %1089 = vst.msk [vmem:[%s1088] sm:$0x3] %vm460, %v1086
    %s1090 = scalar_lea.vmem [#allocation4], 8
    %1091 = vst.msk [vmem:[%s1090] sm:$0x3] %vm463, %v1083
    %v1092 = vld [vmem:[#allocation2 + $0x8] sm:$0x3]
    %v1093 = vsel %vm253, %v1086, 0
    %1095 = vmatprep.subr.mxu0 0.0
    %1096 = vmatpush1.msra.mxu0 %v236
    %1097 = vmatprep.subr.mxu0 0.0
    %1098 = vmatpush1.msra.mxu0 %v237
    %1099 = vmatprep.subr.mxu0 0.0
    %1100 = vmatpush1.msra.mxu0 %v238
    %1101 = vmatprep.subr.mxu0 0.0
    %1102 = vmatpush1.msra.mxu0 %v239
    %1103 = vmatprep.subr.mxu0 0.0
    %1104 = vmatpush1.msra.mxu0 0.0
    %1105 = vmatprep.subr.mxu0 0.0
    %1106 = vmatpush1.msra.mxu0 0.0
    %1107 = vmatprep.subr.mxu0 0.0
    %1108 = vmatpush1.msra.mxu0 0.0
    %1109 = vmatprep.subr.mxu0 0.0
    %1110 = vmatpush1.msra.mxu0 0.0
    %1111 = vmatprep.subr.mxu0 0.0
    %1112 = vmatpush1.msra.mxu0 0.0
    %1113 = vmatprep.subr.mxu0 0.0
    %1114 = vmatpush1.msra.mxu0 0.0
    %1115 = vmatprep.subr.mxu0 0.0
    %1116 = vmatpush1.msra.mxu0 0.0
    %1117 = vmatprep.subr.mxu0 0.0
    %1118 = vmatpush1.msra.mxu0 0.0
    %1119 = vmatprep.subr.mxu0 0.0
    %1120 = vmatpush1.msra.mxu0 0.0
    %1121 = vmatprep.subr.mxu0 0.0
    %1122 = vmatpush1.msra.mxu0 0.0
    %1123 = vmatprep.subr.mxu0 0.0
    %1124 = vmatpush1.msra.mxu0 0.0
    %1125 = vmatprep.subr.mxu0 0.0
    %1126 = vmatpush1.msra.mxu0 0.0
    %1127 = vmatprep.subr.mxu0 0.0
    %1128 = vmatpush1.msra.mxu0 0.0
    %1129 = vmatprep.subr.mxu0 0.0
    %1130 = vmatpush1.msra.mxu0 0.0
    %1131 = vmatprep.subr.mxu0 0.0
    %1132 = vmatpush1.msra.mxu0 0.0
    %1133 = vmatprep.subr.mxu0 0.0
    %1134 = vmatpush1.msra.mxu0 0.0
    %1135 = vmatprep.subr.mxu0 0.0
    %1136 = vmatpush1.msra.mxu0 0.0
    %1137 = vmatprep.subr.mxu0 0.0
    %1138 = vmatpush1.msra.mxu0 0.0
    %1139 = vmatprep.subr.mxu0 0.0
    %1140 = vmatpush1.msra.mxu0 0.0
    %1141 = vmatprep.subr.mxu0 0.0
    %1142 = vmatpush1.msra.mxu0 0.0
    %1143 = vmatprep.subr.mxu0 0.0
    %1144 = vmatpush1.msra.mxu0 0.0
    %1145 = vmatprep.subr.mxu0 0.0
    %1146 = vmatpush1.msra.mxu0 0.0
    %1147 = vmatprep.subr.mxu0 0.0
    %1148 = vmatpush1.msra.mxu0 0.0
    %1149 = vmatprep.subr.mxu0 0.0
    %1150 = vmatpush1.msra.mxu0 0.0
    %1151 = vmatprep.subr.mxu0 0.0
    %1152 = vmatpush1.msra.mxu0 0.0
    %1153 = vmatprep.subr.mxu0 0.0
    %1154 = vmatpush1.msra.mxu0 0.0
    %1155 = vmatprep.subr.mxu0 0.0
    %1156 = vmatpush1.msra.mxu0 0.0
    %1157 = vmatprep.subr.mxu0 0.0
    %1158 = vmatpush1.msra.mxu0 0.0
    %1159 = vmatprep.mubr.f32.mxu0 0.0
    %1160 = vmatmul.mubr.f32.gmra.mrb[0].mxu0 %v1093
    %v1161 = vpop.f32.mrb[0].mxu0
    %v1162 = vadd.f32 %v251, %v1161
    %v1163 = vpop.f32.mrb[0].mxu0
    %1164 = vdwg.mxu0
    %v1165 = vadd.f32 %v1092, %v1162
    %v1166 = vxor.u32 %v1165, 2147483648
    %v1167 = vmul.f32 %v1166, 1.442695
    %v1168 = vpow.pop %v1167
    %v1169 = vadd.f32 %v1168, 1.0
    %v1170 = vrcp.pop %v1169
    %v1171 = vmul.f32 1.0, %v1170
    %1173 = vrot.lane.b32.xlu0 %v1162, 64
    %v1174 = vpop.permute.xlu0 %1173
    %v1176 = vmul.f32 %v1171, %v1174
    %1178 = vrot.lane.b32.xlu0 %v1176, 64
    %v1179 = vpop.permute.xlu0 %1178
    %v1181 = vadd.f32 %v1092, %v1179
    %v1182 = vtanh.pop %v1181
    %v1183 = vsub.f32 1.0, %v1171
    %1185 = vrot.lane.b32.xlu0 %v1182, 96
    %v1186 = vpop.permute.xlu0 %1185
    %v1188 = vmul.f32 %v1183, %v1186
    %v1189 = vmul.f32 %v1171, %v981
    %v1190 = vadd.f32 %v1188, %v1189
    %v1191 = vld [vmem:[#allocation3 + $0x6] sm:$0x3]
    %1193 = vrot.lane.b32.xlu0 %v1083, 96
    %v1194 = vpop.permute.xlu0 %1193
    %v1195 = vsel %vm253, %v1194, 0
    %1197 = vmatprep.subr.mxu0 0.0
    %1198 = vmatpush1.msra.mxu0 %v241
    %1199 = vmatprep.subr.mxu0 0.0
    %1200 = vmatpush1.msra.mxu0 %v242
    %1201 = vmatprep.subr.mxu0 0.0
    %1202 = vmatpush1.msra.mxu0 %v243
    %1203 = vmatprep.subr.mxu0 0.0
    %1204 = vmatpush1.msra.mxu0 %v244
    %1205 = vmatprep.subr.mxu0 0.0
    %1206 = vmatpush1.msra.mxu0 0.0
    %1207 = vmatprep.subr.mxu0 0.0
    %1208 = vmatpush1.msra.mxu0 0.0
    %1209 = vmatprep.subr.mxu0 0.0
    %1210 = vmatpush1.msra.mxu0 0.0
    %1211 = vmatprep.subr.mxu0 0.0
    %1212 = vmatpush1.msra.mxu0 0.0
    %1213 = vmatprep.subr.mxu0 0.0
    %1214 = vmatpush1.msra.mxu0 0.0
    %1215 = vmatprep.subr.mxu0 0.0
    %1216 = vmatpush1.msra.mxu0 0.0
    %1217 = vmatprep.subr.mxu0 0.0
    %1218 = vmatpush1.msra.mxu0 0.0
    %1219 = vmatprep.subr.mxu0 0.0
    %1220 = vmatpush1.msra.mxu0 0.0
    %1221 = vmatprep.subr.mxu0 0.0
    %1222 = vmatpush1.msra.mxu0 0.0
    %1223 = vmatprep.subr.mxu0 0.0
    %1224 = vmatpush1.msra.mxu0 0.0
    %1225 = vmatprep.subr.mxu0 0.0
    %1226 = vmatpush1.msra.mxu0 0.0
    %1227 = vmatprep.subr.mxu0 0.0
    %1228 = vmatpush1.msra.mxu0 0.0
    %1229 = vmatprep.subr.mxu0 0.0
    %1230 = vmatpush1.msra.mxu0 0.0
    %1231 = vmatprep.subr.mxu0 0.0
    %1232 = vmatpush1.msra.mxu0 0.0
    %1233 = vmatprep.subr.mxu0 0.0
    %1234 = vmatpush1.msra.mxu0 0.0
    %1235 = vmatprep.subr.mxu0 0.0
    %1236 = vmatpush1.msra.mxu0 0.0
    %1237 = vmatprep.subr.mxu0 0.0
    %1238 = vmatpush1.msra.mxu0 0.0
    %1239 = vmatprep.subr.mxu0 0.0
    %1240 = vmatpush1.msra.mxu0 0.0
    %1241 = vmatprep.subr.mxu0 0.0
    %1242 = vmatpush1.msra.mxu0 0.0
    %1243 = vmatprep.subr.mxu0 0.0
    %1244 = vmatpush1.msra.mxu0 0.0
    %1245 = vmatprep.subr.mxu0 0.0
    %1246 = vmatpush1.msra.mxu0 0.0
    %1247 = vmatprep.subr.mxu0 0.0
    %1248 = vmatpush1.msra.mxu0 0.0
    %1249 = vmatprep.subr.mxu0 0.0
    %1250 = vmatpush1.msra.mxu0 0.0
    %1251 = vmatprep.subr.mxu0 0.0
    %1252 = vmatpush1.msra.mxu0 0.0
    %1253 = vmatprep.subr.mxu0 0.0
    %1254 = vmatpush1.msra.mxu0 0.0
    %1255 = vmatprep.subr.mxu0 0.0
    %1256 = vmatpush1.msra.mxu0 0.0
    %1257 = vmatprep.subr.mxu0 0.0
    %1258 = vmatpush1.msra.mxu0 0.0
    %1259 = vmatprep.subr.mxu0 0.0
    %1260 = vmatpush1.msra.mxu0 0.0
    %1261 = vmatprep.mubr.f32.mxu0 0.0
    %1262 = vmatmul.mubr.f32.gmra.mrb[0].mxu0 %v1195
    %v1263 = vpop.f32.mrb[0].mxu0
    %v1264 = vadd.f32 %v358, %v1263
    %v1265 = vpop.f32.mrb[0].mxu0
    %1266 = vdwg.mxu0
    %v1267 = vadd.f32 %v1191, %v1264
    %v1268 = vxor.u32 %v1267, 2147483648
    %v1269 = vmul.f32 %v1268, 1.442695
    %v1270 = vpow.pop %v1269
    %v1271 = vadd.f32 %v1270, 1.0
    %v1272 = vrcp.pop %v1271
    %v1273 = vmul.f32 1.0, %v1272
    %1275 = vrot.lane.b32.xlu0 %v1264, 64
    %v1276 = vpop.permute.xlu0 %1275
    %v1278 = vmul.f32 %v1273, %v1276
    %1280 = vrot.lane.b32.xlu0 %v1278, 64
    %v1281 = vpop.permute.xlu0 %1280
    %v1283 = vadd.f32 %v1191, %v1281
    %v1284 = vtanh.pop %v1283
    %v1285 = vsub.f32 1.0, %v1273
    %1287 = vrot.lane.b32.xlu0 %v1284, 96
    %v1288 = vpop.permute.xlu0 %1287
    %v1290 = vmul.f32 %v1285, %v1288
    %v1291 = vmul.f32 %v1273, %v1083
    %v1292 = vadd.f32 %v1290, %v1291
    %1294 = vrot.lane.b32.xlu0 %v1190, 96
    %v1295 = vpop.permute.xlu0 %1294
    %1297 = vst.msk [vmem:[%s1090] sm:$0x3] %vm460, %v1295
    %1298 = vst.msk [vmem:[%s1088] sm:$0x3] %vm463, %v1292
    %v1299 = vld [vmem:[#allocation2 + $0xa] sm:$0x3]
    %v1300 = vsel %vm253, %v1295, 0
    %1302 = vmatprep.subr.mxu0 0.0
    %1303 = vmatpush1.msra.mxu0 %v236
    %1304 = vmatprep.subr.mxu0 0.0
    %1305 = vmatpush1.msra.mxu0 %v237
    %1306 = vmatprep.subr.mxu0 0.0
    %1307 = vmatpush1.msra.mxu0 %v238
    %1308 = vmatprep.subr.mxu0 0.0
    %1309 = vmatpush1.msra.mxu0 %v239
    %1310 = vmatprep.subr.mxu0 0.0
    %1311 = vmatpush1.msra.mxu0 0.0
    %1312 = vmatprep.subr.mxu0 0.0
    %1313 = vmatpush1.msra.mxu0 0.0
    %1314 = vmatprep.subr.mxu0 0.0
    %1315 = vmatpush1.msra.mxu0 0.0
    %1316 = vmatprep.subr.mxu0 0.0
    %1317 = vmatpush1.msra.mxu0 0.0
    %1318 = vmatprep.subr.mxu0 0.0
    %1319 = vmatpush1.msra.mxu0 0.0
    %1320 = vmatprep.subr.mxu0 0.0
    %1321 = vmatpush1.msra.mxu0 0.0
    %1322 = vmatprep.subr.mxu0 0.0
    %1323 = vmatpush1.msra.mxu0 0.0
    %1324 = vmatprep.subr.mxu0 0.0
    %1325 = vmatpush1.msra.mxu0 0.0
    %1326 = vmatprep.subr.mxu0 0.0
    %1327 = vmatpush1.msra.mxu0 0.0
    %1328 = vmatprep.subr.mxu0 0.0
    %1329 = vmatpush1.msra.mxu0 0.0
    %1330 = vmatprep.subr.mxu0 0.0
    %1331 = vmatpush1.msra.mxu0 0.0
    %1332 = vmatprep.subr.mxu0 0.0
    %1333 = vmatpush1.msra.mxu0 0.0
    %1334 = vmatprep.subr.mxu0 0.0
    %1335 = vmatpush1.msra.mxu0 0.0
    %1336 = vmatprep.subr.mxu0 0.0
    %1337 = vmatpush1.msra.mxu0 0.0
    %1338 = vmatprep.subr.mxu0 0.0
    %1339 = vmatpush1.msra.mxu0 0.0
    %1340 = vmatprep.subr.mxu0 0.0
    %1341 = vmatpush1.msra.mxu0 0.0
    %1342 = vmatprep.subr.mxu0 0.0
    %1343 = vmatpush1.msra.mxu0 0.0
    %1344 = vmatprep.subr.mxu0 0.0
    %1345 = vmatpush1.msra.mxu0 0.0
    %1346 = vmatprep.subr.mxu0 0.0
    %1347 = vmatpush1.msra.mxu0 0.0
    %1348 = vmatprep.subr.mxu0 0.0
    %1349 = vmatpush1.msra.mxu0 0.0
    %1350 = vmatprep.subr.mxu0 0.0
    %1351 = vmatpush1.msra.mxu0 0.0
    %1352 = vmatprep.subr.mxu0 0.0
    %1353 = vmatpush1.msra.mxu0 0.0
    %1354 = vmatprep.subr.mxu0 0.0
    %1355 = vmatpush1.msra.mxu0 0.0
    %1356 = vmatprep.subr.mxu0 0.0
    %1357 = vmatpush1.msra.mxu0 0.0
    %1358 = vmatprep.subr.mxu0 0.0
    %1359 = vmatpush1.msra.mxu0 0.0
    %1360 = vmatprep.subr.mxu0 0.0
    %1361 = vmatpush1.msra.mxu0 0.0
    %1362 = vmatprep.subr.mxu0 0.0
    %1363 = vmatpush1.msra.mxu0 0.0
    %1364 = vmatprep.subr.mxu0 0.0
    %1365 = vmatpush1.msra.mxu0 0.0
    %1366 = vmatprep.mubr.f32.mxu0 0.0
    %1367 = vmatmul.mubr.f32.gmra.mrb[0].mxu0 %v1300
    %v1368 = vpop.f32.mrb[0].mxu0
    %v1369 = vadd.f32 %v251, %v1368
    %v1370 = vpop.f32.mrb[0].mxu0
    %1371 = vdwg.mxu0
    %v1372 = vadd.f32 %v1299, %v1369
    %v1373 = vxor.u32 %v1372, 2147483648
    %v1374 = vmul.f32 %v1373, 1.442695
    %v1375 = vpow.pop %v1374
    %v1376 = vadd.f32 %v1375, 1.0
    %v1377 = vrcp.pop %v1376
    %v1378 = vmul.f32 1.0, %v1377
    %1380 = vrot.lane.b32.xlu0 %v1369, 64
    %v1381 = vpop.permute.xlu0 %1380
    %v1383 = vmul.f32 %v1378, %v1381
    %1385 = vrot.lane.b32.xlu0 %v1383, 64
    %v1386 = vpop.permute.xlu0 %1385
    %v1388 = vadd.f32 %v1299, %v1386
    %v1389 = vtanh.pop %v1388
    %v1390 = vsub.f32 1.0, %v1378
    %1392 = vrot.lane.b32.xlu0 %v1389, 96
    %v1393 = vpop.permute.xlu0 %1392
    %v1395 = vmul.f32 %v1390, %v1393
    %v1396 = vmul.f32 %v1378, %v1190
    %v1397 = vadd.f32 %v1395, %v1396
    %v1398 = vld [vmem:[#allocation3 + $0x4] sm:$0x3]
    %1400 = vrot.lane.b32.xlu0 %v1292, 96
    %v1401 = vpop.permute.xlu0 %1400
    %v1402 = vsel %vm253, %v1401, 0
    %1404 = vmatprep.subr.mxu0 0.0
    %1405 = vmatpush1.msra.mxu0 %v241
    %1406 = vmatprep.subr.mxu0 0.0
    %1407 = vmatpush1.msra.mxu0 %v242
    %1408 = vmatprep.subr.mxu0 0.0
    %1409 = vmatpush1.msra.mxu0 %v243
    %1410 = vmatprep.subr.mxu0 0.0
    %1411 = vmatpush1.msra.mxu0 %v244
    %1412 = vmatprep.subr.mxu0 0.0
    %1413 = vmatpush1.msra.mxu0 0.0
    %1414 = vmatprep.subr.mxu0 0.0
    %1415 = vmatpush1.msra.mxu0 0.0
    %1416 = vmatprep.subr.mxu0 0.0
    %1417 = vmatpush1.msra.mxu0 0.0
    %1418 = vmatprep.subr.mxu0 0.0
    %1419 = vmatpush1.msra.mxu0 0.0
    %1420 = vmatprep.subr.mxu0 0.0
    %1421 = vmatpush1.msra.mxu0 0.0
    %1422 = vmatprep.subr.mxu0 0.0
    %1423 = vmatpush1.msra.mxu0 0.0
    %1424 = vmatprep.subr.mxu0 0.0
    %1425 = vmatpush1.msra.mxu0 0.0
    %1426 = vmatprep.subr.mxu0 0.0
    %1427 = vmatpush1.msra.mxu0 0.0
    %1428 = vmatprep.subr.mxu0 0.0
    %1429 = vmatpush1.msra.mxu0 0.0
    %1430 = vmatprep.subr.mxu0 0.0
    %1431 = vmatpush1.msra.mxu0 0.0
    %1432 = vmatprep.subr.mxu0 0.0
    %1433 = vmatpush1.msra.mxu0 0.0
    %1434 = vmatprep.subr.mxu0 0.0
    %1435 = vmatpush1.msra.mxu0 0.0
    %1436 = vmatprep.subr.mxu0 0.0
    %1437 = vmatpush1.msra.mxu0 0.0
    %1438 = vmatprep.subr.mxu0 0.0
    %1439 = vmatpush1.msra.mxu0 0.0
    %1440 = vmatprep.subr.mxu0 0.0
    %1441 = vmatpush1.msra.mxu0 0.0
    %1442 = vmatprep.subr.mxu0 0.0
    %1443 = vmatpush1.msra.mxu0 0.0
    %1444 = vmatprep.subr.mxu0 0.0
    %1445 = vmatpush1.msra.mxu0 0.0
    %1446 = vmatprep.subr.mxu0 0.0
    %1447 = vmatpush1.msra.mxu0 0.0
    %1448 = vmatprep.subr.mxu0 0.0
    %1449 = vmatpush1.msra.mxu0 0.0
    %1450 = vmatprep.subr.mxu0 0.0
    %1451 = vmatpush1.msra.mxu0 0.0
    %1452 = vmatprep.subr.mxu0 0.0
    %1453 = vmatpush1.msra.mxu0 0.0
    %1454 = vmatprep.subr.mxu0 0.0
    %1455 = vmatpush1.msra.mxu0 0.0
    %1456 = vmatprep.subr.mxu0 0.0
    %1457 = vmatpush1.msra.mxu0 0.0
    %1458 = vmatprep.subr.mxu0 0.0
    %1459 = vmatpush1.msra.mxu0 0.0
    %1460 = vmatprep.subr.mxu0 0.0
    %1461 = vmatpush1.msra.mxu0 0.0
    %1462 = vmatprep.subr.mxu0 0.0
    %1463 = vmatpush1.msra.mxu0 0.0
    %1464 = vmatprep.subr.mxu0 0.0
    %1465 = vmatpush1.msra.mxu0 0.0
    %1466 = vmatprep.subr.mxu0 0.0
    %1467 = vmatpush1.msra.mxu0 0.0
    %1468 = vmatprep.mubr.f32.mxu0 0.0
    %1469 = vmatmul.mubr.f32.gmra.mrb[0].mxu0 %v1402
    %v1470 = vpop.f32.mrb[0].mxu0
    %v1471 = vadd.f32 %v358, %v1470
    %v1472 = vpop.f32.mrb[0].mxu0
    %1473 = vdwg.mxu0
    %v1474 = vadd.f32 %v1398, %v1471
    %v1475 = vxor.u32 %v1474, 2147483648
    %v1476 = vmul.f32 %v1475, 1.442695
    %v1477 = vpow.pop %v1476
    %v1478 = vadd.f32 %v1477, 1.0
    %v1479 = vrcp.pop %v1478
    %v1480 = vmul.f32 1.0, %v1479
    %1482 = vrot.lane.b32.xlu0 %v1471, 64
    %v1483 = vpop.permute.xlu0 %1482
    %v1485 = vmul.f32 %v1480, %v1483
    %1487 = vrot.lane.b32.xlu0 %v1485, 64
    %v1488 = vpop.permute.xlu0 %1487
    %v1490 = vadd.f32 %v1398, %v1488
    %v1491 = vtanh.pop %v1490
    %v1492 = vsub.f32 1.0, %v1480
    %1494 = vrot.lane.b32.xlu0 %v1491, 96
    %v1495 = vpop.permute.xlu0 %1494
    %v1497 = vmul.f32 %v1492, %v1495
    %v1498 = vmul.f32 %v1480, %v1292
    %v1499 = vadd.f32 %v1497, %v1498
    %1501 = vrot.lane.b32.xlu0 %v1397, 96
    %v1502 = vpop.permute.xlu0 %1501
    %1504 = vst.msk [vmem:[%s881] sm:$0x3] %vm460, %v1502
    %1505 = vst.msk [vmem:[%s879] sm:$0x3] %vm463, %v1499
    %v1506 = vld [vmem:[#allocation2 + $0xc] sm:$0x3]
    %v1507 = vsel %vm253, %v1502, 0
    %1509 = vmatprep.subr.mxu0 0.0
    %1510 = vmatpush1.msra.mxu0 %v236
    %1511 = vmatprep.subr.mxu0 0.0
    %1512 = vmatpush1.msra.mxu0 %v237
    %1513 = vmatprep.subr.mxu0 0.0
    %1514 = vmatpush1.msra.mxu0 %v238
    %1515 = vmatprep.subr.mxu0 0.0
    %1516 = vmatpush1.msra.mxu0 %v239
    %1517 = vmatprep.subr.mxu0 0.0
    %1518 = vmatpush1.msra.mxu0 0.0
    %1519 = vmatprep.subr.mxu0 0.0
    %1520 = vmatpush1.msra.mxu0 0.0
    %1521 = vmatprep.subr.mxu0 0.0
    %1522 = vmatpush1.msra.mxu0 0.0
    %1523 = vmatprep.subr.mxu0 0.0
    %1524 = vmatpush1.msra.mxu0 0.0
    %1525 = vmatprep.subr.mxu0 0.0
    %1526 = vmatpush1.msra.mxu0 0.0
    %1527 = vmatprep.subr.mxu0 0.0
    %1528 = vmatpush1.msra.mxu0 0.0
    %1529 = vmatprep.subr.mxu0 0.0
    %1530 = vmatpush1.msra.mxu0 0.0
    %1531 = vmatprep.subr.mxu0 0.0
    %1532 = vmatpush1.msra.mxu0 0.0
    %1533 = vmatprep.subr.mxu0 0.0
    %1534 = vmatpush1.msra.mxu0 0.0
    %1535 = vmatprep.subr.mxu0 0.0
    %1536 = vmatpush1.msra.mxu0 0.0
    %1537 = vmatprep.subr.mxu0 0.0
    %1538 = vmatpush1.msra.mxu0 0.0
    %1539 = vmatprep.subr.mxu0 0.0
    %1540 = vmatpush1.msra.mxu0 0.0
    %1541 = vmatprep.subr.mxu0 0.0
    %1542 = vmatpush1.msra.mxu0 0.0
    %1543 = vmatprep.subr.mxu0 0.0
    %1544 = vmatpush1.msra.mxu0 0.0
    %1545 = vmatprep.subr.mxu0 0.0
    %1546 = vmatpush1.msra.mxu0 0.0
    %1547 = vmatprep.subr.mxu0 0.0
    %1548 = vmatpush1.msra.mxu0 0.0
    %1549 = vmatprep.subr.mxu0 0.0
    %1550 = vmatpush1.msra.mxu0 0.0
    %1551 = vmatprep.subr.mxu0 0.0
    %1552 = vmatpush1.msra.mxu0 0.0
    %1553 = vmatprep.subr.mxu0 0.0
    %1554 = vmatpush1.msra.mxu0 0.0
    %1555 = vmatprep.subr.mxu0 0.0
    %1556 = vmatpush1.msra.mxu0 0.0
    %1557 = vmatprep.subr.mxu0 0.0
    %1558 = vmatpush1.msra.mxu0 0.0
    %1559 = vmatprep.subr.mxu0 0.0
    %1560 = vmatpush1.msra.mxu0 0.0
    %1561 = vmatprep.subr.mxu0 0.0
    %1562 = vmatpush1.msra.mxu0 0.0
    %1563 = vmatprep.subr.mxu0 0.0
    %1564 = vmatpush1.msra.mxu0 0.0
    %1565 = vmatprep.subr.mxu0 0.0
    %1566 = vmatpush1.msra.mxu0 0.0
    %1567 = vmatprep.subr.mxu0 0.0
    %1568 = vmatpush1.msra.mxu0 0.0
    %1569 = vmatprep.subr.mxu0 0.0
    %1570 = vmatpush1.msra.mxu0 0.0
    %1571 = vmatprep.subr.mxu0 0.0
    %1572 = vmatpush1.msra.mxu0 0.0
    %1573 = vmatprep.mubr.f32.mxu0 0.0
    %1574 = vmatmul.mubr.f32.gmra.mrb[0].mxu0 %v1507
    %v1575 = vpop.f32.mrb[0].mxu0
    %v1576 = vadd.f32 %v251, %v1575
    %v1577 = vpop.f32.mrb[0].mxu0
    %1578 = vdwg.mxu0
    %v1579 = vadd.f32 %v1506, %v1576
    %v1580 = vxor.u32 %v1579, 2147483648
    %v1581 = vmul.f32 %v1580, 1.442695
    %v1582 = vpow.pop %v1581
    %v1583 = vadd.f32 %v1582, 1.0
    %v1584 = vrcp.pop %v1583
    %v1585 = vmul.f32 1.0, %v1584
    %1587 = vrot.lane.b32.xlu0 %v1576, 64
    %v1588 = vpop.permute.xlu0 %1587
    %v1590 = vmul.f32 %v1585, %v1588
    %1592 = vrot.lane.b32.xlu0 %v1590, 64
    %v1593 = vpop.permute.xlu0 %1592
    %v1595 = vadd.f32 %v1506, %v1593
    %v1596 = vtanh.pop %v1595
    %v1597 = vsub.f32 1.0, %v1585
    %1599 = vrot.lane.b32.xlu0 %v1596, 96
    %v1600 = vpop.permute.xlu0 %1599
    %v1602 = vmul.f32 %v1597, %v1600
    %v1603 = vmul.f32 %v1585, %v1397
    %v1604 = vadd.f32 %v1602, %v1603
    %v1605 = vld [vmem:[#allocation3 + $0x2] sm:$0x3]
    %1607 = vrot.lane.b32.xlu0 %v1499, 96
    %v1608 = vpop.permute.xlu0 %1607
    %v1609 = vsel %vm253, %v1608, 0
    %1611 = vmatprep.subr.mxu0 0.0
    %1612 = vmatpush1.msra.mxu0 %v241
    %1613 = vmatprep.subr.mxu0 0.0
    %1614 = vmatpush1.msra.mxu0 %v242
    %1615 = vmatprep.subr.mxu0 0.0
    %1616 = vmatpush1.msra.mxu0 %v243
    %1617 = vmatprep.subr.mxu0 0.0
    %1618 = vmatpush1.msra.mxu0 %v244
    %1619 = vmatprep.subr.mxu0 0.0
    %1620 = vmatpush1.msra.mxu0 0.0
    %1621 = vmatprep.subr.mxu0 0.0
    %1622 = vmatpush1.msra.mxu0 0.0
    %1623 = vmatprep.subr.mxu0 0.0
    %1624 = vmatpush1.msra.mxu0 0.0
    %1625 = vmatprep.subr.mxu0 0.0
    %1626 = vmatpush1.msra.mxu0 0.0
    %1627 = vmatprep.subr.mxu0 0.0
    %1628 = vmatpush1.msra.mxu0 0.0
    %1629 = vmatprep.subr.mxu0 0.0
    %1630 = vmatpush1.msra.mxu0 0.0
    %1631 = vmatprep.subr.mxu0 0.0
    %1632 = vmatpush1.msra.mxu0 0.0
    %1633 = vmatprep.subr.mxu0 0.0
    %1634 = vmatpush1.msra.mxu0 0.0
    %1635 = vmatprep.subr.mxu0 0.0
    %1636 = vmatpush1.msra.mxu0 0.0
    %1637 = vmatprep.subr.mxu0 0.0
    %1638 = vmatpush1.msra.mxu0 0.0
    %1639 = vmatprep.subr.mxu0 0.0
    %1640 = vmatpush1.msra.mxu0 0.0
    %1641 = vmatprep.subr.mxu0 0.0
    %1642 = vmatpush1.msra.mxu0 0.0
    %1643 = vmatprep.subr.mxu0 0.0
    %1644 = vmatpush1.msra.mxu0 0.0
    %1645 = vmatprep.subr.mxu0 0.0
    %1646 = vmatpush1.msra.mxu0 0.0
    %1647 = vmatprep.subr.mxu0 0.0
    %1648 = vmatpush1.msra.mxu0 0.0
    %1649 = vmatprep.subr.mxu0 0.0
    %1650 = vmatpush1.msra.mxu0 0.0
    %1651 = vmatprep.subr.mxu0 0.0
    %1652 = vmatpush1.msra.mxu0 0.0
    %1653 = vmatprep.subr.mxu0 0.0
    %1654 = vmatpush1.msra.mxu0 0.0
    %1655 = vmatprep.subr.mxu0 0.0
    %1656 = vmatpush1.msra.mxu0 0.0
    %1657 = vmatprep.subr.mxu0 0.0
    %1658 = vmatpush1.msra.mxu0 0.0
    %1659 = vmatprep.subr.mxu0 0.0
    %1660 = vmatpush1.msra.mxu0 0.0
    %1661 = vmatprep.subr.mxu0 0.0
    %1662 = vmatpush1.msra.mxu0 0.0
    %1663 = vmatprep.subr.mxu0 0.0
    %1664 = vmatpush1.msra.mxu0 0.0
    %1665 = vmatprep.subr.mxu0 0.0
    %1666 = vmatpush1.msra.mxu0 0.0
    %1667 = vmatprep.subr.mxu0 0.0
    %1668 = vmatpush1.msra.mxu0 0.0
    %1669 = vmatprep.subr.mxu0 0.0
    %1670 = vmatpush1.msra.mxu0 0.0
    %1671 = vmatprep.subr.mxu0 0.0
    %1672 = vmatpush1.msra.mxu0 0.0
    %1673 = vmatprep.subr.mxu0 0.0
    %1674 = vmatpush1.msra.mxu0 0.0
    %1675 = vmatprep.mubr.f32.mxu0 0.0
    %1676 = vmatmul.mubr.f32.gmra.mrb[0].mxu0 %v1609
    %v1677 = vpop.f32.mrb[0].mxu0
    %v1678 = vadd.f32 %v358, %v1677
    %v1679 = vpop.f32.mrb[0].mxu0
    %1680 = vdwg.mxu0
    %v1681 = vadd.f32 %v1605, %v1678
    %v1682 = vxor.u32 %v1681, 2147483648
    %v1683 = vmul.f32 %v1682, 1.442695
    %v1684 = vpow.pop %v1683
    %v1685 = vadd.f32 %v1684, 1.0
    %v1686 = vrcp.pop %v1685
    %v1687 = vmul.f32 1.0, %v1686
    %1689 = vrot.lane.b32.xlu0 %v1678, 64
    %v1690 = vpop.permute.xlu0 %1689
    %v1692 = vmul.f32 %v1687, %v1690
    %1694 = vrot.lane.b32.xlu0 %v1692, 64
    %v1695 = vpop.permute.xlu0 %1694
    %v1697 = vadd.f32 %v1605, %v1695
    %v1698 = vtanh.pop %v1697
    %v1699 = vsub.f32 1.0, %v1687
    %1701 = vrot.lane.b32.xlu0 %v1698, 96
    %v1702 = vpop.permute.xlu0 %1701
    %v1704 = vmul.f32 %v1699, %v1702
    %v1705 = vmul.f32 %v1687, %v1499
    %v1706 = vadd.f32 %v1704, %v1705
    %1708 = vrot.lane.b32.xlu0 %v1604, 96
    %v1709 = vpop.permute.xlu0 %1708
    %1711 = vst.msk [vmem:[%s672] sm:$0x3] %vm460, %v1709
    %1712 = vst.msk [vmem:[%s670] sm:$0x3] %vm463, %v1706
    %v1713 = vld [vmem:[#allocation2 + $0xe] sm:$0x3]
    %v1714 = vsel %vm253, %v1709, 0
    %1716 = vmatprep.subr.mxu0 0.0
    %1717 = vmatpush1.msra.mxu0 %v236
    %1718 = vmatprep.subr.mxu0 0.0
    %1719 = vmatpush1.msra.mxu0 %v237
    %1720 = vmatprep.subr.mxu0 0.0
    %1721 = vmatpush1.msra.mxu0 %v238
    %1722 = vmatprep.subr.mxu0 0.0
    %1723 = vmatpush1.msra.mxu0 %v239
    %1724 = vmatprep.subr.mxu0 0.0
    %1725 = vmatpush1.msra.mxu0 0.0
    %1726 = vmatprep.subr.mxu0 0.0
    %1727 = vmatpush1.msra.mxu0 0.0
    %1728 = vmatprep.subr.mxu0 0.0
    %1729 = vmatpush1.msra.mxu0 0.0
    %1730 = vmatprep.subr.mxu0 0.0
    %1731 = vmatpush1.msra.mxu0 0.0
    %1732 = vmatprep.subr.mxu0 0.0
    %1733 = vmatpush1.msra.mxu0 0.0
    %1734 = vmatprep.subr.mxu0 0.0
    %1735 = vmatpush1.msra.mxu0 0.0
    %1736 = vmatprep.subr.mxu0 0.0
    %1737 = vmatpush1.msra.mxu0 0.0
    %1738 = vmatprep.subr.mxu0 0.0
    %1739 = vmatpush1.msra.mxu0 0.0
    %1740 = vmatprep.subr.mxu0 0.0
    %1741 = vmatpush1.msra.mxu0 0.0
    %1742 = vmatprep.subr.mxu0 0.0
    %1743 = vmatpush1.msra.mxu0 0.0
    %1744 = vmatprep.subr.mxu0 0.0
    %1745 = vmatpush1.msra.mxu0 0.0
    %1746 = vmatprep.subr.mxu0 0.0
    %1747 = vmatpush1.msra.mxu0 0.0
    %1748 = vmatprep.subr.mxu0 0.0
    %1749 = vmatpush1.msra.mxu0 0.0
    %1750 = vmatprep.subr.mxu0 0.0
    %1751 = vmatpush1.msra.mxu0 0.0
    %1752 = vmatprep.subr.mxu0 0.0
    %1753 = vmatpush1.msra.mxu0 0.0
    %1754 = vmatprep.subr.mxu0 0.0
    %1755 = vmatpush1.msra.mxu0 0.0
    %1756 = vmatprep.subr.mxu0 0.0
    %1757 = vmatpush1.msra.mxu0 0.0
    %1758 = vmatprep.subr.mxu0 0.0
    %1759 = vmatpush1.msra.mxu0 0.0
    %1760 = vmatprep.subr.mxu0 0.0
    %1761 = vmatpush1.msra.mxu0 0.0
    %1762 = vmatprep.subr.mxu0 0.0
    %1763 = vmatpush1.msra.mxu0 0.0
    %1764 = vmatprep.subr.mxu0 0.0
    %1765 = vmatpush1.msra.mxu0 0.0
    %1766 = vmatprep.subr.mxu0 0.0
    %1767 = vmatpush1.msra.mxu0 0.0
    %1768 = vmatprep.subr.mxu0 0.0
    %1769 = vmatpush1.msra.mxu0 0.0
    %1770 = vmatprep.subr.mxu0 0.0
    %1771 = vmatpush1.msra.mxu0 0.0
    %1772 = vmatprep.subr.mxu0 0.0
    %1773 = vmatpush1.msra.mxu0 0.0
    %1774 = vmatprep.subr.mxu0 0.0
    %1775 = vmatpush1.msra.mxu0 0.0
    %1776 = vmatprep.subr.mxu0 0.0
    %1777 = vmatpush1.msra.mxu0 0.0
    %1778 = vmatprep.subr.mxu0 0.0
    %1779 = vmatpush1.msra.mxu0 0.0
    %1780 = vmatprep.mubr.f32.mxu0 0.0
    %1781 = vmatmul.mubr.f32.gmra.mrb[0].mxu0 %v1714
    %v1782 = vpop.f32.mrb[0].mxu0
    %v1783 = vadd.f32 %v251, %v1782
    %v1784 = vpop.f32.mrb[0].mxu0
    %1785 = vdwg.mxu0
    %v1786 = vadd.f32 %v1713, %v1783
    %v1787 = vxor.u32 %v1786, 2147483648
    %v1788 = vmul.f32 %v1787, 1.442695
    %v1789 = vpow.pop %v1788
    %v1790 = vadd.f32 %v1789, 1.0
    %v1791 = vrcp.pop %v1790
    %v1792 = vmul.f32 1.0, %v1791
    %1794 = vrot.lane.b32.xlu0 %v1783, 64
    %v1795 = vpop.permute.xlu0 %1794
    %v1797 = vmul.f32 %v1792, %v1795
    %1799 = vrot.lane.b32.xlu0 %v1797, 64
    %v1800 = vpop.permute.xlu0 %1799
    %v1802 = vadd.f32 %v1713, %v1800
    %v1803 = vtanh.pop %v1802
    %v1804 = vsub.f32 1.0, %v1792
    %1806 = vrot.lane.b32.xlu0 %v1803, 96
    %v1807 = vpop.permute.xlu0 %1806
    %v1809 = vmul.f32 %v1804, %v1807
    %v1810 = vmul.f32 %v1792, %v1604
    %v1811 = vadd.f32 %v1809, %v1810
    %v1812 = vld [vmem:[#allocation3] sm:$0x3]
    %1814 = vrot.lane.b32.xlu0 %v1706, 96
    %v1815 = vpop.permute.xlu0 %1814
    %v1816 = vsel %vm253, %v1815, 0
    %1818 = vmatprep.subr.mxu0 0.0
    %1819 = vmatpush1.msra.mxu0 %v241
    %1820 = vmatprep.subr.mxu0 0.0
    %1821 = vmatpush1.msra.mxu0 %v242
    %1822 = vmatprep.subr.mxu0 0.0
    %1823 = vmatpush1.msra.mxu0 %v243
    %1824 = vmatprep.subr.mxu0 0.0
    %1825 = vmatpush1.msra.mxu0 %v244
    %1826 = vmatprep.subr.mxu0 0.0
    %1827 = vmatpush1.msra.mxu0 0.0
    %1828 = vmatprep.subr.mxu0 0.0
    %1829 = vmatpush1.msra.mxu0 0.0
    %1830 = vmatprep.subr.mxu0 0.0
    %1831 = vmatpush1.msra.mxu0 0.0
    %1832 = vmatprep.subr.mxu0 0.0
    %1833 = vmatpush1.msra.mxu0 0.0
    %1834 = vmatprep.subr.mxu0 0.0
    %1835 = vmatpush1.msra.mxu0 0.0
    %1836 = vmatprep.subr.mxu0 0.0
    %1837 = vmatpush1.msra.mxu0 0.0
    %1838 = vmatprep.subr.mxu0 0.0
    %1839 = vmatpush1.msra.mxu0 0.0
    %1840 = vmatprep.subr.mxu0 0.0
    %1841 = vmatpush1.msra.mxu0 0.0
    %1842 = vmatprep.subr.mxu0 0.0
    %1843 = vmatpush1.msra.mxu0 0.0
    %1844 = vmatprep.subr.mxu0 0.0
    %1845 = vmatpush1.msra.mxu0 0.0
    %1846 = vmatprep.subr.mxu0 0.0
    %1847 = vmatpush1.msra.mxu0 0.0
    %1848 = vmatprep.subr.mxu0 0.0
    %1849 = vmatpush1.msra.mxu0 0.0
    %1850 = vmatprep.subr.mxu0 0.0
    %1851 = vmatpush1.msra.mxu0 0.0
    %1852 = vmatprep.subr.mxu0 0.0
    %1853 = vmatpush1.msra.mxu0 0.0
    %1854 = vmatprep.subr.mxu0 0.0
    %1855 = vmatpush1.msra.mxu0 0.0
    %1856 = vmatprep.subr.mxu0 0.0
    %1857 = vmatpush1.msra.mxu0 0.0
    %1858 = vmatprep.subr.mxu0 0.0
    %1859 = vmatpush1.msra.mxu0 0.0
    %1860 = vmatprep.subr.mxu0 0.0
    %1861 = vmatpush1.msra.mxu0 0.0
    %1862 = vmatprep.subr.mxu0 0.0
    %1863 = vmatpush1.msra.mxu0 0.0
    %1864 = vmatprep.subr.mxu0 0.0
    %1865 = vmatpush1.msra.mxu0 0.0
    %1866 = vmatprep.subr.mxu0 0.0
    %1867 = vmatpush1.msra.mxu0 0.0
    %1868 = vmatprep.subr.mxu0 0.0
    %1869 = vmatpush1.msra.mxu0 0.0
    %1870 = vmatprep.subr.mxu0 0.0
    %1871 = vmatpush1.msra.mxu0 0.0
    %1872 = vmatprep.subr.mxu0 0.0
    %1873 = vmatpush1.msra.mxu0 0.0
    %1874 = vmatprep.subr.mxu0 0.0
    %1875 = vmatpush1.msra.mxu0 0.0
    %1876 = vmatprep.subr.mxu0 0.0
    %1877 = vmatpush1.msra.mxu0 0.0
    %1878 = vmatprep.subr.mxu0 0.0
    %1879 = vmatpush1.msra.mxu0 0.0
    %1880 = vmatprep.subr.mxu0 0.0
    %1881 = vmatpush1.msra.mxu0 0.0
    %1882 = vmatprep.mubr.f32.mxu0 0.0
    %1883 = vmatmul.mubr.f32.gmra.mrb[0].mxu0 %v1816
    %v1884 = vpop.f32.mrb[0].mxu0
    %v1885 = vadd.f32 %v358, %v1884
    %v1886 = vpop.f32.mrb[0].mxu0
    %1887 = vdwg.mxu0
    %v1888 = vadd.f32 %v1812, %v1885
    %v1889 = vxor.u32 %v1888, 2147483648
    %v1890 = vmul.f32 %v1889, 1.442695
    %v1891 = vpow.pop %v1890
    %v1892 = vadd.f32 %v1891, 1.0
    %v1893 = vrcp.pop %v1892
    %v1894 = vmul.f32 1.0, %v1893
    %1896 = vrot.lane.b32.xlu0 %v1885, 64
    %v1897 = vpop.permute.xlu0 %1896
    %v1899 = vmul.f32 %v1894, %v1897
    %1901 = vrot.lane.b32.xlu0 %v1899, 64
    %v1902 = vpop.permute.xlu0 %1901
    %v1904 = vadd.f32 %v1812, %v1902
    %v1905 = vtanh.pop %v1904
    %v1906 = vsub.f32 1.0, %v1894
    %1908 = vrot.lane.b32.xlu0 %v1905, 96
    %v1909 = vpop.permute.xlu0 %1908
    %v1911 = vmul.f32 %v1906, %v1909
    %v1912 = vmul.f32 %v1894, %v1706
    %v1913 = vadd.f32 %v1911, %v1912
    %1915 = vrot.lane.b32.xlu0 %v1811, 96
    %v1916 = vpop.permute.xlu0 %1915
    %1918 = vst.msk [vmem:[%s462] sm:$0x3] %vm460, %v1916
    %1919 = vst.msk [vmem:[#allocation4] sm:$0x3] %vm463, %v1913
    %v1920 = vld [vmem:[%s9] sm:$0xff]
    %v1921 = vld [vmem:[%s9 + $0x8] sm:$0xff]
    %v1922 = vld [vmem:[%s9 + $0x10] sm:$0xff]
    %v1923 = vld [vmem:[%s9 + $0x18] sm:$0xff]
    %v1924 = vld [vmem:[%s9 + $0x20] sm:$0xff]
    %v1925 = vld [vmem:[%s9 + $0x28] sm:$0xff]
    %v1926 = vld [vmem:[%s9 + $0x30] sm:$0xff]
    %v1927 = vld [vmem:[%s9 + $0x38] sm:$0xff]
    %1929 = vrot.lane.b32.xlu0 %v1913, 96
    %v1930 = vpop.permute.xlu0 %1929
    %v1931 = vsel %vm253, %v1930, 0
    %1933 = vmatprep.subr.mxu0 0.0
    %1934 = vmatpush1.msra.mxu0 %v1924
    %1935 = vmatprep.subr.mxu0 0.0
    %1936 = vmatpush1.msra.mxu0 %v1925
    %1937 = vmatprep.subr.mxu0 0.0
    %1938 = vmatpush1.msra.mxu0 %v1926
    %1939 = vmatprep.subr.mxu0 0.0
    %1940 = vmatpush1.msra.mxu0 %v1927
    %1941 = vmatprep.subr.mxu0 0.0
    %1942 = vmatpush1.msra.mxu0 0.0
    %1943 = vmatprep.subr.mxu0 0.0
    %1944 = vmatpush1.msra.mxu0 0.0
    %1945 = vmatprep.subr.mxu0 0.0
    %1946 = vmatpush1.msra.mxu0 0.0
    %1947 = vmatprep.subr.mxu0 0.0
    %1948 = vmatpush1.msra.mxu0 0.0
    %1949 = vmatprep.subr.mxu0 0.0
    %1950 = vmatpush1.msra.mxu0 0.0
    %1951 = vmatprep.subr.mxu0 0.0
    %1952 = vmatpush1.msra.mxu0 0.0
    %1953 = vmatprep.subr.mxu0 0.0
    %1954 = vmatpush1.msra.mxu0 0.0
    %1955 = vmatprep.subr.mxu0 0.0
    %1956 = vmatpush1.msra.mxu0 0.0
    %1957 = vmatprep.subr.mxu0 0.0
    %1958 = vmatpush1.msra.mxu0 0.0
    %1959 = vmatprep.subr.mxu0 0.0
    %1960 = vmatpush1.msra.mxu0 0.0
    %1961 = vmatprep.subr.mxu0 0.0
    %1962 = vmatpush1.msra.mxu0 0.0
    %1963 = vmatprep.subr.mxu0 0.0
    %1964 = vmatpush1.msra.mxu0 0.0
    %1965 = vmatprep.subr.mxu0 0.0
    %1966 = vmatpush1.msra.mxu0 0.0
    %1967 = vmatprep.subr.mxu0 0.0
    %1968 = vmatpush1.msra.mxu0 0.0
    %1969 = vmatprep.subr.mxu0 0.0
    %1970 = vmatpush1.msra.mxu0 0.0
    %1971 = vmatprep.subr.mxu0 0.0
    %1972 = vmatpush1.msra.mxu0 0.0
    %1973 = vmatprep.subr.mxu0 0.0
    %1974 = vmatpush1.msra.mxu0 0.0
    %1975 = vmatprep.subr.mxu0 0.0
    %1976 = vmatpush1.msra.mxu0 0.0
    %1977 = vmatprep.subr.mxu0 0.0
    %1978 = vmatpush1.msra.mxu0 0.0
    %1979 = vmatprep.subr.mxu0 0.0
    %1980 = vmatpush1.msra.mxu0 0.0
    %1981 = vmatprep.subr.mxu0 0.0
    %1982 = vmatpush1.msra.mxu0 0.0
    %1983 = vmatprep.subr.mxu0 0.0
    %1984 = vmatpush1.msra.mxu0 0.0
    %1985 = vmatprep.subr.mxu0 0.0
    %1986 = vmatpush1.msra.mxu0 0.0
    %1987 = vmatprep.subr.mxu0 0.0
    %1988 = vmatpush1.msra.mxu0 0.0
    %1989 = vmatprep.subr.mxu0 0.0
    %1990 = vmatpush1.msra.mxu0 0.0
    %1991 = vmatprep.subr.mxu0 0.0
    %1992 = vmatpush1.msra.mxu0 0.0
    %1993 = vmatprep.subr.mxu0 0.0
    %1994 = vmatpush1.msra.mxu0 0.0
    %1995 = vmatprep.subr.mxu0 0.0
    %1996 = vmatpush1.msra.mxu0 0.0
    %1997 = vmatprep.mubr.f32.mxu0 0.0
    %1998 = vmatmul.mubr.f32.gmra.mrb[0].mxu0 %v1931
    %v1999 = vpop.f32.mrb[0].mxu0
    %v2000 = vadd.f32 0.0, %v1999
    %v2001 = vpop.f32.mrb[0].mxu0
    %2002 = vdwg.mxu0
    %v2003 = vsel %vm253, %v1916, 0
    %2005 = vmatprep.subr.mxu0 0.0
    %2006 = vmatpush1.msra.mxu0 %v1920
    %2007 = vmatprep.subr.mxu0 0.0
    %2008 = vmatpush1.msra.mxu0 %v1921
    %2009 = vmatprep.subr.mxu0 0.0
    %2010 = vmatpush1.msra.mxu0 %v1922
    %2011 = vmatprep.subr.mxu0 0.0
    %2012 = vmatpush1.msra.mxu0 %v1923
    %2013 = vmatprep.subr.mxu0 0.0
    %2014 = vmatpush1.msra.mxu0 0.0
    %2015 = vmatprep.subr.mxu0 0.0
    %2016 = vmatpush1.msra.mxu0 0.0
    %2017 = vmatprep.subr.mxu0 0.0
    %2018 = vmatpush1.msra.mxu0 0.0
    %2019 = vmatprep.subr.mxu0 0.0
    %2020 = vmatpush1.msra.mxu0 0.0
    %2021 = vmatprep.subr.mxu0 0.0
    %2022 = vmatpush1.msra.mxu0 0.0
    %2023 = vmatprep.subr.mxu0 0.0
    %2024 = vmatpush1.msra.mxu0 0.0
    %2025 = vmatprep.subr.mxu0 0.0
    %2026 = vmatpush1.msra.mxu0 0.0
    %2027 = vmatprep.subr.mxu0 0.0
    %2028 = vmatpush1.msra.mxu0 0.0
    %2029 = vmatprep.subr.mxu0 0.0
    %2030 = vmatpush1.msra.mxu0 0.0
    %2031 = vmatprep.subr.mxu0 0.0
    %2032 = vmatpush1.msra.mxu0 0.0
    %2033 = vmatprep.subr.mxu0 0.0
    %2034 = vmatpush1.msra.mxu0 0.0
    %2035 = vmatprep.subr.mxu0 0.0
    %2036 = vmatpush1.msra.mxu0 0.0
    %2037 = vmatprep.subr.mxu0 0.0
    %2038 = vmatpush1.msra.mxu0 0.0
    %2039 = vmatprep.subr.mxu0 0.0
    %2040 = vmatpush1.msra.mxu0 0.0
    %2041 = vmatprep.subr.mxu0 0.0
    %2042 = vmatpush1.msra.mxu0 0.0
    %2043 = vmatprep.subr.mxu0 0.0
    %2044 = vmatpush1.msra.mxu0 0.0
    %2045 = vmatprep.subr.mxu0 0.0
    %2046 = vmatpush1.msra.mxu0 0.0
    %2047 = vmatprep.subr.mxu0 0.0
    %2048 = vmatpush1.msra.mxu0 0.0
    %2049 = vmatprep.subr.mxu0 0.0
    %2050 = vmatpush1.msra.mxu0 0.0
    %2051 = vmatprep.subr.mxu0 0.0
    %2052 = vmatpush1.msra.mxu0 0.0
    %2053 = vmatprep.subr.mxu0 0.0
    %2054 = vmatpush1.msra.mxu0 0.0
    %2055 = vmatprep.subr.mxu0 0.0
    %2056 = vmatpush1.msra.mxu0 0.0
    %2057 = vmatprep.subr.mxu0 0.0
    %2058 = vmatpush1.msra.mxu0 0.0
    %2059 = vmatprep.subr.mxu0 0.0
    %2060 = vmatpush1.msra.mxu0 0.0
    %2061 = vmatprep.subr.mxu0 0.0
    %2062 = vmatpush1.msra.mxu0 0.0
    %2063 = vmatprep.subr.mxu0 0.0
    %2064 = vmatpush1.msra.mxu0 0.0
    %2065 = vmatprep.subr.mxu0 0.0
    %2066 = vmatpush1.msra.mxu0 0.0
    %2067 = vmatprep.subr.mxu0 0.0
    %2068 = vmatpush1.msra.mxu0 0.0
    %2069 = vmatprep.mubr.f32.mxu0 0.0
    %2070 = vmatmul.mubr.f32.gmra.mrb[0].mxu0 %v2003
    %v2071 = vpop.f32.mrb[0].mxu0
    %v2072 = vadd.f32 %v2000, %v2071
    %v2073 = vpop.f32.mrb[0].mxu0
    %2074 = vdwg.mxu0
    %v2075 = vld [vmem:[%s10] sm:$0x1]
    %v2077 = vlaneseq
    %v2078 = vshrl.u32 %v2077, 7
    %v2079 = vsub.s32 0, %v2078
    %v2080 = vrot.slane %v2075, %v2079
    %v2082 = vadd.f32 %v2072, %v2080
    %v2083 = vtanh.pop %v2082
    %2084 = vst.msk [vmem:[#allocation6] sm:$0x3] %vm460, %v2083
    // Predicated region
    $region46: #{encoder_gru_forward.3} parent=1 // pred_check
      _
    $region47: #{encoder_gru_forward.3} parent=1 // pred_check_branch
      %2086 = sbr.rel (0) target = $region49
    $region48: #{encoder_gru_forward.3} parent=1 // pred_region
      %s2088 = ssub.s32 256, 256
      %2089 = vsyncadd [#allocation5], %s2088
      %s2090 = sshll.u32 [#allocation4], 4
      %s2091 = int_to_ptr.vmem [resolvable:$true] %s2090
      %2096 = dma.vmem_to_hbm [thread:$0]  %s2091, 256, %s11, [#allocation5], 32, 32, 2
    $region49: #{encoder_gru_forward.3} parent=1 // pred_fallthru
      _
    // Predicated region
    $region50: #{encoder_gru_forward.3} parent=1 // pred_check
      _
    $region51: #{encoder_gru_forward.3} parent=1 // pred_check_branch
      %2098 = sbr.rel (0) target = $region53
    $region52: #{encoder_gru_forward.3} parent=1 // pred_region
      %s2100 = ssub.s32 32, 32
      %2101 = vsyncadd [#allocation7], %s2100
      %s2103 = sshll.u32 [#allocation6], 4
      %s2104 = int_to_ptr.vmem [resolvable:$true] %s2103
      %2106 = dma.vmem_to_hbm [thread:$0]  %s2104, 32, %s12, [#allocation7]
    $region53: #{encoder_gru_forward.3} parent=1 // pred_fallthru
      _
    // Predicated region
    $region54: #{encoder_gru_forward.3} parent=1 // pred_check
      _
    $region55: #{encoder_gru_forward.3} parent=1 // pred_check_branch
      %2108 = sbr.rel (0) target = $region57
    $region56: #{encoder_gru_forward.3} parent=1 // pred_region
      %2109 = dma.done [#allocation5], 256
    $region57: #{encoder_gru_forward.3} parent=1 // pred_fallthru
      _
    // Predicated region
    $region58: #{encoder_gru_forward.3} parent=1 // pred_check
      _
    $region59: #{encoder_gru_forward.3} parent=1 // pred_check_branch
      %2111 = sbr.rel (0) target = $region61
    $region60: #{encoder_gru_forward.3} parent=1 // pred_region
      %2112 = dma.done [#allocation7], 32
    $region61: #{encoder_gru_forward.3} parent=1 // pred_fallthru
      _
    %2113 = vsyncpa [#allocation5], 1
    %2114 = vsyncpa [#allocation7], 1

</llo_original>
